<compile_context>
chip_gen: v5e
topology: v5e:2x2
jax: 0.10.0
libtpu: 0.0.40
codegen_flags: <defaults>
</compile_context>

<pallas_src>
import functools
import math

import jax
import jax.numpy as jnp
from jax import lax
from jax.experimental import pallas as pl
from jax.experimental.pallas import tpu as pltpu

# ----------------------------- model configuration ------------------------------
D_MODEL = 32          # input_dim
NHEAD = 4             # must divide D_MODEL (PyTorch constraint; default nhead=10 is invalid for 32)
HEAD_DIM = D_MODEL // NHEAD
FFN = 2048            # nn.TransformerEncoderLayer default dim_feedforward
NUM_LAYERS = 2
NUM_CLASSES = 6
CLS_PAD = 128         # lane-dense padded classifier output width
LN_EPS = 1e-5

# TODO(synk): nn.Dropout(0.5) (and the encoder-internal dropouts) are identity in eval mode;
# training-mode stochastic dropout is not implemented.
# TODO(synk): optional fp8 (e4m3) FFN weights on v7x not implemented; bf16 kept on all chips.


def _layer_norm(x, w, b):
    # x: (R, D), w/b: (1, D)
    mu = jnp.mean(x, axis=-1, keepdims=True)
    xc = x - mu
    var = jnp.mean(xc * xc, axis=-1, keepdims=True)
    return xc * lax.rsqrt(var + LN_EPS) * w + b


# ------------------------------------ kernel --------------------------------------
def _transformer_kernel(x_ref, mask_ref, pool_ref,
                        emb_wt_ref, emb_b_ref,
                        qkv_wt_ref, qkv_b_ref, out_wt_ref, out_b_ref,
                        ln1_w_ref, ln1_b_ref, ln2_w_ref, ln2_b_ref,
                        ff1_wt_ref, ff1_b_ref, ff2_wt_ref, ff2_b_ref,
                        cls_wt_ref, o_ref, ctx_scr, *, att_rows, n_sub):
    # mask is a small fixed-size block-diagonal additive bias (0 / -1e30); it does NOT scale
    # with the number of rows per grid step.
    mask_bias = mask_ref[...]                                   # (att_rows, att_rows)

    # embedding: Linear(D, D) on every row of this chunk
    h = jnp.dot(x_ref[...], emb_wt_ref[...],
                preferred_element_type=jnp.float32) + emb_b_ref[...]

    for l in range(NUM_LAYERS):
        # ------- fused QKV projection: one (rows, D) @ (D, 3D) matmul -------
        qkv = jnp.dot(h, qkv_wt_ref[l],
                      preferred_element_type=jnp.float32) + qkv_b_ref[l]

        # ------- block-diagonal attention on sub-blocks of att_rows rows -------
        # Each sub-block contains whole attention groups (att_rows % t_att == 0), so the
        # score/softmax/context work is O(rows * att_rows) instead of O(rows^2).
        for sub in range(n_sub):
            r0 = sub * att_rows
            for hd in range(NHEAD):
                c = hd * HEAD_DIM
                q = qkv[r0:r0 + att_rows, c:c + HEAD_DIM]       # scale folded into weights
                k = qkv[r0:r0 + att_rows, D_MODEL + c:D_MODEL + c + HEAD_DIM]
                v = qkv[r0:r0 + att_rows, 2 * D_MODEL + c:2 * D_MODEL + c + HEAD_DIM]

                s = lax.dot_general(q, k, (((1,), (1,)), ((), ())),
                                    preferred_element_type=jnp.float32)
                s = s + mask_bias
                s = s - jnp.max(s, axis=-1, keepdims=True)
                p = jnp.exp(s)                                  # f32 (v5e-safe)
                p = p * pl.reciprocal(jnp.sum(p, axis=-1, keepdims=True), approx=True)
                # per-head context written straight into the VMEM scratch (no concatenate)
                ctx_scr[r0:r0 + att_rows, c:c + HEAD_DIM] = jnp.dot(
                    p, v, preferred_element_type=jnp.float32)

        # ------- fused output projection: one (rows, D) @ (D, D) matmul -------
        attn = jnp.dot(ctx_scr[...], out_wt_ref[l],
                       preferred_element_type=jnp.float32) + out_b_ref[l]

        h = _layer_norm(h + attn, ln1_w_ref[l], ln1_b_ref[l])

        # ------- feed-forward (ReLU), bf16 weights, f32 accumulation -------
        ff = jnp.dot(h.astype(jnp.bfloat16), ff1_wt_ref[l],
                     preferred_element_type=jnp.float32) + ff1_b_ref[l]
        ff = jnp.maximum(ff, 0.0)
        ff = jnp.dot(ff.astype(jnp.bfloat16), ff2_wt_ref[l],
                     preferred_element_type=jnp.float32) + ff2_b_ref[l]

        h = _layer_norm(h + ff, ln2_w_ref[l], ln2_b_ref[l])

    # Per-chunk contribution to mean-pool + classifier.  Sub-blocks share the same internal
    # group structure, so fold them first and apply one small (t_att, att_rows) selector that
    # already carries the 1/n_att factor; summing chunk outputs outside gives the exact mean.
    h_fold = h[0:att_rows, :]
    for sub in range(1, n_sub):
        h_fold = h_fold + h[sub * att_rows:(sub + 1) * att_rows, :]
    pooled = jnp.dot(pool_ref[...], h_fold, preferred_element_type=jnp.float32)  # (t_att, D)
    o_ref[...] = jnp.dot(pooled, cls_wt_ref[...],
                         preferred_element_type=jnp.float32)                     # (t_att, 128)


# ------------------------------ parameter handling -------------------------------
def init_params(seed=0):
    key = jax.random.PRNGKey(seed)
    cnt = iter(range(10_000))

    def nrm(shape, s=0.05):
        return (s * jax.random.normal(jax.random.fold_in(key, next(cnt)), shape)
                ).astype(jnp.float32)

    params = {
        "emb_w": nrm((D_MODEL, D_MODEL)), "emb_b": nrm((D_MODEL,)),
        "cls_w": nrm((NUM_CLASSES, D_MODEL)), "cls_b": nrm((NUM_CLASSES,)),
        "layers": [],
    }
    for _ in range(NUM_LAYERS):
        params["layers"].append({
            "in_w": nrm((3 * D_MODEL, D_MODEL)), "in_b": nrm((3 * D_MODEL,)),
            "out_w": nrm((D_MODEL, D_MODEL)), "out_b": nrm((D_MODEL,)),
            "ff1_w": nrm((FFN, D_MODEL)), "ff1_b": nrm((FFN,)),
            "ff2_w": nrm((D_MODEL, FFN)), "ff2_b": nrm((D_MODEL,)),
            "ln1_w": jnp.ones((D_MODEL,), jnp.float32) + nrm((D_MODEL,)),
            "ln1_b": nrm((D_MODEL,)),
            "ln2_w": jnp.ones((D_MODEL,), jnp.float32) + nrm((D_MODEL,)),
            "ln2_b": nrm((D_MODEL,)),
        })
    return params


def _pack_kernel_params(p):
    """Rearrange torch-layout params into the kernel layout (glue, plain JAX)."""
    L = NUM_LAYERS
    ls = p["layers"]
    scale = 1.0 / math.sqrt(HEAD_DIM)
    # fold 1/sqrt(head_dim) into the q third of the fused in-projection
    qkv_scale = jnp.concatenate([jnp.full((D_MODEL,), scale, jnp.float32),
                                 jnp.ones((2 * D_MODEL,), jnp.float32)])
    qkv_wt = jnp.stack([ls[l]["in_w"].T * qkv_scale[None, :] for l in range(L)])   # (L, D, 3D)
    qkv_b = jnp.stack([(ls[l]["in_b"] * qkv_scale).reshape(1, 3 * D_MODEL)
                       for l in range(L)])                                          # (L, 1, 3D)
    out_wt = jnp.stack([ls[l]["out_w"].T for l in range(L)])                        # (L, D, D)
    out_b = jnp.stack([ls[l]["out_b"].reshape(1, D_MODEL) for l in range(L)])
    ln1_w = jnp.stack([ls[l]["ln1_w"].reshape(1, D_MODEL) for l in range(L)])
    ln1_b = jnp.stack([ls[l]["ln1_b"].reshape(1, D_MODEL) for l in range(L)])
    ln2_w = jnp.stack([ls[l]["ln2_w"].reshape(1, D_MODEL) for l in range(L)])
    ln2_b = jnp.stack([ls[l]["ln2_b"].reshape(1, D_MODEL) for l in range(L)])
    ff1_wt = jnp.stack([ls[l]["ff1_w"].T for l in range(L)]).astype(jnp.bfloat16)   # (L, D, F)
    ff1_b = jnp.stack([ls[l]["ff1_b"].reshape(1, FFN) for l in range(L)])
    ff2_wt = jnp.stack([ls[l]["ff2_w"].T for l in range(L)]).astype(jnp.bfloat16)   # (L, F, D)
    ff2_b = jnp.stack([ls[l]["ff2_b"].reshape(1, D_MODEL) for l in range(L)])
    # lane-dense padded classifier weight (bias added outside the kernel)
    cls_wt_pad = jnp.zeros((D_MODEL, CLS_PAD), jnp.float32).at[:, :NUM_CLASSES].set(p["cls_w"].T)
    return (p["emb_w"].T, p["emb_b"].reshape(1, D_MODEL),
            qkv_wt, qkv_b, out_wt, out_b,
            ln1_w, ln1_b, ln2_w, ln2_b,
            ff1_wt, ff1_b, ff2_wt, ff2_b,
            cls_wt_pad)


# ------------------------ generation-aware sizing (glue) --------------------------
@functools.lru_cache(maxsize=1)
def _device_config():
    """(num_tensorcores, target_rows, vmem_limit_bytes) for the local TPU generation."""
    kind = ""
    try:
        kind = jax.devices()[0].device_kind.lower()
    except Exception:
        pass
    megacore = any(t in kind for t in ("v4", "v5p", "v7"))      # 2 TCs share one device
    cap = 64 * 2**20
    try:
        info_fn = getattr(pltpu, "get_tpu_info", None)
        if info_fn is not None:
            cap = int(getattr(info_fn(), "vmem_capacity_bytes", cap))
    except Exception:
        pass
    vmem_limit = max(16 * 2**20, min(3 * cap // 4, 96 * 2**20))
    target_rows = 512 if "v7" in kind else 1024                  # v7x: 64 MiB VMEM per TC
    return (2 if megacore else 1), target_rows, vmem_limit


def _pick_groups_per_step(n_att, t_att, target_rows, min_steps):
    """Groups per grid step: largest rows <= target, layout-legal, >= min_steps steps if possible."""
    divs = [g for g in range(1, n_att + 1) if n_att % g == 0]
    ok = lambda g: (g * t_att) % 8 == 0 or g == n_att
    cands = [g for g in divs if ok(g) and g * t_att <= target_rows]
    if not cands:
        cands = [g for g in divs if ok(g)]                       # g == n_att always qualifies
    multi = [g for g in cands if n_att // g >= min_steps]        # feed both TCs on megacore
    return max(multi) if multi else max(cands)


def _pick_att_rows(rows, t_att):
    """Attention sub-block size: whole groups, divides rows, ~128 rows (bounded unroll)."""
    g = rows // t_att
    cands = sorted({sg * t_att for sg in range(1, g + 1) if g % sg == 0})
    target = min(128, rows)
    for ar in cands:
        if ar >= target:
            return ar
    return rows


# ---------------------------------- wrapper ---------------------------------------
@jax.jit
def transformer_classifier_forward(x, params):
    a0, a1, d = x.shape
    assert d == D_MODEL
    t_att, n_att = a0, a1
    nt = n_att * t_att
    # flatten so that attention groups (fixed axis-1 index) are contiguous row blocks
    x2 = jnp.transpose(x, (1, 0, 2)).reshape(nt, d)

    num_tc, target_rows, vmem_limit = _device_config()
    g = _pick_groups_per_step(n_att, t_att, target_rows, num_tc)
    rows = g * t_att
    num_steps = n_att // g
    att_rows = _pick_att_rows(rows, t_att)
    n_sub = rows // att_rows

    # small fixed-size helper constants (do NOT scale with rows): block-diag additive mask for
    # one attention sub-block and the 1/n_att-scaled mean-pool selector.
    r = jnp.arange(att_rows)
    mask_small = jnp.where((r[:, None] // t_att) == (r[None, :] // t_att),
                           0.0, -1e30).astype(jnp.float32)                  # (att_rows, att_rows)
    pool_small = jnp.where((r[None, :] % t_att) == jnp.arange(t_att)[:, None],
                           1.0 / n_att, 0.0).astype(jnp.float32)            # (t_att, att_rows)

    w = _pack_kernel_params(params)
    kernel_args = (x2, mask_small, pool_small) + w

    def _const_spec(arr):
        nd = arr.ndim
        return pl.BlockSpec(arr.shape, lambda i, _nd=nd: (0,) * _nd)

    in_specs = [pl.BlockSpec((rows, D_MODEL), lambda i: (i, 0)),
                _const_spec(mask_small), _const_spec(pool_small)]
    in_specs += [_const_spec(a) for a in w]

    kernel = functools.partial(_transformer_kernel, att_rows=att_rows, n_sub=n_sub)

    out = pl.pallas_call(
        kernel,
        out_shape=jax.ShapeDtypeStruct((num_steps, t_att, CLS_PAD), jnp.float32),
        grid=(num_steps,),
        in_specs=in_specs,
        out_specs=pl.BlockSpec((None, t_att, CLS_PAD), lambda i: (i, 0, 0)),
        scratch_shapes=[pltpu.VMEM((rows, D_MODEL), jnp.float32)],   # per-head context staging
        compiler_params=pltpu.CompilerParams(
            dimension_semantics=("parallel",),
            vmem_limit_bytes=vmem_limit),
    )(*kernel_args)

    # sum per-chunk (already 1/n_att scaled) contributions, add bias, drop lane padding
    logits = jnp.sum(out, axis=0)[:, :NUM_CLASSES] + params["cls_b"][None, :]
    return logits


# ----------------------------- pure-JAX reference ---------------------------------
def _ln_ref(x, w, b):
    mu = jnp.mean(x, axis=-1, keepdims=True)
    var = jnp.mean((x - mu) ** 2, axis=-1, keepdims=True)
    return (x - mu) / jnp.sqrt(var + LN_EPS) * w + b


def torch_reference(x, p):
    h = x @ p["emb_w"].T + p["emb_b"]                       # (A0, A1, D)
    scale = 1.0 / math.sqrt(HEAD_DIM)
    for lp in p["layers"]:
        qkv = h @ lp["in_w"].T + lp["in_b"]                 # (A0, A1, 3D)
        q, k, v = jnp.split(qkv, 3, axis=-1)
        ctxs = []
        for hd in range(NHEAD):
            sl = slice(hd * HEAD_DIM, (hd + 1) * HEAD_DIM)
            qh, kh, vh = q[..., sl] * scale, k[..., sl], v[..., sl]
            s = jnp.einsum("anh,bnh->nab", qh, kh)
            pw = jax.nn.softmax(s, axis=-1)
            ctxs.append(jnp.einsum("nab,bnh->anh", pw, vh))
        ctx = jnp.concatenate(ctxs, axis=-1)
        attn = ctx @ lp["out_w"].T + lp["out_b"]
        h = _ln_ref(h + attn, lp["ln1_w"], lp["ln1_b"])
        ff = jnp.maximum(h @ lp["ff1_w"].T + lp["ff1_b"], 0.0)
        ff = ff @ lp["ff2_w"].T + lp["ff2_b"]
        h = _ln_ref(h + ff, lp["ln2_w"], lp["ln2_b"])
    pooled = jnp.mean(h, axis=1)                            # (A0, D)
    return pooled @ p["cls_w"].T + p["cls_b"]


# ------------------------------------ main -----------------------------------------
if __name__ == "__main__":
    params = init_params(0)
    x = jax.random.normal(jax.random.fold_in(jax.random.PRNGKey(0), 12345),
                          (2, 8, D_MODEL), jnp.float32)     # (A0=seq, A1=batch, D)

    out = transformer_classifier_forward(x, params)
    out = jax.block_until_ready(out)

    ref = torch_reference(x, params)
    assert out.shape == (2, NUM_CLASSES), out.shape
    # tolerance accounts for bf16 FFN weights + approx reciprocal in the kernel (f32 reference)
    if not bool(jnp.allclose(out, ref, atol=2e-2, rtol=2e-2)):
        raise AssertionError(f"kernel/reference mismatch:\n{out}\n{ref}")
    print("KERNEL_OK")
</pallas_src>

<mosaic_0001>
module attributes {stable_mosaic.version = 11 : i64} {
  func.func @_transformer_kernel(%arg0: i32, %arg1: memref<16x32xf32, #tpu.memory_space<vmem>>, %arg2: memref<16x16xf32, #tpu.memory_space<vmem>>, %arg3: memref<2x16xf32, #tpu.memory_space<vmem>>, %arg4: memref<32x32xf32, #tpu.memory_space<vmem>>, %arg5: memref<1x32xf32, #tpu.memory_space<vmem>>, %arg6: memref<2x32x96xf32, #tpu.memory_space<vmem>>, %arg7: memref<2x1x96xf32, #tpu.memory_space<vmem>>, %arg8: memref<2x32x32xf32, #tpu.memory_space<vmem>>, %arg9: memref<2x1x32xf32, #tpu.memory_space<vmem>>, %arg10: memref<2x1x32xf32, #tpu.memory_space<vmem>>, %arg11: memref<2x1x32xf32, #tpu.memory_space<vmem>>, %arg12: memref<2x1x32xf32, #tpu.memory_space<vmem>>, %arg13: memref<2x1x32xf32, #tpu.memory_space<vmem>>, %arg14: memref<2x32x2048xbf16, #tpu.memory_space<vmem>>, %arg15: memref<2x1x2048xf32, #tpu.memory_space<vmem>>, %arg16: memref<2x2048x32xbf16, #tpu.memory_space<vmem>>, %arg17: memref<2x1x32xf32, #tpu.memory_space<vmem>>, %arg18: memref<32x128xf32, #tpu.memory_space<vmem>>, %arg19: memref<1x2x128xf32, #tpu.memory_space<vmem>>, %arg20: memref<16x32xf32, #tpu.memory_space<vmem>>) attributes {dimension_semantics = [#tpu.dimension_semantics<parallel>], iteration_bounds = array<i64: 1>, scalar_prefetch = 0 : i64, scratch_operands = 1 : i64, tpu.core_type = #tpu.core_type<tc>, window_params = [{transform_indices = @transform_0, window_bounds = array<i64: 16, 32>}, {pipeline_mode = #tpu.pipeline_mode<synchronous>, transform_indices = @transform_1, window_bounds = array<i64: 16, 16>}, {pipeline_mode = #tpu.pipeline_mode<synchronous>, transform_indices = @transform_2, window_bounds = array<i64: 2, 16>}, {pipeline_mode = #tpu.pipeline_mode<synchronous>, transform_indices = @transform_3, window_bounds = array<i64: 32, 32>}, {pipeline_mode = #tpu.pipeline_mode<synchronous>, transform_indices = @transform_4, window_bounds = array<i64: 1, 32>}, {pipeline_mode = #tpu.pipeline_mode<synchronous>, transform_indices = @transform_5, window_bounds = array<i64: 2, 32, 96>}, {pipeline_mode = #tpu.pipeline_mode<synchronous>, transform_indices = @transform_6, window_bounds = array<i64: 2, 1, 96>}, {pipeline_mode = #tpu.pipeline_mode<synchronous>, transform_indices = @transform_7, window_bounds = array<i64: 2, 32, 32>}, {pipeline_mode = #tpu.pipeline_mode<synchronous>, transform_indices = @transform_8, window_bounds = array<i64: 2, 1, 32>}, {pipeline_mode = #tpu.pipeline_mode<synchronous>, transform_indices = @transform_9, window_bounds = array<i64: 2, 1, 32>}, {pipeline_mode = #tpu.pipeline_mode<synchronous>, transform_indices = @transform_10, window_bounds = array<i64: 2, 1, 32>}, {pipeline_mode = #tpu.pipeline_mode<synchronous>, transform_indices = @transform_11, window_bounds = array<i64: 2, 1, 32>}, {pipeline_mode = #tpu.pipeline_mode<synchronous>, transform_indices = @transform_12, window_bounds = array<i64: 2, 1, 32>}, {pipeline_mode = #tpu.pipeline_mode<synchronous>, transform_indices = @transform_13, window_bounds = array<i64: 2, 32, 2048>}, {pipeline_mode = #tpu.pipeline_mode<synchronous>, transform_indices = @transform_14, window_bounds = array<i64: 2, 1, 2048>}, {pipeline_mode = #tpu.pipeline_mode<synchronous>, transform_indices = @transform_15, window_bounds = array<i64: 2, 2048, 32>}, {pipeline_mode = #tpu.pipeline_mode<synchronous>, transform_indices = @transform_16, window_bounds = array<i64: 2, 1, 32>}, {pipeline_mode = #tpu.pipeline_mode<synchronous>, transform_indices = @transform_17, window_bounds = array<i64: 32, 128>}, {transform_indices = @transform_18, window_bounds = array<i64: 1, 2, 128>}]} {
    %c0 = arith.constant 0 : index
    %c0_0 = arith.constant 0 : index
    %0 = vector.load %arg2[%c0, %c0_0] : memref<16x16xf32, #tpu.memory_space<vmem>>, vector<16x16xf32>
    %c0_1 = arith.constant 0 : index
    %c0_2 = arith.constant 0 : index
    %1 = vector.load %arg1[%c0_1, %c0_2] : memref<16x32xf32, #tpu.memory_space<vmem>>, vector<16x32xf32>
    %c0_3 = arith.constant 0 : index
    %c0_4 = arith.constant 0 : index
    %2 = vector.load %arg4[%c0_3, %c0_4] : memref<32x32xf32, #tpu.memory_space<vmem>>, vector<32x32xf32>
    %cst = arith.constant dense<0.000000e+00> : vector<16x32xf32>
    %3 = tpu.matmul %1, %2, %cst {dimension_numbers = #tpu.dot_dimension_numbers<[1], [0], [0], [1], [0, 0, 1, 1], [], []>} : vector<16x32xf32>, vector<32x32xf32>, vector<16x32xf32> -> vector<16x32xf32>
    %c0_5 = arith.constant 0 : index
    %c0_6 = arith.constant 0 : index
    %4 = vector.load %arg5[%c0_5, %c0_6] : memref<1x32xf32, #tpu.memory_space<vmem>>, vector<1x32xf32>
    %5 = vector.broadcast %4 : vector<1x32xf32> to vector<16x32xf32>
    %6 = arith.addf %3, %5 : vector<16x32xf32>
    %c0_7 = arith.constant 0 : index
    %c0_8 = arith.constant 0 : index
    %c0_9 = arith.constant 0 : index
    %7 = vector.load %arg6[%c0_7, %c0_8, %c0_9] : memref<2x32x96xf32, #tpu.memory_space<vmem>>, vector<1x32x96xf32>
    %8 = vector.shape_cast %7 : vector<1x32x96xf32> to vector<32x96xf32>
    %cst_10 = arith.constant dense<0.000000e+00> : vector<16x96xf32>
    %9 = tpu.matmul %6, %8, %cst_10 {dimension_numbers = #tpu.dot_dimension_numbers<[1], [0], [0], [1], [0, 0, 1, 1], [], []>} : vector<16x32xf32>, vector<32x96xf32>, vector<16x96xf32> -> vector<16x96xf32>
    %c0_11 = arith.constant 0 : index
    %c0_12 = arith.constant 0 : index
    %c0_13 = arith.constant 0 : index
    %10 = vector.load %arg7[%c0_11, %c0_12, %c0_13] : memref<2x1x96xf32, #tpu.memory_space<vmem>>, vector<1x1x96xf32>
    %11 = vector.shape_cast %10 : vector<1x1x96xf32> to vector<1x96xf32>
    %12 = vector.broadcast %11 : vector<1x96xf32> to vector<16x96xf32>
    %13 = arith.addf %9, %12 : vector<16x96xf32>
    %14 = vector.extract_strided_slice %13 {offsets = [0, 0], sizes = [16, 8], strides = [1, 1]} : vector<16x96xf32> to vector<16x8xf32>
    %15 = vector.extract_strided_slice %13 {offsets = [0, 32], sizes = [16, 8], strides = [1, 1]} : vector<16x96xf32> to vector<16x8xf32>
    %16 = vector.extract_strided_slice %13 {offsets = [0, 64], sizes = [16, 8], strides = [1, 1]} : vector<16x96xf32> to vector<16x8xf32>
    %cst_14 = arith.constant dense<0.000000e+00> : vector<16x16xf32>
    %17 = tpu.matmul %14, %15, %cst_14 {dimension_numbers = #tpu.dot_dimension_numbers<[1], [1], [0], [0], [0, 0, 1, 0], [], []>} : vector<16x8xf32>, vector<16x8xf32>, vector<16x16xf32> -> vector<16x16xf32>
    %18 = arith.addf %17, %0 : vector<16x16xf32>
    %cst_15 = arith.constant dense<0xFF800000> : vector<16xf32>
    %19 = vector.multi_reduction <maximumf>, %18, %cst_15 [1] : vector<16x16xf32> to vector<16xf32>
    %20 = vector.shape_cast %19 : vector<16xf32> to vector<16x1xf32>
    %21 = vector.broadcast %20 : vector<16x1xf32> to vector<16x16xf32>
    %22 = arith.subf %18, %21 : vector<16x16xf32>
    %23 = math.exp %22 : vector<16x16xf32>
    %cst_16 = arith.constant dense<0.000000e+00> : vector<16xf32>
    %24 = vector.multi_reduction <add>, %23, %cst_16 [1] : vector<16x16xf32> to vector<16xf32>
    %25 = vector.shape_cast %24 : vector<16xf32> to vector<16x1xf32>
    %26 = tpu.reciprocal %25 {approx = true} : vector<16x1xf32> -> vector<16x1xf32>
    %27 = vector.broadcast %26 : vector<16x1xf32> to vector<16x16xf32>
    %28 = arith.mulf %23, %27 : vector<16x16xf32>
    %cst_17 = arith.constant dense<0.000000e+00> : vector<16x8xf32>
    %29 = tpu.matmul %28, %16, %cst_17 {dimension_numbers = #tpu.dot_dimension_numbers<[1], [0], [0], [1], [0, 0, 1, 1], [], []>} : vector<16x16xf32>, vector<16x8xf32>, vector<16x8xf32> -> vector<16x8xf32>
    %c0_18 = arith.constant 0 : index
    %c0_19 = arith.constant 0 : index
    %30 = vector.load %arg20[%c0_18, %c0_19] : memref<16x32xf32, #tpu.memory_space<vmem>>, vector<16x8xf32>
    tpu.vector_store %arg20[%c0_18, %c0_19], %29 {strides = array<i32>} : memref<16x32xf32, #tpu.memory_space<vmem>>, vector<16x8xf32>,
    %31 = vector.extract_strided_slice %13 {offsets = [0, 8], sizes = [16, 8], strides = [1, 1]} : vector<16x96xf32> to vector<16x8xf32>
    %32 = vector.extract_strided_slice %13 {offsets = [0, 40], sizes = [16, 8], strides = [1, 1]} : vector<16x96xf32> to vector<16x8xf32>
    %33 = vector.extract_strided_slice %13 {offsets = [0, 72], sizes = [16, 8], strides = [1, 1]} : vector<16x96xf32> to vector<16x8xf32>
    %cst_20 = arith.constant dense<0.000000e+00> : vector<16x16xf32>
    %34 = tpu.matmul %31, %32, %cst_20 {dimension_numbers = #tpu.dot_dimension_numbers<[1], [1], [0], [0], [0, 0, 1, 0], [], []>} : vector<16x8xf32>, vector<16x8xf32>, vector<16x16xf32> -> vector<16x16xf32>
    %35 = arith.addf %34, %0 : vector<16x16xf32>
    %cst_21 = arith.constant dense<0xFF800000> : vector<16xf32>
    %36 = vector.multi_reduction <maximumf>, %35, %cst_21 [1] : vector<16x16xf32> to vector<16xf32>
    %37 = vector.shape_cast %36 : vector<16xf32> to vector<16x1xf32>
    %38 = vector.broadcast %37 : vector<16x1xf32> to vector<16x16xf32>
    %39 = arith.subf %35, %38 : vector<16x16xf32>
    %40 = math.exp %39 : vector<16x16xf32>
    %cst_22 = arith.constant dense<0.000000e+00> : vector<16xf32>
    %41 = vector.multi_reduction <add>, %40, %cst_22 [1] : vector<16x16xf32> to vector<16xf32>
    %42 = vector.shape_cast %41 : vector<16xf32> to vector<16x1xf32>
    %43 = tpu.reciprocal %42 {approx = true} : vector<16x1xf32> -> vector<16x1xf32>
    %44 = vector.broadcast %43 : vector<16x1xf32> to vector<16x16xf32>
    %45 = arith.mulf %40, %44 : vector<16x16xf32>
    %cst_23 = arith.constant dense<0.000000e+00> : vector<16x8xf32>
    %46 = tpu.matmul %45, %33, %cst_23 {dimension_numbers = #tpu.dot_dimension_numbers<[1], [0], [0], [1], [0, 0, 1, 1], [], []>} : vector<16x16xf32>, vector<16x8xf32>, vector<16x8xf32> -> vector<16x8xf32>
    %c0_24 = arith.constant 0 : index
    %c8 = arith.constant 8 : index
    %47 = vector.load %arg20[%c0_24, %c8] : memref<16x32xf32, #tpu.memory_space<vmem>>, vector<16x8xf32>
    tpu.vector_store %arg20[%c0_24, %c8], %46 {strides = array<i32>} : memref<16x32xf32, #tpu.memory_space<vmem>>, vector<16x8xf32>,
    %48 = vector.extract_strided_slice %13 {offsets = [0, 16], sizes = [16, 8], strides = [1, 1]} : vector<16x96xf32> to vector<16x8xf32>
    %49 = vector.extract_strided_slice %13 {offsets = [0, 48], sizes = [16, 8], strides = [1, 1]} : vector<16x96xf32> to vector<16x8xf32>
    %50 = vector.extract_strided_slice %13 {offsets = [0, 80], sizes = [16, 8], strides = [1, 1]} : vector<16x96xf32> to vector<16x8xf32>
    %cst_25 = arith.constant dense<0.000000e+00> : vector<16x16xf32>
    %51 = tpu.matmul %48, %49, %cst_25 {dimension_numbers = #tpu.dot_dimension_numbers<[1], [1], [0], [0], [0, 0, 1, 0], [], []>} : vector<16x8xf32>, vector<16x8xf32>, vector<16x16xf32> -> vector<16x16xf32>
    %52 = arith.addf %51, %0 : vector<16x16xf32>
    %cst_26 = arith.constant dense<0xFF800000> : vector<16xf32>
    %53 = vector.multi_reduction <maximumf>, %52, %cst_26 [1] : vector<16x16xf32> to vector<16xf32>
    %54 = vector.shape_cast %53 : vector<16xf32> to vector<16x1xf32>
    %55 = vector.broadcast %54 : vector<16x1xf32> to vector<16x16xf32>
    %56 = arith.subf %52, %55 : vector<16x16xf32>
    %57 = math.exp %56 : vector<16x16xf32>
    %cst_27 = arith.constant dense<0.000000e+00> : vector<16xf32>
    %58 = vector.multi_reduction <add>, %57, %cst_27 [1] : vector<16x16xf32> to vector<16xf32>
    %59 = vector.shape_cast %58 : vector<16xf32> to vector<16x1xf32>
    %60 = tpu.reciprocal %59 {approx = true} : vector<16x1xf32> -> vector<16x1xf32>
    %61 = vector.broadcast %60 : vector<16x1xf32> to vector<16x16xf32>
    %62 = arith.mulf %57, %61 : vector<16x16xf32>
    %cst_28 = arith.constant dense<0.000000e+00> : vector<16x8xf32>
    %63 = tpu.matmul %62, %50, %cst_28 {dimension_numbers = #tpu.dot_dimension_numbers<[1], [0], [0], [1], [0, 0, 1, 1], [], []>} : vector<16x16xf32>, vector<16x8xf32>, vector<16x8xf32> -> vector<16x8xf32>
    %c0_29 = arith.constant 0 : index
    %c16 = arith.constant 16 : index
    %64 = vector.load %arg20[%c0_29, %c16] : memref<16x32xf32, #tpu.memory_space<vmem>>, vector<16x8xf32>
    tpu.vector_store %arg20[%c0_29, %c16], %63 {strides = array<i32>} : memref<16x32xf32, #tpu.memory_space<vmem>>, vector<16x8xf32>,
    %65 = vector.extract_strided_slice %13 {offsets = [0, 24], sizes = [16, 8], strides = [1, 1]} : vector<16x96xf32> to vector<16x8xf32>
    %66 = vector.extract_strided_slice %13 {offsets = [0, 56], sizes = [16, 8], strides = [1, 1]} : vector<16x96xf32> to vector<16x8xf32>
    %67 = vector.extract_strided_slice %13 {offsets = [0, 88], sizes = [16, 8], strides = [1, 1]} : vector<16x96xf32> to vector<16x8xf32>
    %cst_30 = arith.constant dense<0.000000e+00> : vector<16x16xf32>
    %68 = tpu.matmul %65, %66, %cst_30 {dimension_numbers = #tpu.dot_dimension_numbers<[1], [1], [0], [0], [0, 0, 1, 0], [], []>} : vector<16x8xf32>, vector<16x8xf32>, vector<16x16xf32> -> vector<16x16xf32>
    %69 = arith.addf %68, %0 : vector<16x16xf32>
    %cst_31 = arith.constant dense<0xFF800000> : vector<16xf32>
    %70 = vector.multi_reduction <maximumf>, %69, %cst_31 [1] : vector<16x16xf32> to vector<16xf32>
    %71 = vector.shape_cast %70 : vector<16xf32> to vector<16x1xf32>
    %72 = vector.broadcast %71 : vector<16x1xf32> to vector<16x16xf32>
    %73 = arith.subf %69, %72 : vector<16x16xf32>
    %74 = math.exp %73 : vector<16x16xf32>
    %cst_32 = arith.constant dense<0.000000e+00> : vector<16xf32>
    %75 = vector.multi_reduction <add>, %74, %cst_32 [1] : vector<16x16xf32> to vector<16xf32>
    %76 = vector.shape_cast %75 : vector<16xf32> to vector<16x1xf32>
    %77 = tpu.reciprocal %76 {approx = true} : vector<16x1xf32> -> vector<16x1xf32>
    %78 = vector.broadcast %77 : vector<16x1xf32> to vector<16x16xf32>
    %79 = arith.mulf %74, %78 : vector<16x16xf32>
    %cst_33 = arith.constant dense<0.000000e+00> : vector<16x8xf32>
    %80 = tpu.matmul %79, %67, %cst_33 {dimension_numbers = #tpu.dot_dimension_numbers<[1], [0], [0], [1], [0, 0, 1, 1], [], []>} : vector<16x16xf32>, vector<16x8xf32>, vector<16x8xf32> -> vector<16x8xf32>
    %c0_34 = arith.constant 0 : index
    %c24 = arith.constant 24 : index
    %81 = vector.load %arg20[%c0_34, %c24] : memref<16x32xf32, #tpu.memory_space<vmem>>, vector<16x8xf32>
    tpu.vector_store %arg20[%c0_34, %c24], %80 {strides = array<i32>} : memref<16x32xf32, #tpu.memory_space<vmem>>, vector<16x8xf32>,
    %c0_35 = arith.constant 0 : index
    %c0_36 = arith.constant 0 : index
    %82 = vector.load %arg20[%c0_35, %c0_36] : memref<16x32xf32, #tpu.memory_space<vmem>>, vector<16x32xf32>
    %c0_37 = arith.constant 0 : index
    %c0_38 = arith.constant 0 : index
    %c0_39 = arith.constant 0 : index
    %83 = vector.load %arg8[%c0_37, %c0_38, %c0_39] : memref<2x32x32xf32, #tpu.memory_space<vmem>>, vector<1x32x32xf32>
    %84 = vector.shape_cast %83 : vector<1x32x32xf32> to vector<32x32xf32>
    %cst_40 = arith.constant dense<0.000000e+00> : vector<16x32xf32>
    %85 = tpu.matmul %82, %84, %cst_40 {dimension_numbers = #tpu.dot_dimension_numbers<[1], [0], [0], [1], [0, 0, 1, 1], [], []>} : vector<16x32xf32>, vector<32x32xf32>, vector<16x32xf32> -> vector<16x32xf32>
    %c0_41 = arith.constant 0 : index
    %c0_42 = arith.constant 0 : index
    %c0_43 = arith.constant 0 : index
    %86 = vector.load %arg9[%c0_41, %c0_42, %c0_43] : memref<2x1x32xf32, #tpu.memory_space<vmem>>, vector<1x1x32xf32>
    %87 = vector.shape_cast %86 : vector<1x1x32xf32> to vector<1x32xf32>
    %88 = vector.broadcast %87 : vector<1x32xf32> to vector<16x32xf32>
    %89 = arith.addf %85, %88 : vector<16x32xf32>
    %90 = arith.addf %6, %89 : vector<16x32xf32>
    %c0_44 = arith.constant 0 : index
    %c0_45 = arith.constant 0 : index
    %c0_46 = arith.constant 0 : index
    %91 = vector.load %arg10[%c0_44, %c0_45, %c0_46] : memref<2x1x32xf32, #tpu.memory_space<vmem>>, vector<1x1x32xf32>
    %92 = vector.shape_cast %91 : vector<1x1x32xf32> to vector<1x32xf32>
    %c0_47 = arith.constant 0 : index
    %c0_48 = arith.constant 0 : index
    %c0_49 = arith.constant 0 : index
    %93 = vector.load %arg11[%c0_47, %c0_48, %c0_49] : memref<2x1x32xf32, #tpu.memory_space<vmem>>, vector<1x1x32xf32>
    %94 = vector.shape_cast %93 : vector<1x1x32xf32> to vector<1x32xf32>
    %cst_50 = arith.constant dense<0.000000e+00> : vector<16xf32>
    %95 = vector.multi_reduction <add>, %90, %cst_50 [1] : vector<16x32xf32> to vector<16xf32>
    %96 = vector.shape_cast %95 : vector<16xf32> to vector<16x1xf32>
    %cst_51 = arith.constant 3.200000e+01 : f32
    %97 = vector.broadcast %cst_51 : f32 to vector<16x1xf32>
    %98 = arith.divf %96, %97 : vector<16x1xf32>
    %99 = vector.broadcast %98 : vector<16x1xf32> to vector<16x32xf32>
    %100 = arith.subf %90, %99 : vector<16x32xf32>
    %101 = arith.mulf %100, %100 : vector<16x32xf32>
    %cst_52 = arith.constant dense<0.000000e+00> : vector<16xf32>
    %102 = vector.multi_reduction <add>, %101, %cst_52 [1] : vector<16x32xf32> to vector<16xf32>
    %103 = vector.shape_cast %102 : vector<16xf32> to vector<16x1xf32>
    %cst_53 = arith.constant 3.200000e+01 : f32
    %104 = vector.broadcast %cst_53 : f32 to vector<16x1xf32>
    %105 = arith.divf %103, %104 : vector<16x1xf32>
    %cst_54 = arith.constant 9.99999974E-6 : f32
    %106 = vector.broadcast %cst_54 : f32 to vector<16x1xf32>
    %107 = arith.addf %105, %106 : vector<16x1xf32>
    %108 = math.rsqrt %107 : vector<16x1xf32>
    %109 = vector.broadcast %108 : vector<16x1xf32> to vector<16x32xf32>
    %110 = arith.mulf %100, %109 : vector<16x32xf32>
    %111 = vector.broadcast %92 : vector<1x32xf32> to vector<16x32xf32>
    %112 = arith.mulf %110, %111 : vector<16x32xf32>
    %113 = vector.broadcast %94 : vector<1x32xf32> to vector<16x32xf32>
    %114 = arith.addf %112, %113 : vector<16x32xf32>
    %115 = arith.truncf %114 : vector<16x32xf32> to vector<16x32xbf16>
    %c0_55 = arith.constant 0 : index
    %c0_56 = arith.constant 0 : index
    %c0_57 = arith.constant 0 : index
    %116 = vector.load %arg14[%c0_55, %c0_56, %c0_57] : memref<2x32x2048xbf16, #tpu.memory_space<vmem>>, vector<1x32x2048xbf16>
    %117 = vector.shape_cast %116 : vector<1x32x2048xbf16> to vector<32x2048xbf16>
    %cst_58 = arith.constant dense<0.000000e+00> : vector<16x2048xf32>
    %118 = tpu.matmul %115, %117, %cst_58 {dimension_numbers = #tpu.dot_dimension_numbers<[1], [0], [0], [1], [0, 0, 1, 1], [], []>} : vector<16x32xbf16>, vector<32x2048xbf16>, vector<16x2048xf32> -> vector<16x2048xf32>
    %c0_59 = arith.constant 0 : index
    %c0_60 = arith.constant 0 : index
    %c0_61 = arith.constant 0 : index
    %119 = vector.load %arg15[%c0_59, %c0_60, %c0_61] : memref<2x1x2048xf32, #tpu.memory_space<vmem>>, vector<1x1x2048xf32>
    %120 = vector.shape_cast %119 : vector<1x1x2048xf32> to vector<1x2048xf32>
    %121 = vector.broadcast %120 : vector<1x2048xf32> to vector<16x2048xf32>
    %122 = arith.addf %118, %121 : vector<16x2048xf32>
    %cst_62 = arith.constant 0.000000e+00 : f32
    %123 = vector.broadcast %cst_62 : f32 to vector<16x2048xf32>
    %124 = arith.maximumf %122, %123 : vector<16x2048xf32>
    %125 = arith.truncf %124 : vector<16x2048xf32> to vector<16x2048xbf16>
    %c0_63 = arith.constant 0 : index
    %c0_64 = arith.constant 0 : index
    %c0_65 = arith.constant 0 : index
    %126 = vector.load %arg16[%c0_63, %c0_64, %c0_65] : memref<2x2048x32xbf16, #tpu.memory_space<vmem>>, vector<1x2048x32xbf16>
    %127 = vector.shape_cast %126 : vector<1x2048x32xbf16> to vector<2048x32xbf16>
    %cst_66 = arith.constant dense<0.000000e+00> : vector<16x32xf32>
    %128 = tpu.matmul %125, %127, %cst_66 {dimension_numbers = #tpu.dot_dimension_numbers<[1], [0], [0], [1], [0, 0, 1, 1], [], []>} : vector<16x2048xbf16>, vector<2048x32xbf16>, vector<16x32xf32> -> vector<16x32xf32>
    %c0_67 = arith.constant 0 : index
    %c0_68 = arith.constant 0 : index
    %c0_69 = arith.constant 0 : index
    %129 = vector.load %arg17[%c0_67, %c0_68, %c0_69] : memref<2x1x32xf32, #tpu.memory_space<vmem>>, vector<1x1x32xf32>
    %130 = vector.shape_cast %129 : vector<1x1x32xf32> to vector<1x32xf32>
    %131 = vector.broadcast %130 : vector<1x32xf32> to vector<16x32xf32>
    %132 = arith.addf %128, %131 : vector<16x32xf32>
    %133 = arith.addf %114, %132 : vector<16x32xf32>
    %c0_70 = arith.constant 0 : index
    %c0_71 = arith.constant 0 : index
    %c0_72 = arith.constant 0 : index
    %134 = vector.load %arg12[%c0_70, %c0_71, %c0_72] : memref<2x1x32xf32, #tpu.memory_space<vmem>>, vector<1x1x32xf32>
    %135 = vector.shape_cast %134 : vector<1x1x32xf32> to vector<1x32xf32>
    %c0_73 = arith.constant 0 : index
    %c0_74 = arith.constant 0 : index
    %c0_75 = arith.constant 0 : index
    %136 = vector.load %arg13[%c0_73, %c0_74, %c0_75] : memref<2x1x32xf32, #tpu.memory_space<vmem>>, vector<1x1x32xf32>
    %137 = vector.shape_cast %136 : vector<1x1x32xf32> to vector<1x32xf32>
    %cst_76 = arith.constant dense<0.000000e+00> : vector<16xf32>
    %138 = vector.multi_reduction <add>, %133, %cst_76 [1] : vector<16x32xf32> to vector<16xf32>
    %139 = vector.shape_cast %138 : vector<16xf32> to vector<16x1xf32>
    %cst_77 = arith.constant 3.200000e+01 : f32
    %140 = vector.broadcast %cst_77 : f32 to vector<16x1xf32>
    %141 = arith.divf %139, %140 : vector<16x1xf32>
    %142 = vector.broadcast %141 : vector<16x1xf32> to vector<16x32xf32>
    %143 = arith.subf %133, %142 : vector<16x32xf32>
    %144 = arith.mulf %143, %143 : vector<16x32xf32>
    %cst_78 = arith.constant dense<0.000000e+00> : vector<16xf32>
    %145 = vector.multi_reduction <add>, %144, %cst_78 [1] : vector<16x32xf32> to vector<16xf32>
    %146 = vector.shape_cast %145 : vector<16xf32> to vector<16x1xf32>
    %cst_79 = arith.constant 3.200000e+01 : f32
    %147 = vector.broadcast %cst_79 : f32 to vector<16x1xf32>
    %148 = arith.divf %146, %147 : vector<16x1xf32>
    %cst_80 = arith.constant 9.99999974E-6 : f32
    %149 = vector.broadcast %cst_80 : f32 to vector<16x1xf32>
    %150 = arith.addf %148, %149 : vector<16x1xf32>
    %151 = math.rsqrt %150 : vector<16x1xf32>
    %152 = vector.broadcast %151 : vector<16x1xf32> to vector<16x32xf32>
    %153 = arith.mulf %143, %152 : vector<16x32xf32>
    %154 = vector.broadcast %135 : vector<1x32xf32> to vector<16x32xf32>
    %155 = arith.mulf %153, %154 : vector<16x32xf32>
    %156 = vector.broadcast %137 : vector<1x32xf32> to vector<16x32xf32>
    %157 = arith.addf %155, %156 : vector<16x32xf32>
    %c1 = arith.constant 1 : index
    %c0_81 = arith.constant 0 : index
    %c0_82 = arith.constant 0 : index
    %158 = vector.load %arg6[%c1, %c0_81, %c0_82] : memref<2x32x96xf32, #tpu.memory_space<vmem>>, vector<1x32x96xf32>
    %159 = vector.shape_cast %158 : vector<1x32x96xf32> to vector<32x96xf32>
    %cst_83 = arith.constant dense<0.000000e+00> : vector<16x96xf32>
    %160 = tpu.matmul %157, %159, %cst_83 {dimension_numbers = #tpu.dot_dimension_numbers<[1], [0], [0], [1], [0, 0, 1, 1], [], []>} : vector<16x32xf32>, vector<32x96xf32>, vector<16x96xf32> -> vector<16x96xf32>
    %c1_84 = arith.constant 1 : index
    %c0_85 = arith.constant 0 : index
    %c0_86 = arith.constant 0 : index
    %161 = vector.load %arg7[%c1_84, %c0_85, %c0_86] : memref<2x1x96xf32, #tpu.memory_space<vmem>>, vector<1x1x96xf32>
    %162 = vector.shape_cast %161 : vector<1x1x96xf32> to vector<1x96xf32>
    %163 = vector.broadcast %162 : vector<1x96xf32> to vector<16x96xf32>
    %164 = arith.addf %160, %163 : vector<16x96xf32>
    %165 = vector.extract_strided_slice %164 {offsets = [0, 0], sizes = [16, 8], strides = [1, 1]} : vector<16x96xf32> to vector<16x8xf32>
    %166 = vector.extract_strided_slice %164 {offsets = [0, 32], sizes = [16, 8], strides = [1, 1]} : vector<16x96xf32> to vector<16x8xf32>
    %167 = vector.extract_strided_slice %164 {offsets = [0, 64], sizes = [16, 8], strides = [1, 1]} : vector<16x96xf32> to vector<16x8xf32>
    %cst_87 = arith.constant dense<0.000000e+00> : vector<16x16xf32>
    %168 = tpu.matmul %165, %166, %cst_87 {dimension_numbers = #tpu.dot_dimension_numbers<[1], [1], [0], [0], [0, 0, 1, 0], [], []>} : vector<16x8xf32>, vector<16x8xf32>, vector<16x16xf32> -> vector<16x16xf32>
    %169 = arith.addf %168, %0 : vector<16x16xf32>
    %cst_88 = arith.constant dense<0xFF800000> : vector<16xf32>
    %170 = vector.multi_reduction <maximumf>, %169, %cst_88 [1] : vector<16x16xf32> to vector<16xf32>
    %171 = vector.shape_cast %170 : vector<16xf32> to vector<16x1xf32>
    %172 = vector.broadcast %171 : vector<16x1xf32> to vector<16x16xf32>
    %173 = arith.subf %169, %172 : vector<16x16xf32>
    %174 = math.exp %173 : vector<16x16xf32>
    %cst_89 = arith.constant dense<0.000000e+00> : vector<16xf32>
    %175 = vector.multi_reduction <add>, %174, %cst_89 [1] : vector<16x16xf32> to vector<16xf32>
    %176 = vector.shape_cast %175 : vector<16xf32> to vector<16x1xf32>
    %177 = tpu.reciprocal %176 {approx = true} : vector<16x1xf32> -> vector<16x1xf32>
    %178 = vector.broadcast %177 : vector<16x1xf32> to vector<16x16xf32>
    %179 = arith.mulf %174, %178 : vector<16x16xf32>
    %cst_90 = arith.constant dense<0.000000e+00> : vector<16x8xf32>
    %180 = tpu.matmul %179, %167, %cst_90 {dimension_numbers = #tpu.dot_dimension_numbers<[1], [0], [0], [1], [0, 0, 1, 1], [], []>} : vector<16x16xf32>, vector<16x8xf32>, vector<16x8xf32> -> vector<16x8xf32>
    %c0_91 = arith.constant 0 : index
    %c0_92 = arith.constant 0 : index
    %181 = vector.load %arg20[%c0_91, %c0_92] : memref<16x32xf32, #tpu.memory_space<vmem>>, vector<16x8xf32>
    tpu.vector_store %arg20[%c0_91, %c0_92], %180 {strides = array<i32>} : memref<16x32xf32, #tpu.memory_space<vmem>>, vector<16x8xf32>,
    %182 = vector.extract_strided_slice %164 {offsets = [0, 8], sizes = [16, 8], strides = [1, 1]} : vector<16x96xf32> to vector<16x8xf32>
    %183 = vector.extract_strided_slice %164 {offsets = [0, 40], sizes = [16, 8], strides = [1, 1]} : vector<16x96xf32> to vector<16x8xf32>
    %184 = vector.extract_strided_slice %164 {offsets = [0, 72], sizes = [16, 8], strides = [1, 1]} : vector<16x96xf32> to vector<16x8xf32>
    %cst_93 = arith.constant dense<0.000000e+00> : vector<16x16xf32>
    %185 = tpu.matmul %182, %183, %cst_93 {dimension_numbers = #tpu.dot_dimension_numbers<[1], [1], [0], [0], [0, 0, 1, 0], [], []>} : vector<16x8xf32>, vector<16x8xf32>, vector<16x16xf32> -> vector<16x16xf32>
    %186 = arith.addf %185, %0 : vector<16x16xf32>
    %cst_94 = arith.constant dense<0xFF800000> : vector<16xf32>
    %187 = vector.multi_reduction <maximumf>, %186, %cst_94 [1] : vector<16x16xf32> to vector<16xf32>
    %188 = vector.shape_cast %187 : vector<16xf32> to vector<16x1xf32>
    %189 = vector.broadcast %188 : vector<16x1xf32> to vector<16x16xf32>
    %190 = arith.subf %186, %189 : vector<16x16xf32>
    %191 = math.exp %190 : vector<16x16xf32>
    %cst_95 = arith.constant dense<0.000000e+00> : vector<16xf32>
    %192 = vector.multi_reduction <add>, %191, %cst_95 [1] : vector<16x16xf32> to vector<16xf32>
    %193 = vector.shape_cast %192 : vector<16xf32> to vector<16x1xf32>
    %194 = tpu.reciprocal %193 {approx = true} : vector<16x1xf32> -> vector<16x1xf32>
    %195 = vector.broadcast %194 : vector<16x1xf32> to vector<16x16xf32>
    %196 = arith.mulf %191, %195 : vector<16x16xf32>
    %cst_96 = arith.constant dense<0.000000e+00> : vector<16x8xf32>
    %197 = tpu.matmul %196, %184, %cst_96 {dimension_numbers = #tpu.dot_dimension_numbers<[1], [0], [0], [1], [0, 0, 1, 1], [], []>} : vector<16x16xf32>, vector<16x8xf32>, vector<16x8xf32> -> vector<16x8xf32>
    %c0_97 = arith.constant 0 : index
    %c8_98 = arith.constant 8 : index
    %198 = vector.load %arg20[%c0_97, %c8_98] : memref<16x32xf32, #tpu.memory_space<vmem>>, vector<16x8xf32>
    tpu.vector_store %arg20[%c0_97, %c8_98], %197 {strides = array<i32>} : memref<16x32xf32, #tpu.memory_space<vmem>>, vector<16x8xf32>,
    %199 = vector.extract_strided_slice %164 {offsets = [0, 16], sizes = [16, 8], strides = [1, 1]} : vector<16x96xf32> to vector<16x8xf32>
    %200 = vector.extract_strided_slice %164 {offsets = [0, 48], sizes = [16, 8], strides = [1, 1]} : vector<16x96xf32> to vector<16x8xf32>
    %201 = vector.extract_strided_slice %164 {offsets = [0, 80], sizes = [16, 8], strides = [1, 1]} : vector<16x96xf32> to vector<16x8xf32>
    %cst_99 = arith.constant dense<0.000000e+00> : vector<16x16xf32>
    %202 = tpu.matmul %199, %200, %cst_99 {dimension_numbers = #tpu.dot_dimension_numbers<[1], [1], [0], [0], [0, 0, 1, 0], [], []>} : vector<16x8xf32>, vector<16x8xf32>, vector<16x16xf32> -> vector<16x16xf32>
    %203 = arith.addf %202, %0 : vector<16x16xf32>
    %cst_100 = arith.constant dense<0xFF800000> : vector<16xf32>
    %204 = vector.multi_reduction <maximumf>, %203, %cst_100 [1] : vector<16x16xf32> to vector<16xf32>
    %205 = vector.shape_cast %204 : vector<16xf32> to vector<16x1xf32>
    %206 = vector.broadcast %205 : vector<16x1xf32> to vector<16x16xf32>
    %207 = arith.subf %203, %206 : vector<16x16xf32>
    %208 = math.exp %207 : vector<16x16xf32>
    %cst_101 = arith.constant dense<0.000000e+00> : vector<16xf32>
    %209 = vector.multi_reduction <add>, %208, %cst_101 [1] : vector<16x16xf32> to vector<16xf32>
    %210 = vector.shape_cast %209 : vector<16xf32> to vector<16x1xf32>
    %211 = tpu.reciprocal %210 {approx = true} : vector<16x1xf32> -> vector<16x1xf32>
    %212 = vector.broadcast %211 : vector<16x1xf32> to vector<16x16xf32>
    %213 = arith.mulf %208, %212 : vector<16x16xf32>
    %cst_102 = arith.constant dense<0.000000e+00> : vector<16x8xf32>
    %214 = tpu.matmul %213, %201, %cst_102 {dimension_numbers = #tpu.dot_dimension_numbers<[1], [0], [0], [1], [0, 0, 1, 1], [], []>} : vector<16x16xf32>, vector<16x8xf32>, vector<16x8xf32> -> vector<16x8xf32>
    %c0_103 = arith.constant 0 : index
    %c16_104 = arith.constant 16 : index
    %215 = vector.load %arg20[%c0_103, %c16_104] : memref<16x32xf32, #tpu.memory_space<vmem>>, vector<16x8xf32>
    tpu.vector_store %arg20[%c0_103, %c16_104], %214 {strides = array<i32>} : memref<16x32xf32, #tpu.memory_space<vmem>>, vector<16x8xf32>,
    %216 = vector.extract_strided_slice %164 {offsets = [0, 24], sizes = [16, 8], strides = [1, 1]} : vector<16x96xf32> to vector<16x8xf32>
    %217 = vector.extract_strided_slice %164 {offsets = [0, 56], sizes = [16, 8], strides = [1, 1]} : vector<16x96xf32> to vector<16x8xf32>
    %218 = vector.extract_strided_slice %164 {offsets = [0, 88], sizes = [16, 8], strides = [1, 1]} : vector<16x96xf32> to vector<16x8xf32>
    %cst_105 = arith.constant dense<0.000000e+00> : vector<16x16xf32>
    %219 = tpu.matmul %216, %217, %cst_105 {dimension_numbers = #tpu.dot_dimension_numbers<[1], [1], [0], [0], [0, 0, 1, 0], [], []>} : vector<16x8xf32>, vector<16x8xf32>, vector<16x16xf32> -> vector<16x16xf32>
    %220 = arith.addf %219, %0 : vector<16x16xf32>
    %cst_106 = arith.constant dense<0xFF800000> : vector<16xf32>
    %221 = vector.multi_reduction <maximumf>, %220, %cst_106 [1] : vector<16x16xf32> to vector<16xf32>
    %222 = vector.shape_cast %221 : vector<16xf32> to vector<16x1xf32>
    %223 = vector.broadcast %222 : vector<16x1xf32> to vector<16x16xf32>
    %224 = arith.subf %220, %223 : vector<16x16xf32>
    %225 = math.exp %224 : vector<16x16xf32>
    %cst_107 = arith.constant dense<0.000000e+00> : vector<16xf32>
    %226 = vector.multi_reduction <add>, %225, %cst_107 [1] : vector<16x16xf32> to vector<16xf32>
    %227 = vector.shape_cast %226 : vector<16xf32> to vector<16x1xf32>
    %228 = tpu.reciprocal %227 {approx = true} : vector<16x1xf32> -> vector<16x1xf32>
    %229 = vector.broadcast %228 : vector<16x1xf32> to vector<16x16xf32>
    %230 = arith.mulf %225, %229 : vector<16x16xf32>
    %cst_108 = arith.constant dense<0.000000e+00> : vector<16x8xf32>
    %231 = tpu.matmul %230, %218, %cst_108 {dimension_numbers = #tpu.dot_dimension_numbers<[1], [0], [0], [1], [0, 0, 1, 1], [], []>} : vector<16x16xf32>, vector<16x8xf32>, vector<16x8xf32> -> vector<16x8xf32>
    %c0_109 = arith.constant 0 : index
    %c24_110 = arith.constant 24 : index
    %232 = vector.load %arg20[%c0_109, %c24_110] : memref<16x32xf32, #tpu.memory_space<vmem>>, vector<16x8xf32>
    tpu.vector_store %arg20[%c0_109, %c24_110], %231 {strides = array<i32>} : memref<16x32xf32, #tpu.memory_space<vmem>>, vector<16x8xf32>,
    %c0_111 = arith.constant 0 : index
    %c0_112 = arith.constant 0 : index
    %233 = vector.load %arg20[%c0_111, %c0_112] : memref<16x32xf32, #tpu.memory_space<vmem>>, vector<16x32xf32>
    %c1_113 = arith.constant 1 : index
    %c0_114 = arith.constant 0 : index
    %c0_115 = arith.constant 0 : index
    %234 = vector.load %arg8[%c1_113, %c0_114, %c0_115] : memref<2x32x32xf32, #tpu.memory_space<vmem>>, vector<1x32x32xf32>
    %235 = vector.shape_cast %234 : vector<1x32x32xf32> to vector<32x32xf32>
    %cst_116 = arith.constant dense<0.000000e+00> : vector<16x32xf32>
    %236 = tpu.matmul %233, %235, %cst_116 {dimension_numbers = #tpu.dot_dimension_numbers<[1], [0], [0], [1], [0, 0, 1, 1], [], []>} : vector<16x32xf32>, vector<32x32xf32>, vector<16x32xf32> -> vector<16x32xf32>
    %c1_117 = arith.constant 1 : index
    %c0_118 = arith.constant 0 : index
    %c0_119 = arith.constant 0 : index
    %237 = vector.load %arg9[%c1_117, %c0_118, %c0_119] : memref<2x1x32xf32, #tpu.memory_space<vmem>>, vector<1x1x32xf32>
    %238 = vector.shape_cast %237 : vector<1x1x32xf32> to vector<1x32xf32>
    %239 = vector.broadcast %238 : vector<1x32xf32> to vector<16x32xf32>
    %240 = arith.addf %236, %239 : vector<16x32xf32>
    %241 = arith.addf %157, %240 : vector<16x32xf32>
    %c1_120 = arith.constant 1 : index
    %c0_121 = arith.constant 0 : index
    %c0_122 = arith.constant 0 : index
    %242 = vector.load %arg10[%c1_120, %c0_121, %c0_122] : memref<2x1x32xf32, #tpu.memory_space<vmem>>, vector<1x1x32xf32>
    %243 = vector.shape_cast %242 : vector<1x1x32xf32> to vector<1x32xf32>
    %c1_123 = arith.constant 1 : index
    %c0_124 = arith.constant 0 : index
    %c0_125 = arith.constant 0 : index
    %244 = vector.load %arg11[%c1_123, %c0_124, %c0_125] : memref<2x1x32xf32, #tpu.memory_space<vmem>>, vector<1x1x32xf32>
    %245 = vector.shape_cast %244 : vector<1x1x32xf32> to vector<1x32xf32>
    %cst_126 = arith.constant dense<0.000000e+00> : vector<16xf32>
    %246 = vector.multi_reduction <add>, %241, %cst_126 [1] : vector<16x32xf32> to vector<16xf32>
    %247 = vector.shape_cast %246 : vector<16xf32> to vector<16x1xf32>
    %cst_127 = arith.constant 3.200000e+01 : f32
    %248 = vector.broadcast %cst_127 : f32 to vector<16x1xf32>
    %249 = arith.divf %247, %248 : vector<16x1xf32>
    %250 = vector.broadcast %249 : vector<16x1xf32> to vector<16x32xf32>
    %251 = arith.subf %241, %250 : vector<16x32xf32>
    %252 = arith.mulf %251, %251 : vector<16x32xf32>
    %cst_128 = arith.constant dense<0.000000e+00> : vector<16xf32>
    %253 = vector.multi_reduction <add>, %252, %cst_128 [1] : vector<16x32xf32> to vector<16xf32>
    %254 = vector.shape_cast %253 : vector<16xf32> to vector<16x1xf32>
    %cst_129 = arith.constant 3.200000e+01 : f32
    %255 = vector.broadcast %cst_129 : f32 to vector<16x1xf32>
    %256 = arith.divf %254, %255 : vector<16x1xf32>
    %cst_130 = arith.constant 9.99999974E-6 : f32
    %257 = vector.broadcast %cst_130 : f32 to vector<16x1xf32>
    %258 = arith.addf %256, %257 : vector<16x1xf32>
    %259 = math.rsqrt %258 : vector<16x1xf32>
    %260 = vector.broadcast %259 : vector<16x1xf32> to vector<16x32xf32>
    %261 = arith.mulf %251, %260 : vector<16x32xf32>
    %262 = vector.broadcast %243 : vector<1x32xf32> to vector<16x32xf32>
    %263 = arith.mulf %261, %262 : vector<16x32xf32>
    %264 = vector.broadcast %245 : vector<1x32xf32> to vector<16x32xf32>
    %265 = arith.addf %263, %264 : vector<16x32xf32>
    %266 = arith.truncf %265 : vector<16x32xf32> to vector<16x32xbf16>
    %c1_131 = arith.constant 1 : index
    %c0_132 = arith.constant 0 : index
    %c0_133 = arith.constant 0 : index
    %267 = vector.load %arg14[%c1_131, %c0_132, %c0_133] : memref<2x32x2048xbf16, #tpu.memory_space<vmem>>, vector<1x32x2048xbf16>
    %268 = vector.shape_cast %267 : vector<1x32x2048xbf16> to vector<32x2048xbf16>
    %cst_134 = arith.constant dense<0.000000e+00> : vector<16x2048xf32>
    %269 = tpu.matmul %266, %268, %cst_134 {dimension_numbers = #tpu.dot_dimension_numbers<[1], [0], [0], [1], [0, 0, 1, 1], [], []>} : vector<16x32xbf16>, vector<32x2048xbf16>, vector<16x2048xf32> -> vector<16x2048xf32>
    %c1_135 = arith.constant 1 : index
    %c0_136 = arith.constant 0 : index
    %c0_137 = arith.constant 0 : index
    %270 = vector.load %arg15[%c1_135, %c0_136, %c0_137] : memref<2x1x2048xf32, #tpu.memory_space<vmem>>, vector<1x1x2048xf32>
    %271 = vector.shape_cast %270 : vector<1x1x2048xf32> to vector<1x2048xf32>
    %272 = vector.broadcast %271 : vector<1x2048xf32> to vector<16x2048xf32>
    %273 = arith.addf %269, %272 : vector<16x2048xf32>
    %cst_138 = arith.constant 0.000000e+00 : f32
    %274 = vector.broadcast %cst_138 : f32 to vector<16x2048xf32>
    %275 = arith.maximumf %273, %274 : vector<16x2048xf32>
    %276 = arith.truncf %275 : vector<16x2048xf32> to vector<16x2048xbf16>
    %c1_139 = arith.constant 1 : index
    %c0_140 = arith.constant 0 : index
    %c0_141 = arith.constant 0 : index
    %277 = vector.load %arg16[%c1_139, %c0_140, %c0_141] : memref<2x2048x32xbf16, #tpu.memory_space<vmem>>, vector<1x2048x32xbf16>
    %278 = vector.shape_cast %277 : vector<1x2048x32xbf16> to vector<2048x32xbf16>
    %cst_142 = arith.constant dense<0.000000e+00> : vector<16x32xf32>
    %279 = tpu.matmul %276, %278, %cst_142 {dimension_numbers = #tpu.dot_dimension_numbers<[1], [0], [0], [1], [0, 0, 1, 1], [], []>} : vector<16x2048xbf16>, vector<2048x32xbf16>, vector<16x32xf32> -> vector<16x32xf32>
    %c1_143 = arith.constant 1 : index
    %c0_144 = arith.constant 0 : index
    %c0_145 = arith.constant 0 : index
    %280 = vector.load %arg17[%c1_143, %c0_144, %c0_145] : memref<2x1x32xf32, #tpu.memory_space<vmem>>, vector<1x1x32xf32>
    %281 = vector.shape_cast %280 : vector<1x1x32xf32> to vector<1x32xf32>
    %282 = vector.broadcast %281 : vector<1x32xf32> to vector<16x32xf32>
    %283 = arith.addf %279, %282 : vector<16x32xf32>
    %284 = arith.addf %265, %283 : vector<16x32xf32>
    %c1_146 = arith.constant 1 : index
    %c0_147 = arith.constant 0 : index
    %c0_148 = arith.constant 0 : index
    %285 = vector.load %arg12[%c1_146, %c0_147, %c0_148] : memref<2x1x32xf32, #tpu.memory_space<vmem>>, vector<1x1x32xf32>
    %286 = vector.shape_cast %285 : vector<1x1x32xf32> to vector<1x32xf32>
    %c1_149 = arith.constant 1 : index
    %c0_150 = arith.constant 0 : index
    %c0_151 = arith.constant 0 : index
    %287 = vector.load %arg13[%c1_149, %c0_150, %c0_151] : memref<2x1x32xf32, #tpu.memory_space<vmem>>, vector<1x1x32xf32>
    %288 = vector.shape_cast %287 : vector<1x1x32xf32> to vector<1x32xf32>
    %cst_152 = arith.constant dense<0.000000e+00> : vector<16xf32>
    %289 = vector.multi_reduction <add>, %284, %cst_152 [1] : vector<16x32xf32> to vector<16xf32>
    %290 = vector.shape_cast %289 : vector<16xf32> to vector<16x1xf32>
    %cst_153 = arith.constant 3.200000e+01 : f32
    %291 = vector.broadcast %cst_153 : f32 to vector<16x1xf32>
    %292 = arith.divf %290, %291 : vector<16x1xf32>
    %293 = vector.broadcast %292 : vector<16x1xf32> to vector<16x32xf32>
    %294 = arith.subf %284, %293 : vector<16x32xf32>
    %295 = arith.mulf %294, %294 : vector<16x32xf32>
    %cst_154 = arith.constant dense<0.000000e+00> : vector<16xf32>
    %296 = vector.multi_reduction <add>, %295, %cst_154 [1] : vector<16x32xf32> to vector<16xf32>
    %297 = vector.shape_cast %296 : vector<16xf32> to vector<16x1xf32>
    %cst_155 = arith.constant 3.200000e+01 : f32
    %298 = vector.broadcast %cst_155 : f32 to vector<16x1xf32>
    %299 = arith.divf %297, %298 : vector<16x1xf32>
    %cst_156 = arith.constant 9.99999974E-6 : f32
    %300 = vector.broadcast %cst_156 : f32 to vector<16x1xf32>
    %301 = arith.addf %299, %300 : vector<16x1xf32>
    %302 = math.rsqrt %301 : vector<16x1xf32>
    %303 = vector.broadcast %302 : vector<16x1xf32> to vector<16x32xf32>
    %304 = arith.mulf %294, %303 : vector<16x32xf32>
    %305 = vector.broadcast %286 : vector<1x32xf32> to vector<16x32xf32>
    %306 = arith.mulf %304, %305 : vector<16x32xf32>
    %307 = vector.broadcast %288 : vector<1x32xf32> to vector<16x32xf32>
    %308 = arith.addf %306, %307 : vector<16x32xf32>
    %c0_157 = arith.constant 0 : index
    %c0_158 = arith.constant 0 : index
    %309 = vector.load %arg3[%c0_157, %c0_158] : memref<2x16xf32, #tpu.memory_space<vmem>>, vector<2x16xf32>
    %cst_159 = arith.constant dense<0.000000e+00> : vector<2x32xf32>
    %310 = tpu.matmul %309, %308, %cst_159 {dimension_numbers = #tpu.dot_dimension_numbers<[1], [0], [0], [1], [0, 0, 1, 1], [], []>} : vector<2x16xf32>, vector<16x32xf32>, vector<2x32xf32> -> vector<2x32xf32>
    %c0_160 = arith.constant 0 : index
    %c0_161 = arith.constant 0 : index
    %311 = vector.load %arg18[%c0_160, %c0_161] : memref<32x128xf32, #tpu.memory_space<vmem>>, vector<32x128xf32>
    %cst_162 = arith.constant dense<0.000000e+00> : vector<2x128xf32>
    %312 = tpu.matmul %310, %311, %cst_162 {dimension_numbers = #tpu.dot_dimension_numbers<[1], [0], [0], [1], [0, 0, 1, 1], [], []>} : vector<2x32xf32>, vector<32x128xf32>, vector<2x128xf32> -> vector<2x128xf32>
    %c0_163 = arith.constant 0 : index
    %c0_164 = arith.constant 0 : index
    %c0_165 = arith.constant 0 : index
    %313 = vector.load %arg19[%c0_163, %c0_164, %c0_165] : memref<1x2x128xf32, #tpu.memory_space<vmem>>, vector<1x2x128xf32>
    %314 = vector.shape_cast %313 : vector<1x2x128xf32> to vector<2x128xf32>
    %315 = vector.shape_cast %312 : vector<2x128xf32> to vector<1x2x128xf32>
    tpu.vector_store %arg19[%c0_163, %c0_164, %c0_165], %315 {strides = array<i32>} : memref<1x2x128xf32, #tpu.memory_space<vmem>>, vector<1x2x128xf32>,
    return
  }
  func.func @transform_0(%arg0: i32) -> (i32, i32) {
    %c0_i32 = arith.constant 0 : i32
    %c0_i32_0 = arith.constant 0 : i32
    return %arg0, %c0_i32 : i32, i32
  }
  func.func @transform_1(%arg0: i32) -> (i32, i32) {
    %c0_i32 = arith.constant 0 : i32
    %c0_i32_0 = arith.constant 0 : i32
    %c0_i32_1 = arith.constant 0 : i32
    return %c0_i32, %c0_i32_0 : i32, i32
  }
  func.func @transform_2(%arg0: i32) -> (i32, i32) {
    %c0_i32 = arith.constant 0 : i32
    %c0_i32_0 = arith.constant 0 : i32
    %c0_i32_1 = arith.constant 0 : i32
    return %c0_i32, %c0_i32_0 : i32, i32
  }
  func.func @transform_3(%arg0: i32) -> (i32, i32) {
    %c0_i32 = arith.constant 0 : i32
    %c0_i32_0 = arith.constant 0 : i32
    %c0_i32_1 = arith.constant 0 : i32
    return %c0_i32, %c0_i32_0 : i32, i32
  }
  func.func @transform_4(%arg0: i32) -> (i32, i32) {
    %c0_i32 = arith.constant 0 : i32
    %c0_i32_0 = arith.constant 0 : i32
    %c0_i32_1 = arith.constant 0 : i32
    return %c0_i32, %c0_i32_0 : i32, i32
  }
  func.func @transform_5(%arg0: i32) -> (i32, i32, i32) {
    %c0_i32 = arith.constant 0 : i32
    %c0_i32_0 = arith.constant 0 : i32
    %c0_i32_1 = arith.constant 0 : i32
    %c0_i32_2 = arith.constant 0 : i32
    return %c0_i32, %c0_i32_0, %c0_i32_1 : i32, i32, i32
  }
  func.func @transform_6(%arg0: i32) -> (i32, i32, i32) {
    %c0_i32 = arith.constant 0 : i32
    %c0_i32_0 = arith.constant 0 : i32
    %c0_i32_1 = arith.constant 0 : i32
    %c0_i32_2 = arith.constant 0 : i32
    return %c0_i32, %c0_i32_0, %c0_i32_1 : i32, i32, i32
  }
  func.func @transform_7(%arg0: i32) -> (i32, i32, i32) {
    %c0_i32 = arith.constant 0 : i32
    %c0_i32_0 = arith.constant 0 : i32
    %c0_i32_1 = arith.constant 0 : i32
    %c0_i32_2 = arith.constant 0 : i32
    return %c0_i32, %c0_i32_0, %c0_i32_1 : i32, i32, i32
  }
  func.func @transform_8(%arg0: i32) -> (i32, i32, i32) {
    %c0_i32 = arith.constant 0 : i32
    %c0_i32_0 = arith.constant 0 : i32
    %c0_i32_1 = arith.constant 0 : i32
    %c0_i32_2 = arith.constant 0 : i32
    return %c0_i32, %c0_i32_0, %c0_i32_1 : i32, i32, i32
  }
  func.func @transform_9(%arg0: i32) -> (i32, i32, i32) {
    %c0_i32 = arith.constant 0 : i32
    %c0_i32_0 = arith.constant 0 : i32
    %c0_i32_1 = arith.constant 0 : i32
    %c0_i32_2 = arith.constant 0 : i32
    return %c0_i32, %c0_i32_0, %c0_i32_1 : i32, i32, i32
  }
  func.func @transform_10(%arg0: i32) -> (i32, i32, i32) {
    %c0_i32 = arith.constant 0 : i32
    %c0_i32_0 = arith.constant 0 : i32
    %c0_i32_1 = arith.constant 0 : i32
    %c0_i32_2 = arith.constant 0 : i32
    return %c0_i32, %c0_i32_0, %c0_i32_1 : i32, i32, i32
  }
  func.func @transform_11(%arg0: i32) -> (i32, i32, i32) {
    %c0_i32 = arith.constant 0 : i32
    %c0_i32_0 = arith.constant 0 : i32
    %c0_i32_1 = arith.constant 0 : i32
    %c0_i32_2 = arith.constant 0 : i32
    return %c0_i32, %c0_i32_0, %c0_i32_1 : i32, i32, i32
  }
  func.func @transform_12(%arg0: i32) -> (i32, i32, i32) {
    %c0_i32 = arith.constant 0 : i32
    %c0_i32_0 = arith.constant 0 : i32
    %c0_i32_1 = arith.constant 0 : i32
    %c0_i32_2 = arith.constant 0 : i32
    return %c0_i32, %c0_i32_0, %c0_i32_1 : i32, i32, i32
  }
  func.func @transform_13(%arg0: i32) -> (i32, i32, i32) {
    %c0_i32 = arith.constant 0 : i32
    %c0_i32_0 = arith.constant 0 : i32
    %c0_i32_1 = arith.constant 0 : i32
    %c0_i32_2 = arith.constant 0 : i32
    return %c0_i32, %c0_i32_0, %c0_i32_1 : i32, i32, i32
  }
  func.func @transform_14(%arg0: i32) -> (i32, i32, i32) {
    %c0_i32 = arith.constant 0 : i32
    %c0_i32_0 = arith.constant 0 : i32
    %c0_i32_1 = arith.constant 0 : i32
    %c0_i32_2 = arith.constant 0 : i32
    return %c0_i32, %c0_i32_0, %c0_i32_1 : i32, i32, i32
  }
  func.func @transform_15(%arg0: i32) -> (i32, i32, i32) {
    %c0_i32 = arith.constant 0 : i32
    %c0_i32_0 = arith.constant 0 : i32
    %c0_i32_1 = arith.constant 0 : i32
    %c0_i32_2 = arith.constant 0 : i32
    return %c0_i32, %c0_i32_0, %c0_i32_1 : i32, i32, i32
  }
  func.func @transform_16(%arg0: i32) -> (i32, i32, i32) {
    %c0_i32 = arith.constant 0 : i32
    %c0_i32_0 = arith.constant 0 : i32
    %c0_i32_1 = arith.constant 0 : i32
    %c0_i32_2 = arith.constant 0 : i32
    return %c0_i32, %c0_i32_0, %c0_i32_1 : i32, i32, i32
  }
  func.func @transform_17(%arg0: i32) -> (i32, i32) {
    %c0_i32 = arith.constant 0 : i32
    %c0_i32_0 = arith.constant 0 : i32
    %c0_i32_1 = arith.constant 0 : i32
    return %c0_i32, %c0_i32_0 : i32, i32
  }
  func.func @transform_18(%arg0: i32) -> (i32, i32, i32) {
    %c0_i32 = arith.constant 0 : i32
    %c0_i32_0 = arith.constant 0 : i32
    %c0_i32_1 = arith.constant 0 : i32
    return %arg0, %c0_i32, %c0_i32_0 : i32, i32, i32
  }
}

</mosaic_0001>

<llo_original>
// kernel: transformer_classifier_forward.1
$region0: #{transformer_classifier_forward.1}
  #allocation0 [shape = 'u32[]', space=smem, size = 0x4, offset = 0x4, fixed_abs, tag = 'smem constant byte address 0x4 - core index']
  #allocation1 [shape = 'u32[72,128]{1,0:T(1,128)}', space=vmem, size = 0x9000, scoped, tag = 'internal scratch']
  #allocation2 [shape = 'f32[16,32]{1,0:T(8,128)}', space=vmem, size = 0x2000, scoped, tag = 'scratch operand']
  %s0 = inlined_call_operand.vmem [shape: f32[16,32], index: 0, kind: input, shape index: {}]
  %s1 = inlined_call_operand.vmem [shape: f32[16,16], index: 1, kind: input, shape index: {}]
  %s2 = inlined_call_operand.vmem [shape: f32[2,16], index: 2, kind: input, shape index: {}]
  %s3 = inlined_call_operand.vmem [shape: f32[32,32], index: 3, kind: input, shape index: {}]
  %s4 = inlined_call_operand.vmem [shape: f32[1,32], index: 4, kind: input, shape index: {}]
  %s5 = inlined_call_operand.vmem [shape: f32[2,32,96], index: 5, kind: input, shape index: {}]
  %s6 = inlined_call_operand.vmem [shape: f32[2,1,96], index: 6, kind: input, shape index: {}]
  %s7 = inlined_call_operand.vmem [shape: f32[2,32,32], index: 7, kind: input, shape index: {}]
  %s8 = inlined_call_operand.vmem [shape: f32[2,1,32], index: 8, kind: input, shape index: {}]
  %s9 = inlined_call_operand.vmem [shape: f32[2,1,32], index: 9, kind: input, shape index: {}]
  %s10 = inlined_call_operand.vmem [shape: f32[2,1,32], index: 10, kind: input, shape index: {}]
  %s11 = inlined_call_operand.vmem [shape: f32[2,1,32], index: 11, kind: input, shape index: {}]
  %s12 = inlined_call_operand.vmem [shape: f32[2,1,32], index: 12, kind: input, shape index: {}]
  %s13 = inlined_call_operand.vmem [shape: bf16[2,32,2048], index: 13, kind: input, shape index: {}]
  %s14 = inlined_call_operand.vmem [shape: f32[2,1,2048], index: 14, kind: input, shape index: {}]
  %s15 = inlined_call_operand.vmem [shape: bf16[2,2048,32], index: 15, kind: input, shape index: {}]
  %s16 = inlined_call_operand.vmem [shape: f32[2,1,32], index: 16, kind: input, shape index: {}]
  %s17 = inlined_call_operand.vmem [shape: f32[32,128], index: 17, kind: input, shape index: {}]
  %s18 = inlined_call_operand.vmem [shape: f32[1,2,128], index: 18, kind: output, shape index: {}]
  %s19 = sld [smem:[#allocation0]]
  $region82: #{transformer_classifier_forward.1} parent=0
    _
  %s21 = ssub.s32 1, %s19
  %s22 = scalar_select 0, %s21, %s19
  // Predicated region
  $region2: #{transformer_classifier_forward.1} parent=0 // pred_check
    _
  $region3: #{transformer_classifier_forward.1} parent=0 // pred_check_branch
    %24 = sbr.rel (0) target = $region5
  $region4: #{transformer_classifier_forward.1} parent=0 // pred_region
    _
  $region5: #{transformer_classifier_forward.1} parent=0 // pred_fallthru
    _
  // Predicated region
  $region6: #{transformer_classifier_forward.1} parent=0 // pred_check
    _
  $region7: #{transformer_classifier_forward.1} parent=0 // pred_check_branch
    %26 = sbr.rel (0) target = $region9
  $region8: #{transformer_classifier_forward.1} parent=0 // pred_region
    _
  $region9: #{transformer_classifier_forward.1} parent=0 // pred_fallthru
    _
  // Predicated region
  $region10: #{transformer_classifier_forward.1} parent=0 // pred_check
    _
  $region11: #{transformer_classifier_forward.1} parent=0 // pred_check_branch
    %28 = sbr.rel (0) target = $region13
  $region12: #{transformer_classifier_forward.1} parent=0 // pred_region
    _
  $region13: #{transformer_classifier_forward.1} parent=0 // pred_fallthru
    _
  // Predicated region
  $region14: #{transformer_classifier_forward.1} parent=0 // pred_check
    _
  $region15: #{transformer_classifier_forward.1} parent=0 // pred_check_branch
    %30 = sbr.rel (0) target = $region17
  $region16: #{transformer_classifier_forward.1} parent=0 // pred_region
    _
  $region17: #{transformer_classifier_forward.1} parent=0 // pred_fallthru
    _
  // Predicated region
  $region18: #{transformer_classifier_forward.1} parent=0 // pred_check
    _
  $region19: #{transformer_classifier_forward.1} parent=0 // pred_check_branch
    %32 = sbr.rel (0) target = $region21
  $region20: #{transformer_classifier_forward.1} parent=0 // pred_region
    _
  $region21: #{transformer_classifier_forward.1} parent=0 // pred_fallthru
    _
  // Predicated region
  $region22: #{transformer_classifier_forward.1} parent=0 // pred_check
    _
  $region23: #{transformer_classifier_forward.1} parent=0 // pred_check_branch
    %34 = sbr.rel (0) target = $region25
  $region24: #{transformer_classifier_forward.1} parent=0 // pred_region
    _
  $region25: #{transformer_classifier_forward.1} parent=0 // pred_fallthru
    _
  // Predicated region
  $region26: #{transformer_classifier_forward.1} parent=0 // pred_check
    _
  $region27: #{transformer_classifier_forward.1} parent=0 // pred_check_branch
    %36 = sbr.rel (0) target = $region29
  $region28: #{transformer_classifier_forward.1} parent=0 // pred_region
    _
  $region29: #{transformer_classifier_forward.1} parent=0 // pred_fallthru
    _
  // Predicated region
  $region30: #{transformer_classifier_forward.1} parent=0 // pred_check
    _
  $region31: #{transformer_classifier_forward.1} parent=0 // pred_check_branch
    %38 = sbr.rel (0) target = $region33
  $region32: #{transformer_classifier_forward.1} parent=0 // pred_region
    _
  $region33: #{transformer_classifier_forward.1} parent=0 // pred_fallthru
    _
  // Predicated region
  $region34: #{transformer_classifier_forward.1} parent=0 // pred_check
    _
  $region35: #{transformer_classifier_forward.1} parent=0 // pred_check_branch
    %40 = sbr.rel (0) target = $region37
  $region36: #{transformer_classifier_forward.1} parent=0 // pred_region
    _
  $region37: #{transformer_classifier_forward.1} parent=0 // pred_fallthru
    _
  // Predicated region
  $region38: #{transformer_classifier_forward.1} parent=0 // pred_check
    _
  $region39: #{transformer_classifier_forward.1} parent=0 // pred_check_branch
    %42 = sbr.rel (0) target = $region41
  $region40: #{transformer_classifier_forward.1} parent=0 // pred_region
    _
  $region41: #{transformer_classifier_forward.1} parent=0 // pred_fallthru
    _
  // Predicated region
  $region42: #{transformer_classifier_forward.1} parent=0 // pred_check
    _
  $region43: #{transformer_classifier_forward.1} parent=0 // pred_check_branch
    %44 = sbr.rel (0) target = $region45
  $region44: #{transformer_classifier_forward.1} parent=0 // pred_region
    _
  $region45: #{transformer_classifier_forward.1} parent=0 // pred_fallthru
    _
  // Predicated region
  $region46: #{transformer_classifier_forward.1} parent=0 // pred_check
    _
  $region47: #{transformer_classifier_forward.1} parent=0 // pred_check_branch
    %46 = sbr.rel (0) target = $region49
  $region48: #{transformer_classifier_forward.1} parent=0 // pred_region
    _
  $region49: #{transformer_classifier_forward.1} parent=0 // pred_fallthru
    _
  // Predicated region
  $region50: #{transformer_classifier_forward.1} parent=0 // pred_check
    _
  $region51: #{transformer_classifier_forward.1} parent=0 // pred_check_branch
    %48 = sbr.rel (0) target = $region53
  $region52: #{transformer_classifier_forward.1} parent=0 // pred_region
    _
  $region53: #{transformer_classifier_forward.1} parent=0 // pred_fallthru
    _
  // Predicated region
  $region54: #{transformer_classifier_forward.1} parent=0 // pred_check
    _
  $region55: #{transformer_classifier_forward.1} parent=0 // pred_check_branch
    %50 = sbr.rel (0) target = $region57
  $region56: #{transformer_classifier_forward.1} parent=0 // pred_region
    _
  $region57: #{transformer_classifier_forward.1} parent=0 // pred_fallthru
    _
  // Predicated region
  $region58: #{transformer_classifier_forward.1} parent=0 // pred_check
    _
  $region59: #{transformer_classifier_forward.1} parent=0 // pred_check_branch
    %52 = sbr.rel (0) target = $region61
  $region60: #{transformer_classifier_forward.1} parent=0 // pred_region
    _
  $region61: #{transformer_classifier_forward.1} parent=0 // pred_fallthru
    _
  // Predicated region
  $region62: #{transformer_classifier_forward.1} parent=0 // pred_check
    _
  $region63: #{transformer_classifier_forward.1} parent=0 // pred_check_branch
    %54 = sbr.rel (0) target = $region65
  $region64: #{transformer_classifier_forward.1} parent=0 // pred_region
    _
  $region65: #{transformer_classifier_forward.1} parent=0 // pred_fallthru
    _
  // Predicated region
  $region66: #{transformer_classifier_forward.1} parent=0 // pred_check
    _
  $region67: #{transformer_classifier_forward.1} parent=0 // pred_check_branch
    %56 = sbr.rel (0) target = $region69
  $region68: #{transformer_classifier_forward.1} parent=0 // pred_region
    _
  $region69: #{transformer_classifier_forward.1} parent=0 // pred_fallthru
    _
  // Predicated region
  $region70: #{transformer_classifier_forward.1} parent=0 // pred_check
    _
  $region71: #{transformer_classifier_forward.1} parent=0 // pred_check_branch
    %58 = sbr.rel (0) target = $region73
  $region72: #{transformer_classifier_forward.1} parent=0 // pred_region
    _
  $region73: #{transformer_classifier_forward.1} parent=0 // pred_fallthru
    _
  %v60 = vld [vmem:[%s1] sm:$0xff]
  %v61 = vld [vmem:[%s1 + $0x8] sm:$0xff]
  %v62 = vld [vmem:[%s0] sm:$0xff]
  %v63 = vld [vmem:[%s0 + $0x8] sm:$0xff]
  %v64 = vld [vmem:[%s3] sm:$0xff]
  %v65 = vld [vmem:[%s3 + $0x8] sm:$0xff]
  %v66 = vld [vmem:[%s3 + $0x10] sm:$0xff]
  %v67 = vld [vmem:[%s3 + $0x18] sm:$0xff]
  %v68 = vld [vmem:[%s4] sm:$0x1]
  %v70 = vperm.slane %v68, 0
  %vm72 = vcmask 261120
  %v74 = vsel %vm72, %v62, 0
  %v77 = vsel %vm72, %v63, 0
  %79 = vmatpush.msra.mxu0 0.0
  %80 = vmatpush.msra.mxu0 0.0
  %81 = vmatpush.msra.mxu0 0.0
  %82 = vmatpush.msra.mxu0 0.0
  %83 = vmatpush.msra.mxu0 0.0
  %84 = vmatpush.msra.mxu0 0.0
  %85 = vmatpush.msra.mxu0 0.0
  %86 = vmatpush.msra.mxu0 0.0
  %87 = vmatpush.msra.mxu0 0.0
  %88 = vmatpush.msra.mxu0 0.0
  %89 = vmatpush.msra.mxu0 0.0
  %90 = vmatpush.msra.mxu0 0.0
  %91 = vmatpush.msra.mxu0 %v67
  %92 = vmatpush.msra.mxu0 %v66
  %93 = vmatpush.msra.mxu0 %v65
  %94 = vmatpush.msra.mxu0 %v64
  %95 = vmatmul.f32.gmra.mxu0 %v74
  %v96 = vpop.f32.mrf.mxu0
  %v97 = vadd.f32 %v70, %v96
  %98 = vmatmul.f32.gmra.mxu0 %v77
  %v99 = vpop.f32.mrf.mxu0
  %v100 = vadd.f32 %v70, %v99
  %101 = vdwg.mxu0
  %v102 = vld [vmem:[%s5] sm:$0xff]
  %v103 = vld [vmem:[%s5 + $0x8] sm:$0xff]
  %v104 = vld [vmem:[%s5 + $0x10] sm:$0xff]
  %v105 = vld [vmem:[%s5 + $0x18] sm:$0xff]
  %v106 = vld [vmem:[%s6] sm:$0x1]
  %v108 = vperm.slane %v106, 0
  %v111 = vsel %vm72, %v97, 0
  %v114 = vsel %vm72, %v100, 0
  %116 = vmatpush.msra.mxu0 0.0
  %117 = vmatpush.msra.mxu0 0.0
  %118 = vmatpush.msra.mxu0 0.0
  %119 = vmatpush.msra.mxu0 0.0
  %120 = vmatpush.msra.mxu0 0.0
  %121 = vmatpush.msra.mxu0 0.0
  %122 = vmatpush.msra.mxu0 0.0
  %123 = vmatpush.msra.mxu0 0.0
  %124 = vmatpush.msra.mxu0 0.0
  %125 = vmatpush.msra.mxu0 0.0
  %126 = vmatpush.msra.mxu0 0.0
  %127 = vmatpush.msra.mxu0 0.0
  %128 = vmatpush.msra.mxu0 %v105
  %129 = vmatpush.msra.mxu0 %v104
  %130 = vmatpush.msra.mxu0 %v103
  %131 = vmatpush.msra.mxu0 %v102
  %132 = vmatmul.f32.gmra.mxu0 %v111
  %v133 = vpop.f32.mrf.mxu0
  %v134 = vadd.f32 %v108, %v133
  %135 = vmatmul.f32.gmra.mxu0 %v114
  %v136 = vpop.f32.mrf.mxu0
  %v137 = vadd.f32 %v108, %v136
  %138 = vdwg.mxu0
  %141 = vrot.lane.b32.xlu0 %v134, 96
  %v142 = vpop.permute.xlu0 %141
  %143 = vrot.lane.b32.xlu0 %v137, 96
  %v144 = vpop.permute.xlu0 %143
  %vm145 = vcmask 64512
  %v146 = vsel %vm145, %v134, 0
  %v148 = vsel %vm145, %v137, 0
  %v150 = vsel %vm145, %v142, 0
  %v152 = vsel %vm145, %v144, 0
  %154 = vmatpush.xpose.msra.mxu0 0.0
  %155 = vmatpush.xpose.msra.mxu0 0.0
  %156 = vmatpush.xpose.msra.mxu0 0.0
  %157 = vmatpush.xpose.msra.mxu0 0.0
  %158 = vmatpush.xpose.msra.mxu0 0.0
  %159 = vmatpush.xpose.msra.mxu0 0.0
  %160 = vmatpush.xpose.msra.mxu0 0.0
  %161 = vmatpush.xpose.msra.mxu0 0.0
  %162 = vmatpush.xpose.msra.mxu0 0.0
  %163 = vmatpush.xpose.msra.mxu0 0.0
  %164 = vmatpush.xpose.msra.mxu0 0.0
  %165 = vmatpush.xpose.msra.mxu0 0.0
  %166 = vmatpush.xpose.msra.mxu0 0.0
  %167 = vmatpush.xpose.msra.mxu0 0.0
  %168 = vmatpush.xpose.msra.mxu0 %v152
  %169 = vmatpush.xpose.msra.mxu0 %v150
  %170 = vmatmul.f32.gmra.mxu0 %v146
  %v171 = vpop.f32.mrf.mxu0
  %v172 = vadd.f32 %v60, %v171
  %173 = vmatmul.f32.gmra.mxu0 %v148
  %v174 = vpop.f32.mrf.mxu0
  %v175 = vadd.f32 %v61, %v174
  %176 = vdwg.mxu0
  %vm177 = vcmask 130048
  %v178 = vsel %vm177, %v172, -inf
  %179 = vmax.xlane.f32.xlu0 %v178
  %v180 = vpop.xlane.xlu0 %179
  %v181 = vsel %vm177, %v175, -inf
  %182 = vmax.xlane.f32.xlu0 %v181
  %v183 = vpop.xlane.xlu0 %182
  %v184 = vsub.f32 %v172, %v180
  %v185 = vsub.f32 %v175, %v183
  %v186 = vmul.f32 %v184, 1.442695
  %v187 = vpow.pop %v186
  %v188 = vmul.f32 %v185, 1.442695
  %v189 = vpow.pop %v188
  %v190 = vsel %vm177, %v187, 0.0
  %191 = vadd.xlane.f32.xlu0 %v190
  %v192 = vpop.xlane.xlu0 %191
  %v193 = vsel %vm177, %v189, 0.0
  %194 = vadd.xlane.f32.xlu0 %v193
  %v195 = vpop.xlane.xlu0 %194
  %v196 = vrcp.pop %v192
  %v197 = vrcp.pop %v195
  %v198 = vmul.f32 %v187, %v196
  %v199 = vmul.f32 %v189, %v197
  %200 = vrot.lane.b32.xlu0 %v134, 64
  %v201 = vpop.permute.xlu0 %200
  %202 = vrot.lane.b32.xlu0 %v137, 64
  %v203 = vpop.permute.xlu0 %202
  %v207 = vsel %vm177, %v198, 0
  %v210 = vsel %vm177, %v199, 0
  %212 = vmatpush.msra.mxu0 0.0
  %213 = vmatpush.msra.mxu0 0.0
  %214 = vmatpush.msra.mxu0 0.0
  %215 = vmatpush.msra.mxu0 0.0
  %216 = vmatpush.msra.mxu0 0.0
  %217 = vmatpush.msra.mxu0 0.0
  %218 = vmatpush.msra.mxu0 0.0
  %219 = vmatpush.msra.mxu0 0.0
  %220 = vmatpush.msra.mxu0 0.0
  %221 = vmatpush.msra.mxu0 0.0
  %222 = vmatpush.msra.mxu0 0.0
  %223 = vmatpush.msra.mxu0 0.0
  %224 = vmatpush.msra.mxu0 0.0
  %225 = vmatpush.msra.mxu0 0.0
  %226 = vmatpush.msra.mxu0 %v203
  %227 = vmatpush.msra.mxu0 %v201
  %228 = vmatmul.f32.gmra.mxu0 %v207
  %v229 = vpop.f32.mrf.mxu0
  %v230 = vadd.f32 0.0, %v229
  %231 = vmatmul.f32.gmra.mxu0 %v210
  %v232 = vpop.f32.mrf.mxu0
  %v233 = vadd.f32 0.0, %v232
  %234 = vdwg.mxu0
  %235 = vst.msk [vmem:[#allocation2] sm:$0xff] %vm145, %v230
  %236 = vst.msk [vmem:[#allocation2 + $0x8] sm:$0xff] %vm145, %v233
  %237 = vrot.lane.b32.xlu0 %v134, 120
  %v238 = vpop.permute.xlu0 %237
  %239 = vrot.lane.b32.xlu0 %v137, 120
  %v240 = vpop.permute.xlu0 %239
  %241 = vrot.lane.b32.xlu0 %v134, 88
  %v242 = vpop.permute.xlu0 %241
  %243 = vrot.lane.b32.xlu0 %v137, 88
  %v244 = vpop.permute.xlu0 %243
  %v245 = vsel %vm145, %v238, 0
  %v247 = vsel %vm145, %v240, 0
  %v249 = vsel %vm145, %v242, 0
  %v251 = vsel %vm145, %v244, 0
  %253 = vmatpush.xpose.msra.mxu0 0.0
  %254 = vmatpush.xpose.msra.mxu0 0.0
  %255 = vmatpush.xpose.msra.mxu0 0.0
  %256 = vmatpush.xpose.msra.mxu0 0.0
  %257 = vmatpush.xpose.msra.mxu0 0.0
  %258 = vmatpush.xpose.msra.mxu0 0.0
  %259 = vmatpush.xpose.msra.mxu0 0.0
  %260 = vmatpush.xpose.msra.mxu0 0.0
  %261 = vmatpush.xpose.msra.mxu0 0.0
  %262 = vmatpush.xpose.msra.mxu0 0.0
  %263 = vmatpush.xpose.msra.mxu0 0.0
  %264 = vmatpush.xpose.msra.mxu0 0.0
  %265 = vmatpush.xpose.msra.mxu0 0.0
  %266 = vmatpush.xpose.msra.mxu0 0.0
  %267 = vmatpush.xpose.msra.mxu0 %v251
  %268 = vmatpush.xpose.msra.mxu0 %v249
  %269 = vmatmul.f32.gmra.mxu0 %v245
  %v270 = vpop.f32.mrf.mxu0
  %v271 = vadd.f32 %v60, %v270
  %272 = vmatmul.f32.gmra.mxu0 %v247
  %v273 = vpop.f32.mrf.mxu0
  %v274 = vadd.f32 %v61, %v273
  %275 = vdwg.mxu0
  %v276 = vsel %vm177, %v271, -inf
  %277 = vmax.xlane.f32.xlu0 %v276
  %v278 = vpop.xlane.xlu0 %277
  %v279 = vsel %vm177, %v274, -inf
  %280 = vmax.xlane.f32.xlu0 %v279
  %v281 = vpop.xlane.xlu0 %280
  %v282 = vsub.f32 %v271, %v278
  %v283 = vsub.f32 %v274, %v281
  %v284 = vmul.f32 %v282, 1.442695
  %v285 = vpow.pop %v284
  %v286 = vmul.f32 %v283, 1.442695
  %v287 = vpow.pop %v286
  %v288 = vsel %vm177, %v285, 0.0
  %289 = vadd.xlane.f32.xlu0 %v288
  %v290 = vpop.xlane.xlu0 %289
  %v291 = vsel %vm177, %v287, 0.0
  %292 = vadd.xlane.f32.xlu0 %v291
  %v293 = vpop.xlane.xlu0 %292
  %v294 = vrcp.pop %v290
  %v295 = vrcp.pop %v293
  %v296 = vmul.f32 %v285, %v294
  %v297 = vmul.f32 %v287, %v295
  %298 = vrot.lane.b32.xlu0 %v134, 56
  %v299 = vpop.permute.xlu0 %298
  %300 = vrot.lane.b32.xlu0 %v137, 56
  %v301 = vpop.permute.xlu0 %300
  %v305 = vsel %vm177, %v296, 0
  %v308 = vsel %vm177, %v297, 0
  %310 = vmatpush.msra.mxu0 0.0
  %311 = vmatpush.msra.mxu0 0.0
  %312 = vmatpush.msra.mxu0 0.0
  %313 = vmatpush.msra.mxu0 0.0
  %314 = vmatpush.msra.mxu0 0.0
  %315 = vmatpush.msra.mxu0 0.0
  %316 = vmatpush.msra.mxu0 0.0
  %317 = vmatpush.msra.mxu0 0.0
  %318 = vmatpush.msra.mxu0 0.0
  %319 = vmatpush.msra.mxu0 0.0
  %320 = vmatpush.msra.mxu0 0.0
  %321 = vmatpush.msra.mxu0 0.0
  %322 = vmatpush.msra.mxu0 0.0
  %323 = vmatpush.msra.mxu0 0.0
  %324 = vmatpush.msra.mxu0 %v301
  %325 = vmatpush.msra.mxu0 %v299
  %326 = vmatmul.f32.gmra.mxu0 %v305
  %v327 = vpop.f32.mrf.mxu0
  %v328 = vadd.f32 0.0, %v327
  %329 = vmatmul.f32.gmra.mxu0 %v308
  %v330 = vpop.f32.mrf.mxu0
  %v331 = vadd.f32 0.0, %v330
  %332 = vdwg.mxu0
  %335 = vrot.lane.b32.xlu0 %v328, 8
  %v336 = vpop.permute.xlu0 %335
  %337 = vrot.lane.b32.xlu0 %v331, 8
  %v338 = vpop.permute.xlu0 %337
  %vm341 = vcmask 130112
  %342 = vst.msk [vmem:[#allocation2] sm:$0xff] %vm341, %v336
  %343 = vst.msk [vmem:[#allocation2 + $0x8] sm:$0xff] %vm341, %v338
  %344 = vrot.lane.b32.xlu0 %v134, 112
  %v345 = vpop.permute.xlu0 %344
  %346 = vrot.lane.b32.xlu0 %v137, 112
  %v347 = vpop.permute.xlu0 %346
  %348 = vrot.lane.b32.xlu0 %v134, 80
  %v349 = vpop.permute.xlu0 %348
  %350 = vrot.lane.b32.xlu0 %v137, 80
  %v351 = vpop.permute.xlu0 %350
  %v352 = vsel %vm145, %v345, 0
  %v354 = vsel %vm145, %v347, 0
  %v356 = vsel %vm145, %v349, 0
  %v358 = vsel %vm145, %v351, 0
  %360 = vmatpush.xpose.msra.mxu0 0.0
  %361 = vmatpush.xpose.msra.mxu0 0.0
  %362 = vmatpush.xpose.msra.mxu0 0.0
  %363 = vmatpush.xpose.msra.mxu0 0.0
  %364 = vmatpush.xpose.msra.mxu0 0.0
  %365 = vmatpush.xpose.msra.mxu0 0.0
  %366 = vmatpush.xpose.msra.mxu0 0.0
  %367 = vmatpush.xpose.msra.mxu0 0.0
  %368 = vmatpush.xpose.msra.mxu0 0.0
  %369 = vmatpush.xpose.msra.mxu0 0.0
  %370 = vmatpush.xpose.msra.mxu0 0.0
  %371 = vmatpush.xpose.msra.mxu0 0.0
  %372 = vmatpush.xpose.msra.mxu0 0.0
  %373 = vmatpush.xpose.msra.mxu0 0.0
  %374 = vmatpush.xpose.msra.mxu0 %v358
  %375 = vmatpush.xpose.msra.mxu0 %v356
  %376 = vmatmul.f32.gmra.mxu0 %v352
  %v377 = vpop.f32.mrf.mxu0
  %v378 = vadd.f32 %v60, %v377
  %379 = vmatmul.f32.gmra.mxu0 %v354
  %v380 = vpop.f32.mrf.mxu0
  %v381 = vadd.f32 %v61, %v380
  %382 = vdwg.mxu0
  %v383 = vsel %vm177, %v378, -inf
  %384 = vmax.xlane.f32.xlu0 %v383
  %v385 = vpop.xlane.xlu0 %384
  %v386 = vsel %vm177, %v381, -inf
  %387 = vmax.xlane.f32.xlu0 %v386
  %v388 = vpop.xlane.xlu0 %387
  %v389 = vsub.f32 %v378, %v385
  %v390 = vsub.f32 %v381, %v388
  %v391 = vmul.f32 %v389, 1.442695
  %v392 = vpow.pop %v391
  %v393 = vmul.f32 %v390, 1.442695
  %v394 = vpow.pop %v393
  %v395 = vsel %vm177, %v392, 0.0
  %396 = vadd.xlane.f32.xlu0 %v395
  %v397 = vpop.xlane.xlu0 %396
  %v398 = vsel %vm177, %v394, 0.0
  %399 = vadd.xlane.f32.xlu0 %v398
  %v400 = vpop.xlane.xlu0 %399
  %v401 = vrcp.pop %v397
  %v402 = vrcp.pop %v400
  %v403 = vmul.f32 %v392, %v401
  %v404 = vmul.f32 %v394, %v402
  %405 = vrot.lane.b32.xlu0 %v134, 48
  %v406 = vpop.permute.xlu0 %405
  %407 = vrot.lane.b32.xlu0 %v137, 48
  %v408 = vpop.permute.xlu0 %407
  %v412 = vsel %vm177, %v403, 0
  %v415 = vsel %vm177, %v404, 0
  %417 = vmatpush.msra.mxu0 0.0
  %418 = vmatpush.msra.mxu0 0.0
  %419 = vmatpush.msra.mxu0 0.0
  %420 = vmatpush.msra.mxu0 0.0
  %421 = vmatpush.msra.mxu0 0.0
  %422 = vmatpush.msra.mxu0 0.0
  %423 = vmatpush.msra.mxu0 0.0
  %424 = vmatpush.msra.mxu0 0.0
  %425 = vmatpush.msra.mxu0 0.0
  %426 = vmatpush.msra.mxu0 0.0
  %427 = vmatpush.msra.mxu0 0.0
  %428 = vmatpush.msra.mxu0 0.0
  %429 = vmatpush.msra.mxu0 0.0
  %430 = vmatpush.msra.mxu0 0.0
  %431 = vmatpush.msra.mxu0 %v408
  %432 = vmatpush.msra.mxu0 %v406
  %433 = vmatmul.f32.gmra.mxu0 %v412
  %v434 = vpop.f32.mrf.mxu0
  %v435 = vadd.f32 0.0, %v434
  %436 = vmatmul.f32.gmra.mxu0 %v415
  %v437 = vpop.f32.mrf.mxu0
  %v438 = vadd.f32 0.0, %v437
  %439 = vdwg.mxu0
  %442 = vrot.lane.b32.xlu0 %v435, 16
  %v443 = vpop.permute.xlu0 %442
  %444 = vrot.lane.b32.xlu0 %v438, 16
  %v445 = vpop.permute.xlu0 %444
  %vm448 = vcmask 195712
  %449 = vst.msk [vmem:[#allocation2] sm:$0xff] %vm448, %v443
  %450 = vst.msk [vmem:[#allocation2 + $0x8] sm:$0xff] %vm448, %v445
  %451 = vrot.lane.b32.xlu0 %v134, 104
  %v452 = vpop.permute.xlu0 %451
  %453 = vrot.lane.b32.xlu0 %v137, 104
  %v454 = vpop.permute.xlu0 %453
  %455 = vrot.lane.b32.xlu0 %v134, 72
  %v456 = vpop.permute.xlu0 %455
  %457 = vrot.lane.b32.xlu0 %v137, 72
  %v458 = vpop.permute.xlu0 %457
  %v459 = vsel %vm145, %v452, 0
  %v461 = vsel %vm145, %v454, 0
  %v463 = vsel %vm145, %v456, 0
  %v465 = vsel %vm145, %v458, 0
  %467 = vmatpush.xpose.msra.mxu0 0.0
  %468 = vmatpush.xpose.msra.mxu0 0.0
  %469 = vmatpush.xpose.msra.mxu0 0.0
  %470 = vmatpush.xpose.msra.mxu0 0.0
  %471 = vmatpush.xpose.msra.mxu0 0.0
  %472 = vmatpush.xpose.msra.mxu0 0.0
  %473 = vmatpush.xpose.msra.mxu0 0.0
  %474 = vmatpush.xpose.msra.mxu0 0.0
  %475 = vmatpush.xpose.msra.mxu0 0.0
  %476 = vmatpush.xpose.msra.mxu0 0.0
  %477 = vmatpush.xpose.msra.mxu0 0.0
  %478 = vmatpush.xpose.msra.mxu0 0.0
  %479 = vmatpush.xpose.msra.mxu0 0.0
  %480 = vmatpush.xpose.msra.mxu0 0.0
  %481 = vmatpush.xpose.msra.mxu0 %v465
  %482 = vmatpush.xpose.msra.mxu0 %v463
  %483 = vmatmul.f32.gmra.mxu0 %v459
  %v484 = vpop.f32.mrf.mxu0
  %v485 = vadd.f32 %v60, %v484
  %486 = vmatmul.f32.gmra.mxu0 %v461
  %v487 = vpop.f32.mrf.mxu0
  %v488 = vadd.f32 %v61, %v487
  %489 = vdwg.mxu0
  %v490 = vsel %vm177, %v485, -inf
  %491 = vmax.xlane.f32.xlu0 %v490
  %v492 = vpop.xlane.xlu0 %491
  %v493 = vsel %vm177, %v488, -inf
  %494 = vmax.xlane.f32.xlu0 %v493
  %v495 = vpop.xlane.xlu0 %494
  %v496 = vsub.f32 %v485, %v492
  %v497 = vsub.f32 %v488, %v495
  %v498 = vmul.f32 %v496, 1.442695
  %v499 = vpow.pop %v498
  %v500 = vmul.f32 %v497, 1.442695
  %v501 = vpow.pop %v500
  %v502 = vsel %vm177, %v499, 0.0
  %503 = vadd.xlane.f32.xlu0 %v502
  %v504 = vpop.xlane.xlu0 %503
  %v505 = vsel %vm177, %v501, 0.0
  %506 = vadd.xlane.f32.xlu0 %v505
  %v507 = vpop.xlane.xlu0 %506
  %v508 = vrcp.pop %v504
  %v509 = vrcp.pop %v507
  %v510 = vmul.f32 %v499, %v508
  %v511 = vmul.f32 %v501, %v509
  %512 = vrot.lane.b32.xlu0 %v134, 40
  %v513 = vpop.permute.xlu0 %512
  %514 = vrot.lane.b32.xlu0 %v137, 40
  %v515 = vpop.permute.xlu0 %514
  %v519 = vsel %vm177, %v510, 0
  %v522 = vsel %vm177, %v511, 0
  %524 = vmatpush.msra.mxu0 0.0
  %525 = vmatpush.msra.mxu0 0.0
  %526 = vmatpush.msra.mxu0 0.0
  %527 = vmatpush.msra.mxu0 0.0
  %528 = vmatpush.msra.mxu0 0.0
  %529 = vmatpush.msra.mxu0 0.0
  %530 = vmatpush.msra.mxu0 0.0
  %531 = vmatpush.msra.mxu0 0.0
  %532 = vmatpush.msra.mxu0 0.0
  %533 = vmatpush.msra.mxu0 0.0
  %534 = vmatpush.msra.mxu0 0.0
  %535 = vmatpush.msra.mxu0 0.0
  %536 = vmatpush.msra.mxu0 0.0
  %537 = vmatpush.msra.mxu0 0.0
  %538 = vmatpush.msra.mxu0 %v515
  %539 = vmatpush.msra.mxu0 %v513
  %540 = vmatmul.f32.gmra.mxu0 %v519
  %v541 = vpop.f32.mrf.mxu0
  %v542 = vadd.f32 0.0, %v541
  %543 = vmatmul.f32.gmra.mxu0 %v522
  %v544 = vpop.f32.mrf.mxu0
  %v545 = vadd.f32 0.0, %v544
  %546 = vdwg.mxu0
  %549 = vrot.lane.b32.xlu0 %v542, 24
  %v550 = vpop.permute.xlu0 %549
  %551 = vrot.lane.b32.xlu0 %v545, 24
  %v552 = vpop.permute.xlu0 %551
  %vm555 = vcmask 261312
  %556 = vst.msk [vmem:[#allocation2] sm:$0xff] %vm555, %v550
  %557 = vst.msk [vmem:[#allocation2 + $0x8] sm:$0xff] %vm555, %v552
  %v558 = vld [vmem:[#allocation2] sm:$0xff]
  %v559 = vld [vmem:[#allocation2 + $0x8] sm:$0xff]
  %v560 = vld [vmem:[%s7] sm:$0xff]
  %v561 = vld [vmem:[%s7 + $0x8] sm:$0xff]
  %v562 = vld [vmem:[%s7 + $0x10] sm:$0xff]
  %v563 = vld [vmem:[%s7 + $0x18] sm:$0xff]
  %v564 = vld [vmem:[%s8] sm:$0x1]
  %v566 = vperm.slane %v564, 0
  %v569 = vsel %vm72, %v558, 0
  %v572 = vsel %vm72, %v559, 0
  %574 = vmatpush.msra.mxu0 0.0
  %575 = vmatpush.msra.mxu0 0.0
  %576 = vmatpush.msra.mxu0 0.0
  %577 = vmatpush.msra.mxu0 0.0
  %578 = vmatpush.msra.mxu0 0.0
  %579 = vmatpush.msra.mxu0 0.0
  %580 = vmatpush.msra.mxu0 0.0
  %581 = vmatpush.msra.mxu0 0.0
  %582 = vmatpush.msra.mxu0 0.0
  %583 = vmatpush.msra.mxu0 0.0
  %584 = vmatpush.msra.mxu0 0.0
  %585 = vmatpush.msra.mxu0 0.0
  %586 = vmatpush.msra.mxu0 %v563
  %587 = vmatpush.msra.mxu0 %v562
  %588 = vmatpush.msra.mxu0 %v561
  %589 = vmatpush.msra.mxu0 %v560
  %590 = vmatmul.f32.gmra.mxu0 %v569
  %v591 = vpop.f32.mrf.mxu0
  %v592 = vadd.f32 %v566, %v591
  %593 = vmatmul.f32.gmra.mxu0 %v572
  %v594 = vpop.f32.mrf.mxu0
  %v595 = vadd.f32 %v566, %v594
  %596 = vdwg.mxu0
  %v597 = vadd.f32 %v97, %v592
  %v598 = vadd.f32 %v100, %v595
  %v599 = vld [vmem:[%s9] sm:$0x1]
  %v600 = vld [vmem:[%s10] sm:$0x1]
  %v601 = vsel %vm72, %v597, 0.0
  %602 = vadd.xlane.f32.xlu0 %v601
  %v603 = vpop.xlane.xlu0 %602
  %v604 = vsel %vm72, %v598, 0.0
  %605 = vadd.xlane.f32.xlu0 %v604
  %v606 = vpop.xlane.xlu0 %605
  %v607 = vrcp.pop 32.0
  %v608 = vmul.f32 32.0, %v607
  %v609 = vsub.f32 1.0, %v608
  %v610 = vmul.f32 %v607, %v609
  %v611 = vadd.f32 %v607, %v610
  %vm612 = vweird.f32 %v607
  %v613 = vsel %vm612, %v607, %v611
  %v614 = vmul.f32 %v603, %v613
  %v615 = vmul.f32 %v606, %v613
  %v616 = vsub.f32 %v597, %v614
  %v617 = vsub.f32 %v598, %v615
  %v618 = vmul.f32 %v616, %v616
  %v619 = vmul.f32 %v617, %v617
  %v620 = vsel %vm72, %v618, 0.0
  %621 = vadd.xlane.f32.xlu0 %v620
  %v622 = vpop.xlane.xlu0 %621
  %v623 = vsel %vm72, %v619, 0.0
  %624 = vadd.xlane.f32.xlu0 %v623
  %v625 = vpop.xlane.xlu0 %624
  %v626 = vmul.f32 %v622, %v613
  %v627 = vmul.f32 %v625, %v613
  %v628 = vadd.f32 %v626, 1e-05
  %v629 = vadd.f32 %v627, 1e-05
  %v630 = vrsqrt.pop %v628
  %v631 = vmul.f32 %v630, %v628
  %v632 = vmul.f32 %v631, %v630
  %v633 = vmul.f32 0.5, %v632
  %v634 = vsub.f32 1.5, %v633
  %v635 = vmul.f32 %v630, %v634
  %vm636 = vweird.f32 %v628
  %vm637 = vweird.f32 %v630
  %vm638 = vmor %vm636, %vm637
  %v639 = vsel %vm638, %v630, %v635
  %v640 = vrsqrt.pop %v629
  %v641 = vmul.f32 %v640, %v629
  %v642 = vmul.f32 %v641, %v640
  %v643 = vmul.f32 0.5, %v642
  %v644 = vsub.f32 1.5, %v643
  %v645 = vmul.f32 %v640, %v644
  %vm646 = vweird.f32 %v629
  %vm647 = vweird.f32 %v640
  %vm648 = vmor %vm646, %vm647
  %v649 = vsel %vm648, %v640, %v645
  %v650 = vmul.f32 %v616, %v639
  %v651 = vmul.f32 %v617, %v649
  %v653 = vperm.slane %v599, 0
  %v655 = vmul.f32 %v650, %v653
  %v656 = vmul.f32 %v651, %v653
  %v658 = vperm.slane %v600, 0
  %v660 = vadd.f32 %v655, %v658
  %v661 = vadd.f32 %v656, %v658
  %v662 = vpack.c.bf16 %v661, %v660
  %v663 = vld [vmem:[%s13] sm:$0xff]
  %v664 = vld [vmem:[%s13 + $0x8] sm:$0xff]
  %v665 = vld [vmem:[%s13 + $0x10] sm:$0xff]
  %v666 = vld [vmem:[%s13 + $0x18] sm:$0xff]
  %v667 = vld [vmem:[%s13 + $0x20] sm:$0xff]
  %v668 = vld [vmem:[%s13 + $0x28] sm:$0xff]
  %v669 = vld [vmem:[%s13 + $0x30] sm:$0xff]
  %v670 = vld [vmem:[%s13 + $0x38] sm:$0xff]
  %v671 = vld [vmem:[%s13 + $0x40] sm:$0xff]
  %v672 = vld [vmem:[%s13 + $0x48] sm:$0xff]
  %v673 = vld [vmem:[%s13 + $0x50] sm:$0xff]
  %v674 = vld [vmem:[%s13 + $0x58] sm:$0xff]
  %v675 = vld [vmem:[%s13 + $0x60] sm:$0xff]
  %v676 = vld [vmem:[%s13 + $0x68] sm:$0xff]
  %v677 = vld [vmem:[%s13 + $0x70] sm:$0xff]
  %v678 = vld [vmem:[%s13 + $0x78] sm:$0xff]
  %v679 = vld [vmem:[%s13 + $0x80] sm:$0xff]
  %v680 = vld [vmem:[%s13 + $0x88] sm:$0xff]
  %v681 = vld [vmem:[%s13 + $0x90] sm:$0xff]
  %v682 = vld [vmem:[%s13 + $0x98] sm:$0xff]
  %v683 = vld [vmem:[%s13 + $0xa0] sm:$0xff]
  %v684 = vld [vmem:[%s13 + $0xa8] sm:$0xff]
  %v685 = vld [vmem:[%s13 + $0xb0] sm:$0xff]
  %v686 = vld [vmem:[%s13 + $0xb8] sm:$0xff]
  %v687 = vld [vmem:[%s13 + $0xc0] sm:$0xff]
  %v688 = vld [vmem:[%s13 + $0xc8] sm:$0xff]
  %v689 = vld [vmem:[%s13 + $0xd0] sm:$0xff]
  %v690 = vld [vmem:[%s13 + $0xd8] sm:$0xff]
  %v691 = vld [vmem:[%s13 + $0xe0] sm:$0xff]
  %v692 = vld [vmem:[%s13 + $0xe8] sm:$0xff]
  %v693 = vld [vmem:[%s13 + $0xf0] sm:$0xff]
  %v694 = vld [vmem:[%s13 + $0xf8] sm:$0xff]
  %v695 = vld [vmem:[%s14] sm:$0xff]
  %v696 = vld [vmem:[%s14 + $0x8] sm:$0xff]
  %v699 = vperm.slane %v695, 0
  %v700 = vperm.slane %v695, 1
  %v701 = vperm.slane %v695, 2
  %v702 = vperm.slane %v695, 3
  %v703 = vperm.slane %v695, 4
  %v704 = vperm.slane %v695, 5
  %v705 = vperm.slane %v695, 6
  %v706 = vperm.slane %v695, 7
  %v707 = vperm.slane %v696, 0
  %v708 = vperm.slane %v696, 1
  %v709 = vperm.slane %v696, 2
  %v710 = vperm.slane %v696, 3
  %v711 = vperm.slane %v696, 4
  %v712 = vperm.slane %v696, 5
  %v713 = vperm.slane %v696, 6
  %v714 = vperm.slane %v696, 7
  %v763 = vunpack.c.l.b16 %v663
  %v764 = vunpack.c.h.b16 %v663
  %v765 = vunpack.c.l.b16 %v664
  %v766 = vunpack.c.h.b16 %v664
  %v767 = vunpack.c.l.b16 %v665
  %v768 = vunpack.c.h.b16 %v665
  %v769 = vunpack.c.l.b16 %v666
  %v770 = vunpack.c.h.b16 %v666
  %v771 = vunpack.c.l.b16 %v667
  %v772 = vunpack.c.h.b16 %v667
  %v773 = vunpack.c.l.b16 %v668
  %v774 = vunpack.c.h.b16 %v668
  %v775 = vunpack.c.l.b16 %v669
  %v776 = vunpack.c.h.b16 %v669
  %v777 = vunpack.c.l.b16 %v670
  %v778 = vunpack.c.h.b16 %v670
  %v779 = vunpack.c.l.b16 %v671
  %v780 = vunpack.c.h.b16 %v671
  %v781 = vunpack.c.l.b16 %v672
  %v782 = vunpack.c.h.b16 %v672
  %v783 = vunpack.c.l.b16 %v673
  %v784 = vunpack.c.h.b16 %v673
  %v785 = vunpack.c.l.b16 %v674
  %v786 = vunpack.c.h.b16 %v674
  %v787 = vunpack.c.l.b16 %v675
  %v788 = vunpack.c.h.b16 %v675
  %v789 = vunpack.c.l.b16 %v676
  %v790 = vunpack.c.h.b16 %v676
  %v791 = vunpack.c.l.b16 %v677
  %v792 = vunpack.c.h.b16 %v677
  %v793 = vunpack.c.l.b16 %v678
  %v794 = vunpack.c.h.b16 %v678
  %v795 = vunpack.c.l.b16 %v679
  %v796 = vunpack.c.h.b16 %v679
  %v797 = vunpack.c.l.b16 %v680
  %v798 = vunpack.c.h.b16 %v680
  %v799 = vunpack.c.l.b16 %v681
  %v800 = vunpack.c.h.b16 %v681
  %v801 = vunpack.c.l.b16 %v682
  %v802 = vunpack.c.h.b16 %v682
  %v803 = vunpack.c.l.b16 %v683
  %v804 = vunpack.c.h.b16 %v683
  %v805 = vunpack.c.l.b16 %v684
  %v806 = vunpack.c.h.b16 %v684
  %v807 = vunpack.c.l.b16 %v685
  %v808 = vunpack.c.h.b16 %v685
  %v809 = vunpack.c.l.b16 %v686
  %v810 = vunpack.c.h.b16 %v686
  %v811 = vunpack.c.l.b16 %v687
  %v812 = vunpack.c.h.b16 %v687
  %v813 = vunpack.c.l.b16 %v688
  %v814 = vunpack.c.h.b16 %v688
  %v815 = vunpack.c.l.b16 %v689
  %v816 = vunpack.c.h.b16 %v689
  %v817 = vunpack.c.l.b16 %v690
  %v818 = vunpack.c.h.b16 %v690
  %v819 = vunpack.c.l.b16 %v691
  %v820 = vunpack.c.h.b16 %v691
  %v821 = vunpack.c.l.b16 %v692
  %v822 = vunpack.c.h.b16 %v692
  %v823 = vunpack.c.l.b16 %v693
  %v824 = vunpack.c.h.b16 %v693
  %v825 = vunpack.c.l.b16 %v694
  %v826 = vunpack.c.h.b16 %v694
  %v827 = vpack.c.b16 %v779, %v763
  %v828 = vpack.c.b16 %v780, %v764
  %v829 = vpack.c.b16 %v781, %v765
  %v830 = vpack.c.b16 %v782, %v766
  %v831 = vpack.c.b16 %v783, %v767
  %v832 = vpack.c.b16 %v784, %v768
  %v833 = vpack.c.b16 %v785, %v769
  %v834 = vpack.c.b16 %v786, %v770
  %v835 = vpack.c.b16 %v787, %v771
  %v836 = vpack.c.b16 %v788, %v772
  %v837 = vpack.c.b16 %v789, %v773
  %v838 = vpack.c.b16 %v790, %v774
  %v839 = vpack.c.b16 %v791, %v775
  %v840 = vpack.c.b16 %v792, %v776
  %v841 = vpack.c.b16 %v793, %v777
  %v842 = vpack.c.b16 %v794, %v778
  %v843 = vpack.c.b16 %v811, %v795
  %v844 = vpack.c.b16 %v812, %v796
  %v845 = vpack.c.b16 %v813, %v797
  %v846 = vpack.c.b16 %v814, %v798
  %v847 = vpack.c.b16 %v815, %v799
  %v848 = vpack.c.b16 %v816, %v800
  %v849 = vpack.c.b16 %v817, %v801
  %v850 = vpack.c.b16 %v818, %v802
  %v851 = vpack.c.b16 %v819, %v803
  %v852 = vpack.c.b16 %v820, %v804
  %v853 = vpack.c.b16 %v821, %v805
  %v854 = vpack.c.b16 %v822, %v806
  %v855 = vpack.c.b16 %v823, %v807
  %v856 = vpack.c.b16 %v824, %v808
  %v857 = vpack.c.b16 %v825, %v809
  %v858 = vpack.c.b16 %v826, %v810
  %v892 = vsel %vm72, %v662, 0
  %894 = vmatpush.bf16.msra.mxu0 0
  %895 = vmatpush.bf16.msra.mxu0 0
  %896 = vmatpush.bf16.msra.mxu0 0
  %897 = vmatpush.bf16.msra.mxu0 0
  %898 = vmatpush.bf16.msra.mxu0 0
  %899 = vmatpush.bf16.msra.mxu0 0
  %900 = vmatpush.bf16.msra.mxu0 %v843
  %901 = vmatpush.bf16.msra.mxu0 %v827
  %902 = vmatmul.bf16.gmra.mxu0 %v892
  %v903 = vpop.f32.mrf.mxu0
  %v904 = vadd.f32 %v699, %v903
  %v905 = vpop.f32.mrf.mxu0
  %v906 = vadd.f32 %v699, %v905
  %907 = vdwg.mxu0
  %908 = vmatpush.bf16.msra.mxu0 0
  %909 = vmatpush.bf16.msra.mxu0 0
  %910 = vmatpush.bf16.msra.mxu0 0
  %911 = vmatpush.bf16.msra.mxu0 0
  %912 = vmatpush.bf16.msra.mxu0 0
  %913 = vmatpush.bf16.msra.mxu0 0
  %914 = vmatpush.bf16.msra.mxu0 %v844
  %915 = vmatpush.bf16.msra.mxu0 %v828
  %916 = vmatmul.bf16.gmra.mxu0 %v892
  %v917 = vpop.f32.mrf.mxu0
  %v918 = vadd.f32 %v700, %v917
  %v919 = vpop.f32.mrf.mxu0
  %v920 = vadd.f32 %v700, %v919
  %921 = vdwg.mxu0
  %922 = vmatpush.bf16.msra.mxu0 0
  %923 = vmatpush.bf16.msra.mxu0 0
  %924 = vmatpush.bf16.msra.mxu0 0
  %925 = vmatpush.bf16.msra.mxu0 0
  %926 = vmatpush.bf16.msra.mxu0 0
  %927 = vmatpush.bf16.msra.mxu0 0
  %928 = vmatpush.bf16.msra.mxu0 %v845
  %929 = vmatpush.bf16.msra.mxu0 %v829
  %930 = vmatmul.bf16.gmra.mxu0 %v892
  %v931 = vpop.f32.mrf.mxu0
  %v932 = vadd.f32 %v701, %v931
  %v933 = vpop.f32.mrf.mxu0
  %v934 = vadd.f32 %v701, %v933
  %935 = vdwg.mxu0
  %936 = vmatpush.bf16.msra.mxu0 0
  %937 = vmatpush.bf16.msra.mxu0 0
  %938 = vmatpush.bf16.msra.mxu0 0
  %939 = vmatpush.bf16.msra.mxu0 0
  %940 = vmatpush.bf16.msra.mxu0 0
  %941 = vmatpush.bf16.msra.mxu0 0
  %942 = vmatpush.bf16.msra.mxu0 %v846
  %943 = vmatpush.bf16.msra.mxu0 %v830
  %944 = vmatmul.bf16.gmra.mxu0 %v892
  %v945 = vpop.f32.mrf.mxu0
  %v946 = vadd.f32 %v702, %v945
  %v947 = vpop.f32.mrf.mxu0
  %v948 = vadd.f32 %v702, %v947
  %949 = vdwg.mxu0
  %950 = vmatpush.bf16.msra.mxu0 0
  %951 = vmatpush.bf16.msra.mxu0 0
  %952 = vmatpush.bf16.msra.mxu0 0
  %953 = vmatpush.bf16.msra.mxu0 0
  %954 = vmatpush.bf16.msra.mxu0 0
  %955 = vmatpush.bf16.msra.mxu0 0
  %956 = vmatpush.bf16.msra.mxu0 %v847
  %957 = vmatpush.bf16.msra.mxu0 %v831
  %958 = vmatmul.bf16.gmra.mxu0 %v892
  %v959 = vpop.f32.mrf.mxu0
  %v960 = vadd.f32 %v703, %v959
  %v961 = vpop.f32.mrf.mxu0
  %v962 = vadd.f32 %v703, %v961
  %963 = vdwg.mxu0
  %964 = vmatpush.bf16.msra.mxu0 0
  %965 = vmatpush.bf16.msra.mxu0 0
  %966 = vmatpush.bf16.msra.mxu0 0
  %967 = vmatpush.bf16.msra.mxu0 0
  %968 = vmatpush.bf16.msra.mxu0 0
  %969 = vmatpush.bf16.msra.mxu0 0
  %970 = vmatpush.bf16.msra.mxu0 %v848
  %971 = vmatpush.bf16.msra.mxu0 %v832
  %972 = vmatmul.bf16.gmra.mxu0 %v892
  %v973 = vpop.f32.mrf.mxu0
  %v974 = vadd.f32 %v704, %v973
  %v975 = vpop.f32.mrf.mxu0
  %v976 = vadd.f32 %v704, %v975
  %977 = vdwg.mxu0
  %978 = vmatpush.bf16.msra.mxu0 0
  %979 = vmatpush.bf16.msra.mxu0 0
  %980 = vmatpush.bf16.msra.mxu0 0
  %981 = vmatpush.bf16.msra.mxu0 0
  %982 = vmatpush.bf16.msra.mxu0 0
  %983 = vmatpush.bf16.msra.mxu0 0
  %984 = vmatpush.bf16.msra.mxu0 %v849
  %985 = vmatpush.bf16.msra.mxu0 %v833
  %986 = vmatmul.bf16.gmra.mxu0 %v892
  %v987 = vpop.f32.mrf.mxu0
  %v988 = vadd.f32 %v705, %v987
  %v989 = vpop.f32.mrf.mxu0
  %v990 = vadd.f32 %v705, %v989
  %991 = vdwg.mxu0
  %992 = vmatpush.bf16.msra.mxu0 0
  %993 = vmatpush.bf16.msra.mxu0 0
  %994 = vmatpush.bf16.msra.mxu0 0
  %995 = vmatpush.bf16.msra.mxu0 0
  %996 = vmatpush.bf16.msra.mxu0 0
  %997 = vmatpush.bf16.msra.mxu0 0
  %998 = vmatpush.bf16.msra.mxu0 %v850
  %999 = vmatpush.bf16.msra.mxu0 %v834
  %1000 = vmatmul.bf16.gmra.mxu0 %v892
  %v1001 = vpop.f32.mrf.mxu0
  %v1002 = vadd.f32 %v706, %v1001
  %v1003 = vpop.f32.mrf.mxu0
  %v1004 = vadd.f32 %v706, %v1003
  %1005 = vdwg.mxu0
  %1006 = vmatpush.bf16.msra.mxu0 0
  %1007 = vmatpush.bf16.msra.mxu0 0
  %1008 = vmatpush.bf16.msra.mxu0 0
  %1009 = vmatpush.bf16.msra.mxu0 0
  %1010 = vmatpush.bf16.msra.mxu0 0
  %1011 = vmatpush.bf16.msra.mxu0 0
  %1012 = vmatpush.bf16.msra.mxu0 %v851
  %1013 = vmatpush.bf16.msra.mxu0 %v835
  %1014 = vmatmul.bf16.gmra.mxu0 %v892
  %v1015 = vpop.f32.mrf.mxu0
  %v1016 = vadd.f32 %v707, %v1015
  %v1017 = vpop.f32.mrf.mxu0
  %v1018 = vadd.f32 %v707, %v1017
  %1019 = vdwg.mxu0
  %1020 = vmatpush.bf16.msra.mxu0 0
  %1021 = vmatpush.bf16.msra.mxu0 0
  %1022 = vmatpush.bf16.msra.mxu0 0
  %1023 = vmatpush.bf16.msra.mxu0 0
  %1024 = vmatpush.bf16.msra.mxu0 0
  %1025 = vmatpush.bf16.msra.mxu0 0
  %1026 = vmatpush.bf16.msra.mxu0 %v852
  %1027 = vmatpush.bf16.msra.mxu0 %v836
  %1028 = vmatmul.bf16.gmra.mxu0 %v892
  %v1029 = vpop.f32.mrf.mxu0
  %v1030 = vadd.f32 %v708, %v1029
  %v1031 = vpop.f32.mrf.mxu0
  %v1032 = vadd.f32 %v708, %v1031
  %1033 = vdwg.mxu0
  %1034 = vmatpush.bf16.msra.mxu0 0
  %1035 = vmatpush.bf16.msra.mxu0 0
  %1036 = vmatpush.bf16.msra.mxu0 0
  %1037 = vmatpush.bf16.msra.mxu0 0
  %1038 = vmatpush.bf16.msra.mxu0 0
  %1039 = vmatpush.bf16.msra.mxu0 0
  %1040 = vmatpush.bf16.msra.mxu0 %v853
  %1041 = vmatpush.bf16.msra.mxu0 %v837
  %1042 = vmatmul.bf16.gmra.mxu0 %v892
  %v1043 = vpop.f32.mrf.mxu0
  %v1044 = vadd.f32 %v709, %v1043
  %v1045 = vpop.f32.mrf.mxu0
  %v1046 = vadd.f32 %v709, %v1045
  %1047 = vdwg.mxu0
  %1048 = vmatpush.bf16.msra.mxu0 0
  %1049 = vmatpush.bf16.msra.mxu0 0
  %1050 = vmatpush.bf16.msra.mxu0 0
  %1051 = vmatpush.bf16.msra.mxu0 0
  %1052 = vmatpush.bf16.msra.mxu0 0
  %1053 = vmatpush.bf16.msra.mxu0 0
  %1054 = vmatpush.bf16.msra.mxu0 %v854
  %1055 = vmatpush.bf16.msra.mxu0 %v838
  %1056 = vmatmul.bf16.gmra.mxu0 %v892
  %v1057 = vpop.f32.mrf.mxu0
  %v1058 = vadd.f32 %v710, %v1057
  %v1059 = vpop.f32.mrf.mxu0
  %v1060 = vadd.f32 %v710, %v1059
  %1061 = vdwg.mxu0
  %1062 = vmatpush.bf16.msra.mxu0 0
  %1063 = vmatpush.bf16.msra.mxu0 0
  %1064 = vmatpush.bf16.msra.mxu0 0
  %1065 = vmatpush.bf16.msra.mxu0 0
  %1066 = vmatpush.bf16.msra.mxu0 0
  %1067 = vmatpush.bf16.msra.mxu0 0
  %1068 = vmatpush.bf16.msra.mxu0 %v855
  %1069 = vmatpush.bf16.msra.mxu0 %v839
  %1070 = vmatmul.bf16.gmra.mxu0 %v892
  %v1071 = vpop.f32.mrf.mxu0
  %v1072 = vadd.f32 %v711, %v1071
  %v1073 = vpop.f32.mrf.mxu0
  %v1074 = vadd.f32 %v711, %v1073
  %1075 = vdwg.mxu0
  %1076 = vmatpush.bf16.msra.mxu0 0
  %1077 = vmatpush.bf16.msra.mxu0 0
  %1078 = vmatpush.bf16.msra.mxu0 0
  %1079 = vmatpush.bf16.msra.mxu0 0
  %1080 = vmatpush.bf16.msra.mxu0 0
  %1081 = vmatpush.bf16.msra.mxu0 0
  %1082 = vmatpush.bf16.msra.mxu0 %v856
  %1083 = vmatpush.bf16.msra.mxu0 %v840
  %1084 = vmatmul.bf16.gmra.mxu0 %v892
  %v1085 = vpop.f32.mrf.mxu0
  %v1086 = vadd.f32 %v712, %v1085
  %v1087 = vpop.f32.mrf.mxu0
  %v1088 = vadd.f32 %v712, %v1087
  %1089 = vdwg.mxu0
  %1090 = vmatpush.bf16.msra.mxu0 0
  %1091 = vmatpush.bf16.msra.mxu0 0
  %1092 = vmatpush.bf16.msra.mxu0 0
  %1093 = vmatpush.bf16.msra.mxu0 0
  %1094 = vmatpush.bf16.msra.mxu0 0
  %1095 = vmatpush.bf16.msra.mxu0 0
  %1096 = vmatpush.bf16.msra.mxu0 %v857
  %1097 = vmatpush.bf16.msra.mxu0 %v841
  %1098 = vmatmul.bf16.gmra.mxu0 %v892
  %v1099 = vpop.f32.mrf.mxu0
  %v1100 = vadd.f32 %v713, %v1099
  %v1101 = vpop.f32.mrf.mxu0
  %v1102 = vadd.f32 %v713, %v1101
  %1103 = vdwg.mxu0
  %1104 = vmatpush.bf16.msra.mxu0 0
  %1105 = vmatpush.bf16.msra.mxu0 0
  %1106 = vmatpush.bf16.msra.mxu0 0
  %1107 = vmatpush.bf16.msra.mxu0 0
  %1108 = vmatpush.bf16.msra.mxu0 0
  %1109 = vmatpush.bf16.msra.mxu0 0
  %1110 = vmatpush.bf16.msra.mxu0 %v858
  %1111 = vmatpush.bf16.msra.mxu0 %v842
  %1112 = vmatmul.bf16.gmra.mxu0 %v892
  %v1113 = vpop.f32.mrf.mxu0
  %v1114 = vadd.f32 %v714, %v1113
  %v1115 = vpop.f32.mrf.mxu0
  %v1116 = vadd.f32 %v714, %v1115
  %1117 = vdwg.mxu0
  %v1118 = vmax.f32 %v904, 0.0
  %v1119 = vmax.f32 %v918, 0.0
  %v1120 = vmax.f32 %v932, 0.0
  %v1121 = vmax.f32 %v946, 0.0
  %v1122 = vmax.f32 %v960, 0.0
  %v1123 = vmax.f32 %v974, 0.0
  %v1124 = vmax.f32 %v988, 0.0
  %v1125 = vmax.f32 %v1002, 0.0
  %v1126 = vmax.f32 %v1016, 0.0
  %v1127 = vmax.f32 %v1030, 0.0
  %v1128 = vmax.f32 %v1044, 0.0
  %v1129 = vmax.f32 %v1058, 0.0
  %v1130 = vmax.f32 %v1072, 0.0
  %v1131 = vmax.f32 %v1086, 0.0
  %v1132 = vmax.f32 %v1100, 0.0
  %v1133 = vmax.f32 %v1114, 0.0
  %v1134 = vmax.f32 %v906, 0.0
  %v1135 = vmax.f32 %v920, 0.0
  %v1136 = vmax.f32 %v934, 0.0
  %v1137 = vmax.f32 %v948, 0.0
  %v1138 = vmax.f32 %v962, 0.0
  %v1139 = vmax.f32 %v976, 0.0
  %v1140 = vmax.f32 %v990, 0.0
  %v1141 = vmax.f32 %v1004, 0.0
  %v1142 = vmax.f32 %v1018, 0.0
  %v1143 = vmax.f32 %v1032, 0.0
  %v1144 = vmax.f32 %v1046, 0.0
  %v1145 = vmax.f32 %v1060, 0.0
  %v1146 = vmax.f32 %v1074, 0.0
  %v1147 = vmax.f32 %v1088, 0.0
  %v1148 = vmax.f32 %v1102, 0.0
  %v1149 = vmax.f32 %v1116, 0.0
  %v1150 = vpack.c.bf16 %v1134, %v1118
  %v1151 = vpack.c.bf16 %v1135, %v1119
  %v1152 = vpack.c.bf16 %v1136, %v1120
  %v1153 = vpack.c.bf16 %v1137, %v1121
  %v1154 = vpack.c.bf16 %v1138, %v1122
  %v1155 = vpack.c.bf16 %v1139, %v1123
  %v1156 = vpack.c.bf16 %v1140, %v1124
  %v1157 = vpack.c.bf16 %v1141, %v1125
  %v1158 = vpack.c.bf16 %v1142, %v1126
  %v1159 = vpack.c.bf16 %v1143, %v1127
  %v1160 = vpack.c.bf16 %v1144, %v1128
  %v1161 = vpack.c.bf16 %v1145, %v1129
  %v1162 = vpack.c.bf16 %v1146, %v1130
  %v1163 = vpack.c.bf16 %v1147, %v1131
  %v1164 = vpack.c.bf16 %v1148, %v1132
  %v1165 = vpack.c.bf16 %v1149, %v1133
  %v1166 = vld [vmem:[%s15] sm:$0xf]
  %v1167 = vld [vmem:[%s15 + $0x4] sm:$0xf]
  %v1168 = vld [vmem:[%s15 + $0x8] sm:$0xf]
  %v1169 = vld [vmem:[%s15 + $0xc] sm:$0xf]
  %v1170 = vld [vmem:[%s15 + $0x10] sm:$0xf]
  %v1171 = vld [vmem:[%s15 + $0x14] sm:$0xf]
  %v1172 = vld [vmem:[%s15 + $0x18] sm:$0xf]
  %v1173 = vld [vmem:[%s15 + $0x1c] sm:$0xf]
  %v1174 = vld [vmem:[%s15 + $0x20] sm:$0xf]
  %v1175 = vld [vmem:[%s15 + $0x24] sm:$0xf]
  %v1176 = vld [vmem:[%s15 + $0x28] sm:$0xf]
  %v1177 = vld [vmem:[%s15 + $0x2c] sm:$0xf]
  %v1178 = vld [vmem:[%s15 + $0x30] sm:$0xf]
  %v1179 = vld [vmem:[%s15 + $0x34] sm:$0xf]
  %v1180 = vld [vmem:[%s15 + $0x38] sm:$0xf]
  %v1181 = vld [vmem:[%s15 + $0x3c] sm:$0xf]
  %v1182 = vld [vmem:[%s15 + $0x40] sm:$0xf]
  %v1183 = vld [vmem:[%s15 + $0x44] sm:$0xf]
  %v1184 = vld [vmem:[%s15 + $0x48] sm:$0xf]
  %v1185 = vld [vmem:[%s15 + $0x4c] sm:$0xf]
  %v1186 = vld [vmem:[%s15 + $0x50] sm:$0xf]
  %v1187 = vld [vmem:[%s15 + $0x54] sm:$0xf]
  %v1188 = vld [vmem:[%s15 + $0x58] sm:$0xf]
  %v1189 = vld [vmem:[%s15 + $0x5c] sm:$0xf]
  %v1190 = vld [vmem:[%s15 + $0x60] sm:$0xf]
  %v1191 = vld [vmem:[%s15 + $0x64] sm:$0xf]
  %v1192 = vld [vmem:[%s15 + $0x68] sm:$0xf]
  %v1193 = vld [vmem:[%s15 + $0x6c] sm:$0xf]
  %v1194 = vld [vmem:[%s15 + $0x70] sm:$0xf]
  %v1195 = vld [vmem:[%s15 + $0x74] sm:$0xf]
  %v1196 = vld [vmem:[%s15 + $0x78] sm:$0xf]
  %v1197 = vld [vmem:[%s15 + $0x7c] sm:$0xf]
  %v1198 = vld [vmem:[%s15 + $0x80] sm:$0xf]
  %v1199 = vld [vmem:[%s15 + $0x84] sm:$0xf]
  %v1200 = vld [vmem:[%s15 + $0x88] sm:$0xf]
  %v1201 = vld [vmem:[%s15 + $0x8c] sm:$0xf]
  %v1202 = vld [vmem:[%s15 + $0x90] sm:$0xf]
  %v1203 = vld [vmem:[%s15 + $0x94] sm:$0xf]
  %v1204 = vld [vmem:[%s15 + $0x98] sm:$0xf]
  %v1205 = vld [vmem:[%s15 + $0x9c] sm:$0xf]
  %v1206 = vld [vmem:[%s15 + $0xa0] sm:$0xf]
  %v1207 = vld [vmem:[%s15 + $0xa4] sm:$0xf]
  %v1208 = vld [vmem:[%s15 + $0xa8] sm:$0xf]
  %v1209 = vld [vmem:[%s15 + $0xac] sm:$0xf]
  %v1210 = vld [vmem:[%s15 + $0xb0] sm:$0xf]
  %v1211 = vld [vmem:[%s15 + $0xb4] sm:$0xf]
  %v1212 = vld [vmem:[%s15 + $0xb8] sm:$0xf]
  %v1213 = vld [vmem:[%s15 + $0xbc] sm:$0xf]
  %v1214 = vld [vmem:[%s15 + $0xc0] sm:$0xf]
  %v1215 = vld [vmem:[%s15 + $0xc4] sm:$0xf]
  %v1216 = vld [vmem:[%s15 + $0xc8] sm:$0xf]
  %v1217 = vld [vmem:[%s15 + $0xcc] sm:$0xf]
  %v1218 = vld [vmem:[%s15 + $0xd0] sm:$0xf]
  %v1219 = vld [vmem:[%s15 + $0xd4] sm:$0xf]
  %v1220 = vld [vmem:[%s15 + $0xd8] sm:$0xf]
  %v1221 = vld [vmem:[%s15 + $0xdc] sm:$0xf]
  %v1222 = vld [vmem:[%s15 + $0xe0] sm:$0xf]
  %v1223 = vld [vmem:[%s15 + $0xe4] sm:$0xf]
  %v1224 = vld [vmem:[%s15 + $0xe8] sm:$0xf]
  %v1225 = vld [vmem:[%s15 + $0xec] sm:$0xf]
  %v1226 = vld [vmem:[%s15 + $0xf0] sm:$0xf]
  %v1227 = vld [vmem:[%s15 + $0xf4] sm:$0xf]
  %v1228 = vld [vmem:[%s15 + $0xf8] sm:$0xf]
  %v1229 = vld [vmem:[%s15 + $0xfc] sm:$0xf]
  %v1230 = vld [vmem:[%s15 + $0x100] sm:$0xf]
  %v1231 = vld [vmem:[%s15 + $0x104] sm:$0xf]
  %v1232 = vld [vmem:[%s15 + $0x108] sm:$0xf]
  %v1233 = vld [vmem:[%s15 + $0x10c] sm:$0xf]
  %v1234 = vld [vmem:[%s15 + $0x110] sm:$0xf]
  %v1235 = vld [vmem:[%s15 + $0x114] sm:$0xf]
  %v1236 = vld [vmem:[%s15 + $0x118] sm:$0xf]
  %v1237 = vld [vmem:[%s15 + $0x11c] sm:$0xf]
  %v1238 = vld [vmem:[%s15 + $0x120] sm:$0xf]
  %v1239 = vld [vmem:[%s15 + $0x124] sm:$0xf]
  %v1240 = vld [vmem:[%s15 + $0x128] sm:$0xf]
  %v1241 = vld [vmem:[%s15 + $0x12c] sm:$0xf]
  %v1242 = vld [vmem:[%s15 + $0x130] sm:$0xf]
  %v1243 = vld [vmem:[%s15 + $0x134] sm:$0xf]
  %v1244 = vld [vmem:[%s15 + $0x138] sm:$0xf]
  %v1245 = vld [vmem:[%s15 + $0x13c] sm:$0xf]
  %v1246 = vld [vmem:[%s15 + $0x140] sm:$0xf]
  %v1247 = vld [vmem:[%s15 + $0x144] sm:$0xf]
  %v1248 = vld [vmem:[%s15 + $0x148] sm:$0xf]
  %v1249 = vld [vmem:[%s15 + $0x14c] sm:$0xf]
  %v1250 = vld [vmem:[%s15 + $0x150] sm:$0xf]
  %v1251 = vld [vmem:[%s15 + $0x154] sm:$0xf]
  %v1252 = vld [vmem:[%s15 + $0x158] sm:$0xf]
  %v1253 = vld [vmem:[%s15 + $0x15c] sm:$0xf]
  %v1254 = vld [vmem:[%s15 + $0x160] sm:$0xf]
  %v1255 = vld [vmem:[%s15 + $0x164] sm:$0xf]
  %v1256 = vld [vmem:[%s15 + $0x168] sm:$0xf]
  %v1257 = vld [vmem:[%s15 + $0x16c] sm:$0xf]
  %v1258 = vld [vmem:[%s15 + $0x170] sm:$0xf]
  %v1259 = vld [vmem:[%s15 + $0x174] sm:$0xf]
  %v1260 = vld [vmem:[%s15 + $0x178] sm:$0xf]
  %v1261 = vld [vmem:[%s15 + $0x17c] sm:$0xf]
  %v1262 = vld [vmem:[%s15 + $0x180] sm:$0xf]
  %v1263 = vld [vmem:[%s15 + $0x184] sm:$0xf]
  %v1264 = vld [vmem:[%s15 + $0x188] sm:$0xf]
  %v1265 = vld [vmem:[%s15 + $0x18c] sm:$0xf]
  %v1266 = vld [vmem:[%s15 + $0x190] sm:$0xf]
  %v1267 = vld [vmem:[%s15 + $0x194] sm:$0xf]
  %v1268 = vld [vmem:[%s15 + $0x198] sm:$0xf]
  %v1269 = vld [vmem:[%s15 + $0x19c] sm:$0xf]
  %v1270 = vld [vmem:[%s15 + $0x1a0] sm:$0xf]
  %v1271 = vld [vmem:[%s15 + $0x1a4] sm:$0xf]
  %v1272 = vld [vmem:[%s15 + $0x1a8] sm:$0xf]
  %v1273 = vld [vmem:[%s15 + $0x1ac] sm:$0xf]
  %v1274 = vld [vmem:[%s15 + $0x1b0] sm:$0xf]
  %v1275 = vld [vmem:[%s15 + $0x1b4] sm:$0xf]
  %v1276 = vld [vmem:[%s15 + $0x1b8] sm:$0xf]
  %v1277 = vld [vmem:[%s15 + $0x1bc] sm:$0xf]
  %v1278 = vld [vmem:[%s15 + $0x1c0] sm:$0xf]
  %v1279 = vld [vmem:[%s15 + $0x1c4] sm:$0xf]
  %v1280 = vld [vmem:[%s15 + $0x1c8] sm:$0xf]
  %v1281 = vld [vmem:[%s15 + $0x1cc] sm:$0xf]
  %v1282 = vld [vmem:[%s15 + $0x1d0] sm:$0xf]
  %v1283 = vld [vmem:[%s15 + $0x1d4] sm:$0xf]
  %v1284 = vld [vmem:[%s15 + $0x1d8] sm:$0xf]
  %v1285 = vld [vmem:[%s15 + $0x1dc] sm:$0xf]
  %v1286 = vld [vmem:[%s15 + $0x1e0] sm:$0xf]
  %v1287 = vld [vmem:[%s15 + $0x1e4] sm:$0xf]
  %v1288 = vld [vmem:[%s15 + $0x1e8] sm:$0xf]
  %v1289 = vld [vmem:[%s15 + $0x1ec] sm:$0xf]
  %v1290 = vld [vmem:[%s15 + $0x1f0] sm:$0xf]
  %v1291 = vld [vmem:[%s15 + $0x1f4] sm:$0xf]
  %v1292 = vld [vmem:[%s15 + $0x1f8] sm:$0xf]
  %v1293 = vld [vmem:[%s15 + $0x1fc] sm:$0xf]
  %v1294 = vld [vmem:[%s15 + $0x200] sm:$0xf]
  %v1295 = vld [vmem:[%s15 + $0x204] sm:$0xf]
  %v1296 = vld [vmem:[%s15 + $0x208] sm:$0xf]
  %v1297 = vld [vmem:[%s15 + $0x20c] sm:$0xf]
  %v1298 = vld [vmem:[%s15 + $0x210] sm:$0xf]
  %v1299 = vld [vmem:[%s15 + $0x214] sm:$0xf]
  %v1300 = vld [vmem:[%s15 + $0x218] sm:$0xf]
  %v1301 = vld [vmem:[%s15 + $0x21c] sm:$0xf]
  %v1302 = vld [vmem:[%s15 + $0x220] sm:$0xf]
  %v1303 = vld [vmem:[%s15 + $0x224] sm:$0xf]
  %v1304 = vld [vmem:[%s15 + $0x228] sm:$0xf]
  %v1305 = vld [vmem:[%s15 + $0x22c] sm:$0xf]
  %v1306 = vld [vmem:[%s15 + $0x230] sm:$0xf]
  %v1307 = vld [vmem:[%s15 + $0x234] sm:$0xf]
  %v1308 = vld [vmem:[%s15 + $0x238] sm:$0xf]
  %v1309 = vld [vmem:[%s15 + $0x23c] sm:$0xf]
  %v1310 = vld [vmem:[%s15 + $0x240] sm:$0xf]
  %v1311 = vld [vmem:[%s15 + $0x244] sm:$0xf]
  %v1312 = vld [vmem:[%s15 + $0x248] sm:$0xf]
  %v1313 = vld [vmem:[%s15 + $0x24c] sm:$0xf]
  %v1314 = vld [vmem:[%s15 + $0x250] sm:$0xf]
  %v1315 = vld [vmem:[%s15 + $0x254] sm:$0xf]
  %v1316 = vld [vmem:[%s15 + $0x258] sm:$0xf]
  %v1317 = vld [vmem:[%s15 + $0x25c] sm:$0xf]
  %v1318 = vld [vmem:[%s15 + $0x260] sm:$0xf]
  %v1319 = vld [vmem:[%s15 + $0x264] sm:$0xf]
  %v1320 = vld [vmem:[%s15 + $0x268] sm:$0xf]
  %v1321 = vld [vmem:[%s15 + $0x26c] sm:$0xf]
  %v1322 = vld [vmem:[%s15 + $0x270] sm:$0xf]
  %v1323 = vld [vmem:[%s15 + $0x274] sm:$0xf]
  %v1324 = vld [vmem:[%s15 + $0x278] sm:$0xf]
  %v1325 = vld [vmem:[%s15 + $0x27c] sm:$0xf]
  %v1326 = vld [vmem:[%s15 + $0x280] sm:$0xf]
  %v1327 = vld [vmem:[%s15 + $0x284] sm:$0xf]
  %v1328 = vld [vmem:[%s15 + $0x288] sm:$0xf]
  %v1329 = vld [vmem:[%s15 + $0x28c] sm:$0xf]
  %v1330 = vld [vmem:[%s15 + $0x290] sm:$0xf]
  %v1331 = vld [vmem:[%s15 + $0x294] sm:$0xf]
  %v1332 = vld [vmem:[%s15 + $0x298] sm:$0xf]
  %v1333 = vld [vmem:[%s15 + $0x29c] sm:$0xf]
  %v1334 = vld [vmem:[%s15 + $0x2a0] sm:$0xf]
  %v1335 = vld [vmem:[%s15 + $0x2a4] sm:$0xf]
  %v1336 = vld [vmem:[%s15 + $0x2a8] sm:$0xf]
  %v1337 = vld [vmem:[%s15 + $0x2ac] sm:$0xf]
  %v1338 = vld [vmem:[%s15 + $0x2b0] sm:$0xf]
  %v1339 = vld [vmem:[%s15 + $0x2b4] sm:$0xf]
  %v1340 = vld [vmem:[%s15 + $0x2b8] sm:$0xf]
  %v1341 = vld [vmem:[%s15 + $0x2bc] sm:$0xf]
  %v1342 = vld [vmem:[%s15 + $0x2c0] sm:$0xf]
  %v1343 = vld [vmem:[%s15 + $0x2c4] sm:$0xf]
  %v1344 = vld [vmem:[%s15 + $0x2c8] sm:$0xf]
  %v1345 = vld [vmem:[%s15 + $0x2cc] sm:$0xf]
  %v1346 = vld [vmem:[%s15 + $0x2d0] sm:$0xf]
  %v1347 = vld [vmem:[%s15 + $0x2d4] sm:$0xf]
  %v1348 = vld [vmem:[%s15 + $0x2d8] sm:$0xf]
  %v1349 = vld [vmem:[%s15 + $0x2dc] sm:$0xf]
  %v1350 = vld [vmem:[%s15 + $0x2e0] sm:$0xf]
  %v1351 = vld [vmem:[%s15 + $0x2e4] sm:$0xf]
  %v1352 = vld [vmem:[%s15 + $0x2e8] sm:$0xf]
  %v1353 = vld [vmem:[%s15 + $0x2ec] sm:$0xf]
  %v1354 = vld [vmem:[%s15 + $0x2f0] sm:$0xf]
  %v1355 = vld [vmem:[%s15 + $0x2f4] sm:$0xf]
  %v1356 = vld [vmem:[%s15 + $0x2f8] sm:$0xf]
  %v1357 = vld [vmem:[%s15 + $0x2fc] sm:$0xf]
  %v1358 = vld [vmem:[%s15 + $0x300] sm:$0xf]
  %v1359 = vld [vmem:[%s15 + $0x304] sm:$0xf]
  %v1360 = vld [vmem:[%s15 + $0x308] sm:$0xf]
  %v1361 = vld [vmem:[%s15 + $0x30c] sm:$0xf]
  %v1362 = vld [vmem:[%s15 + $0x310] sm:$0xf]
  %v1363 = vld [vmem:[%s15 + $0x314] sm:$0xf]
  %v1364 = vld [vmem:[%s15 + $0x318] sm:$0xf]
  %v1365 = vld [vmem:[%s15 + $0x31c] sm:$0xf]
  %v1366 = vld [vmem:[%s15 + $0x320] sm:$0xf]
  %v1367 = vld [vmem:[%s15 + $0x324] sm:$0xf]
  %v1368 = vld [vmem:[%s15 + $0x328] sm:$0xf]
  %v1369 = vld [vmem:[%s15 + $0x32c] sm:$0xf]
  %v1370 = vld [vmem:[%s15 + $0x330] sm:$0xf]
  %v1371 = vld [vmem:[%s15 + $0x334] sm:$0xf]
  %v1372 = vld [vmem:[%s15 + $0x338] sm:$0xf]
  %v1373 = vld [vmem:[%s15 + $0x33c] sm:$0xf]
  %v1374 = vld [vmem:[%s15 + $0x340] sm:$0xf]
  %v1375 = vld [vmem:[%s15 + $0x344] sm:$0xf]
  %v1376 = vld [vmem:[%s15 + $0x348] sm:$0xf]
  %v1377 = vld [vmem:[%s15 + $0x34c] sm:$0xf]
  %v1378 = vld [vmem:[%s15 + $0x350] sm:$0xf]
  %v1379 = vld [vmem:[%s15 + $0x354] sm:$0xf]
  %v1380 = vld [vmem:[%s15 + $0x358] sm:$0xf]
  %v1381 = vld [vmem:[%s15 + $0x35c] sm:$0xf]
  %v1382 = vld [vmem:[%s15 + $0x360] sm:$0xf]
  %v1383 = vld [vmem:[%s15 + $0x364] sm:$0xf]
  %v1384 = vld [vmem:[%s15 + $0x368] sm:$0xf]
  %v1385 = vld [vmem:[%s15 + $0x36c] sm:$0xf]
  %v1386 = vld [vmem:[%s15 + $0x370] sm:$0xf]
  %v1387 = vld [vmem:[%s15 + $0x374] sm:$0xf]
  %v1388 = vld [vmem:[%s15 + $0x378] sm:$0xf]
  %v1389 = vld [vmem:[%s15 + $0x37c] sm:$0xf]
  %v1390 = vld [vmem:[%s15 + $0x380] sm:$0xf]
  %v1391 = vld [vmem:[%s15 + $0x384] sm:$0xf]
  %v1392 = vld [vmem:[%s15 + $0x388] sm:$0xf]
  %v1393 = vld [vmem:[%s15 + $0x38c] sm:$0xf]
  %v1394 = vld [vmem:[%s15 + $0x390] sm:$0xf]
  %v1395 = vld [vmem:[%s15 + $0x394] sm:$0xf]
  %v1396 = vld [vmem:[%s15 + $0x398] sm:$0xf]
  %v1397 = vld [vmem:[%s15 + $0x39c] sm:$0xf]
  %v1398 = vld [vmem:[%s15 + $0x3a0] sm:$0xf]
  %v1399 = vld [vmem:[%s15 + $0x3a4] sm:$0xf]
  %v1400 = vld [vmem:[%s15 + $0x3a8] sm:$0xf]
  %v1401 = vld [vmem:[%s15 + $0x3ac] sm:$0xf]
  %v1402 = vld [vmem:[%s15 + $0x3b0] sm:$0xf]
  %v1403 = vld [vmem:[%s15 + $0x3b4] sm:$0xf]
  %v1404 = vld [vmem:[%s15 + $0x3b8] sm:$0xf]
  %v1405 = vld [vmem:[%s15 + $0x3bc] sm:$0xf]
  %v1406 = vld [vmem:[%s15 + $0x3c0] sm:$0xf]
  %v1407 = vld [vmem:[%s15 + $0x3c4] sm:$0xf]
  %v1408 = vld [vmem:[%s15 + $0x3c8] sm:$0xf]
  %v1409 = vld [vmem:[%s15 + $0x3cc] sm:$0xf]
  %v1410 = vld [vmem:[%s15 + $0x3d0] sm:$0xf]
  %v1411 = vld [vmem:[%s15 + $0x3d4] sm:$0xf]
  %v1412 = vld [vmem:[%s15 + $0x3d8] sm:$0xf]
  %v1413 = vld [vmem:[%s15 + $0x3dc] sm:$0xf]
  %v1414 = vld [vmem:[%s15 + $0x3e0] sm:$0xf]
  %v1415 = vld [vmem:[%s15 + $0x3e4] sm:$0xf]
  %v1416 = vld [vmem:[%s15 + $0x3e8] sm:$0xf]
  %v1417 = vld [vmem:[%s15 + $0x3ec] sm:$0xf]
  %v1418 = vld [vmem:[%s15 + $0x3f0] sm:$0xf]
  %v1419 = vld [vmem:[%s15 + $0x3f4] sm:$0xf]
  %v1420 = vld [vmem:[%s15 + $0x3f8] sm:$0xf]
  %v1421 = vld [vmem:[%s15 + $0x3fc] sm:$0xf]
  %v1422 = vld [vmem:[%s16] sm:$0x1]
  %v1424 = vperm.slane %v1422, 0
  %v1682 = vunpack.c.l.b16 %v1166
  %v1683 = vunpack.c.l.b16 %v1167
  %v1684 = vunpack.c.l.b16 %v1168
  %v1685 = vunpack.c.l.b16 %v1169
  %v1686 = vunpack.c.l.b16 %v1170
  %v1687 = vunpack.c.l.b16 %v1171
  %v1688 = vunpack.c.l.b16 %v1172
  %v1689 = vunpack.c.l.b16 %v1173
  %v1690 = vunpack.c.l.b16 %v1174
  %v1691 = vunpack.c.l.b16 %v1175
  %v1692 = vunpack.c.l.b16 %v1176
  %v1693 = vunpack.c.l.b16 %v1177
  %v1694 = vunpack.c.l.b16 %v1178
  %v1695 = vunpack.c.l.b16 %v1179
  %v1696 = vunpack.c.l.b16 %v1180
  %v1697 = vunpack.c.l.b16 %v1181
  %v1698 = vunpack.c.l.b16 %v1182
  %v1699 = vunpack.c.l.b16 %v1183
  %v1700 = vunpack.c.l.b16 %v1184
  %v1701 = vunpack.c.l.b16 %v1185
  %v1702 = vunpack.c.l.b16 %v1186
  %v1703 = vunpack.c.l.b16 %v1187
  %v1704 = vunpack.c.l.b16 %v1188
  %v1705 = vunpack.c.l.b16 %v1189
  %v1706 = vunpack.c.l.b16 %v1190
  %v1707 = vunpack.c.l.b16 %v1191
  %v1708 = vunpack.c.l.b16 %v1192
  %v1709 = vunpack.c.l.b16 %v1193
  %v1710 = vunpack.c.l.b16 %v1194
  %v1711 = vunpack.c.l.b16 %v1195
  %v1712 = vunpack.c.l.b16 %v1196
  %v1713 = vunpack.c.l.b16 %v1197
  %v1714 = vunpack.c.l.b16 %v1198
  %v1715 = vunpack.c.l.b16 %v1199
  %v1716 = vunpack.c.l.b16 %v1200
  %v1717 = vunpack.c.l.b16 %v1201
  %v1718 = vunpack.c.l.b16 %v1202
  %v1719 = vunpack.c.l.b16 %v1203
  %v1720 = vunpack.c.l.b16 %v1204
  %v1721 = vunpack.c.l.b16 %v1205
  %v1722 = vunpack.c.l.b16 %v1206
  %v1723 = vunpack.c.l.b16 %v1207
  %v1724 = vunpack.c.l.b16 %v1208
  %v1725 = vunpack.c.l.b16 %v1209
  %v1726 = vunpack.c.l.b16 %v1210
  %v1727 = vunpack.c.l.b16 %v1211
  %v1728 = vunpack.c.l.b16 %v1212
  %v1729 = vunpack.c.l.b16 %v1213
  %v1730 = vunpack.c.l.b16 %v1214
  %v1731 = vunpack.c.l.b16 %v1215
  %v1732 = vunpack.c.l.b16 %v1216
  %v1733 = vunpack.c.l.b16 %v1217
  %v1734 = vunpack.c.l.b16 %v1218
  %v1735 = vunpack.c.l.b16 %v1219
  %v1736 = vunpack.c.l.b16 %v1220
  %v1737 = vunpack.c.l.b16 %v1221
  %v1738 = vunpack.c.l.b16 %v1222
  %v1739 = vunpack.c.l.b16 %v1223
  %v1740 = vunpack.c.l.b16 %v1224
  %v1741 = vunpack.c.l.b16 %v1225
  %v1742 = vunpack.c.l.b16 %v1226
  %v1743 = vunpack.c.l.b16 %v1227
  %v1744 = vunpack.c.l.b16 %v1228
  %v1745 = vunpack.c.l.b16 %v1229
  %v1746 = vunpack.c.l.b16 %v1230
  %v1747 = vunpack.c.l.b16 %v1231
  %v1748 = vunpack.c.l.b16 %v1232
  %v1749 = vunpack.c.l.b16 %v1233
  %v1750 = vunpack.c.l.b16 %v1234
  %v1751 = vunpack.c.l.b16 %v1235
  %v1752 = vunpack.c.l.b16 %v1236
  %v1753 = vunpack.c.l.b16 %v1237
  %v1754 = vunpack.c.l.b16 %v1238
  %v1755 = vunpack.c.l.b16 %v1239
  %v1756 = vunpack.c.l.b16 %v1240
  %v1757 = vunpack.c.l.b16 %v1241
  %v1758 = vunpack.c.l.b16 %v1242
  %v1759 = vunpack.c.l.b16 %v1243
  %v1760 = vunpack.c.l.b16 %v1244
  %v1761 = vunpack.c.l.b16 %v1245
  %v1762 = vunpack.c.l.b16 %v1246
  %v1763 = vunpack.c.l.b16 %v1247
  %v1764 = vunpack.c.l.b16 %v1248
  %v1765 = vunpack.c.l.b16 %v1249
  %v1766 = vunpack.c.l.b16 %v1250
  %v1767 = vunpack.c.l.b16 %v1251
  %v1768 = vunpack.c.l.b16 %v1252
  %v1769 = vunpack.c.l.b16 %v1253
  %v1770 = vunpack.c.l.b16 %v1254
  %v1771 = vunpack.c.l.b16 %v1255
  %v1772 = vunpack.c.l.b16 %v1256
  %v1773 = vunpack.c.l.b16 %v1257
  %v1774 = vunpack.c.l.b16 %v1258
  %v1775 = vunpack.c.l.b16 %v1259
  %v1776 = vunpack.c.l.b16 %v1260
  %v1777 = vunpack.c.l.b16 %v1261
  %v1778 = vunpack.c.l.b16 %v1262
  %v1779 = vunpack.c.l.b16 %v1263
  %v1780 = vunpack.c.l.b16 %v1264
  %v1781 = vunpack.c.l.b16 %v1265
  %v1782 = vunpack.c.l.b16 %v1266
  %v1783 = vunpack.c.l.b16 %v1267
  %v1784 = vunpack.c.l.b16 %v1268
  %v1785 = vunpack.c.l.b16 %v1269
  %v1786 = vunpack.c.l.b16 %v1270
  %v1787 = vunpack.c.l.b16 %v1271
  %v1788 = vunpack.c.l.b16 %v1272
  %v1789 = vunpack.c.l.b16 %v1273
  %v1790 = vunpack.c.l.b16 %v1274
  %v1791 = vunpack.c.l.b16 %v1275
  %v1792 = vunpack.c.l.b16 %v1276
  %v1793 = vunpack.c.l.b16 %v1277
  %v1794 = vunpack.c.l.b16 %v1278
  %v1795 = vunpack.c.l.b16 %v1279
  %v1796 = vunpack.c.l.b16 %v1280
  %v1797 = vunpack.c.l.b16 %v1281
  %v1798 = vunpack.c.l.b16 %v1282
  %v1799 = vunpack.c.l.b16 %v1283
  %v1800 = vunpack.c.l.b16 %v1284
  %v1801 = vunpack.c.l.b16 %v1285
  %v1802 = vunpack.c.l.b16 %v1286
  %v1803 = vunpack.c.l.b16 %v1287
  %v1804 = vunpack.c.l.b16 %v1288
  %v1805 = vunpack.c.l.b16 %v1289
  %v1806 = vunpack.c.l.b16 %v1290
  %v1807 = vunpack.c.l.b16 %v1291
  %v1808 = vunpack.c.l.b16 %v1292
  %v1809 = vunpack.c.l.b16 %v1293
  %v1810 = vunpack.c.l.b16 %v1294
  %v1811 = vunpack.c.l.b16 %v1295
  %v1812 = vunpack.c.l.b16 %v1296
  %v1813 = vunpack.c.l.b16 %v1297
  %v1814 = vunpack.c.l.b16 %v1298
  %v1815 = vunpack.c.l.b16 %v1299
  %v1816 = vunpack.c.l.b16 %v1300
  %v1817 = vunpack.c.l.b16 %v1301
  %v1818 = vunpack.c.l.b16 %v1302
  %v1819 = vunpack.c.l.b16 %v1303
  %v1820 = vunpack.c.l.b16 %v1304
  %v1821 = vunpack.c.l.b16 %v1305
  %v1822 = vunpack.c.l.b16 %v1306
  %v1823 = vunpack.c.l.b16 %v1307
  %v1824 = vunpack.c.l.b16 %v1308
  %v1825 = vunpack.c.l.b16 %v1309
  %v1826 = vunpack.c.l.b16 %v1310
  %v1827 = vunpack.c.l.b16 %v1311
  %v1828 = vunpack.c.l.b16 %v1312
  %v1829 = vunpack.c.l.b16 %v1313
  %v1830 = vunpack.c.l.b16 %v1314
  %v1831 = vunpack.c.l.b16 %v1315
  %v1832 = vunpack.c.l.b16 %v1316
  %v1833 = vunpack.c.l.b16 %v1317
  %v1834 = vunpack.c.l.b16 %v1318
  %v1835 = vunpack.c.l.b16 %v1319
  %v1836 = vunpack.c.l.b16 %v1320
  %v1837 = vunpack.c.l.b16 %v1321
  %v1838 = vunpack.c.l.b16 %v1322
  %v1839 = vunpack.c.l.b16 %v1323
  %v1840 = vunpack.c.l.b16 %v1324
  %v1841 = vunpack.c.l.b16 %v1325
  %v1842 = vunpack.c.l.b16 %v1326
  %v1843 = vunpack.c.l.b16 %v1327
  %v1844 = vunpack.c.l.b16 %v1328
  %v1845 = vunpack.c.l.b16 %v1329
  %v1846 = vunpack.c.l.b16 %v1330
  %v1847 = vunpack.c.l.b16 %v1331
  %v1848 = vunpack.c.l.b16 %v1332
  %v1849 = vunpack.c.l.b16 %v1333
  %v1850 = vunpack.c.l.b16 %v1334
  %v1851 = vunpack.c.l.b16 %v1335
  %v1852 = vunpack.c.l.b16 %v1336
  %v1853 = vunpack.c.l.b16 %v1337
  %v1854 = vunpack.c.l.b16 %v1338
  %v1855 = vunpack.c.l.b16 %v1339
  %v1856 = vunpack.c.l.b16 %v1340
  %v1857 = vunpack.c.l.b16 %v1341
  %v1858 = vunpack.c.l.b16 %v1342
  %v1859 = vunpack.c.l.b16 %v1343
  %v1860 = vunpack.c.l.b16 %v1344
  %v1861 = vunpack.c.l.b16 %v1345
  %v1862 = vunpack.c.l.b16 %v1346
  %v1863 = vunpack.c.l.b16 %v1347
  %v1864 = vunpack.c.l.b16 %v1348
  %v1865 = vunpack.c.l.b16 %v1349
  %v1866 = vunpack.c.l.b16 %v1350
  %v1867 = vunpack.c.l.b16 %v1351
  %v1868 = vunpack.c.l.b16 %v1352
  %v1869 = vunpack.c.l.b16 %v1353
  %v1870 = vunpack.c.l.b16 %v1354
  %v1871 = vunpack.c.l.b16 %v1355
  %v1872 = vunpack.c.l.b16 %v1356
  %v1873 = vunpack.c.l.b16 %v1357
  %v1874 = vunpack.c.l.b16 %v1358
  %v1875 = vunpack.c.l.b16 %v1359
  %v1876 = vunpack.c.l.b16 %v1360
  %v1877 = vunpack.c.l.b16 %v1361
  %v1878 = vunpack.c.l.b16 %v1362
  %v1879 = vunpack.c.l.b16 %v1363
  %v1880 = vunpack.c.l.b16 %v1364
  %v1881 = vunpack.c.l.b16 %v1365
  %v1882 = vunpack.c.l.b16 %v1366
  %v1883 = vunpack.c.l.b16 %v1367
  %v1884 = vunpack.c.l.b16 %v1368
  %v1885 = vunpack.c.l.b16 %v1369
  %v1886 = vunpack.c.l.b16 %v1370
  %v1887 = vunpack.c.l.b16 %v1371
  %v1888 = vunpack.c.l.b16 %v1372
  %v1889 = vunpack.c.l.b16 %v1373
  %v1890 = vunpack.c.l.b16 %v1374
  %v1891 = vunpack.c.l.b16 %v1375
  %v1892 = vunpack.c.l.b16 %v1376
  %v1893 = vunpack.c.l.b16 %v1377
  %v1894 = vunpack.c.l.b16 %v1378
  %v1895 = vunpack.c.l.b16 %v1379
  %v1896 = vunpack.c.l.b16 %v1380
  %v1897 = vunpack.c.l.b16 %v1381
  %v1898 = vunpack.c.l.b16 %v1382
  %v1899 = vunpack.c.l.b16 %v1383
  %v1900 = vunpack.c.l.b16 %v1384
  %v1901 = vunpack.c.l.b16 %v1385
  %v1902 = vunpack.c.l.b16 %v1386
  %v1903 = vunpack.c.l.b16 %v1387
  %v1904 = vunpack.c.l.b16 %v1388
  %v1905 = vunpack.c.l.b16 %v1389
  %v1906 = vunpack.c.l.b16 %v1390
  %v1907 = vunpack.c.l.b16 %v1391
  %v1908 = vunpack.c.l.b16 %v1392
  %v1909 = vunpack.c.l.b16 %v1393
  %v1910 = vunpack.c.l.b16 %v1394
  %v1911 = vunpack.c.l.b16 %v1395
  %v1912 = vunpack.c.l.b16 %v1396
  %v1913 = vunpack.c.l.b16 %v1397
  %v1914 = vunpack.c.l.b16 %v1398
  %v1915 = vunpack.c.l.b16 %v1399
  %v1916 = vunpack.c.l.b16 %v1400
  %v1917 = vunpack.c.l.b16 %v1401
  %v1918 = vunpack.c.l.b16 %v1402
  %v1919 = vunpack.c.l.b16 %v1403
  %v1920 = vunpack.c.l.b16 %v1404
  %v1921 = vunpack.c.l.b16 %v1405
  %v1922 = vunpack.c.l.b16 %v1406
  %v1923 = vunpack.c.l.b16 %v1407
  %v1924 = vunpack.c.l.b16 %v1408
  %v1925 = vunpack.c.l.b16 %v1409
  %v1926 = vunpack.c.l.b16 %v1410
  %v1927 = vunpack.c.l.b16 %v1411
  %v1928 = vunpack.c.l.b16 %v1412
  %v1929 = vunpack.c.l.b16 %v1413
  %v1930 = vunpack.c.l.b16 %v1414
  %v1931 = vunpack.c.l.b16 %v1415
  %v1932 = vunpack.c.l.b16 %v1416
  %v1933 = vunpack.c.l.b16 %v1417
  %v1934 = vunpack.c.l.b16 %v1418
  %v1935 = vunpack.c.l.b16 %v1419
  %v1936 = vunpack.c.l.b16 %v1420
  %v1937 = vunpack.c.l.b16 %v1421
  %v1938 = vpack.c.b16 %v1683, %v1682
  %v1939 = vpack.c.b16 %v1685, %v1684
  %v1940 = vpack.c.b16 %v1687, %v1686
  %v1941 = vpack.c.b16 %v1689, %v1688
  %v1942 = vpack.c.b16 %v1691, %v1690
  %v1943 = vpack.c.b16 %v1693, %v1692
  %v1944 = vpack.c.b16 %v1695, %v1694
  %v1945 = vpack.c.b16 %v1697, %v1696
  %v1946 = vpack.c.b16 %v1699, %v1698
  %v1947 = vpack.c.b16 %v1701, %v1700
  %v1948 = vpack.c.b16 %v1703, %v1702
  %v1949 = vpack.c.b16 %v1705, %v1704
  %v1950 = vpack.c.b16 %v1707, %v1706
  %v1951 = vpack.c.b16 %v1709, %v1708
  %v1952 = vpack.c.b16 %v1711, %v1710
  %v1953 = vpack.c.b16 %v1713, %v1712
  %v1954 = vpack.c.b16 %v1715, %v1714
  %v1955 = vpack.c.b16 %v1717, %v1716
  %v1956 = vpack.c.b16 %v1719, %v1718
  %v1957 = vpack.c.b16 %v1721, %v1720
  %v1958 = vpack.c.b16 %v1723, %v1722
  %v1959 = vpack.c.b16 %v1725, %v1724
  %v1960 = vpack.c.b16 %v1727, %v1726
  %v1961 = vpack.c.b16 %v1729, %v1728
  %v1962 = vpack.c.b16 %v1731, %v1730
  %v1963 = vpack.c.b16 %v1733, %v1732
  %v1964 = vpack.c.b16 %v1735, %v1734
  %v1965 = vpack.c.b16 %v1737, %v1736
  %v1966 = vpack.c.b16 %v1739, %v1738
  %v1967 = vpack.c.b16 %v1741, %v1740
  %v1968 = vpack.c.b16 %v1743, %v1742
  %v1969 = vpack.c.b16 %v1745, %v1744
  %v1970 = vpack.c.b16 %v1747, %v1746
  %v1971 = vpack.c.b16 %v1749, %v1748
  %v1972 = vpack.c.b16 %v1751, %v1750
  %v1973 = vpack.c.b16 %v1753, %v1752
  %v1974 = vpack.c.b16 %v1755, %v1754
  %v1975 = vpack.c.b16 %v1757, %v1756
  %v1976 = vpack.c.b16 %v1759, %v1758
  %v1977 = vpack.c.b16 %v1761, %v1760
  %v1978 = vpack.c.b16 %v1763, %v1762
  %v1979 = vpack.c.b16 %v1765, %v1764
  %v1980 = vpack.c.b16 %v1767, %v1766
  %v1981 = vpack.c.b16 %v1769, %v1768
  %v1982 = vpack.c.b16 %v1771, %v1770
  %v1983 = vpack.c.b16 %v1773, %v1772
  %v1984 = vpack.c.b16 %v1775, %v1774
  %v1985 = vpack.c.b16 %v1777, %v1776
  %v1986 = vpack.c.b16 %v1779, %v1778
  %v1987 = vpack.c.b16 %v1781, %v1780
  %v1988 = vpack.c.b16 %v1783, %v1782
  %v1989 = vpack.c.b16 %v1785, %v1784
  %v1990 = vpack.c.b16 %v1787, %v1786
  %v1991 = vpack.c.b16 %v1789, %v1788
  %v1992 = vpack.c.b16 %v1791, %v1790
  %v1993 = vpack.c.b16 %v1793, %v1792
  %v1994 = vpack.c.b16 %v1795, %v1794
  %v1995 = vpack.c.b16 %v1797, %v1796
  %v1996 = vpack.c.b16 %v1799, %v1798
  %v1997 = vpack.c.b16 %v1801, %v1800
  %v1998 = vpack.c.b16 %v1803, %v1802
  %v1999 = vpack.c.b16 %v1805, %v1804
  %v2000 = vpack.c.b16 %v1807, %v1806
  %v2001 = vpack.c.b16 %v1809, %v1808
  %v2002 = vpack.c.b16 %v1811, %v1810
  %v2003 = vpack.c.b16 %v1813, %v1812
  %v2004 = vpack.c.b16 %v1815, %v1814
  %v2005 = vpack.c.b16 %v1817, %v1816
  %v2006 = vpack.c.b16 %v1819, %v1818
  %v2007 = vpack.c.b16 %v1821, %v1820
  %v2008 = vpack.c.b16 %v1823, %v1822
  %v2009 = vpack.c.b16 %v1825, %v1824
  %v2010 = vpack.c.b16 %v1827, %v1826
  %v2011 = vpack.c.b16 %v1829, %v1828
  %v2012 = vpack.c.b16 %v1831, %v1830
  %v2013 = vpack.c.b16 %v1833, %v1832
  %v2014 = vpack.c.b16 %v1835, %v1834
  %v2015 = vpack.c.b16 %v1837, %v1836
  %v2016 = vpack.c.b16 %v1839, %v1838
  %v2017 = vpack.c.b16 %v1841, %v1840
  %v2018 = vpack.c.b16 %v1843, %v1842
  %v2019 = vpack.c.b16 %v1845, %v1844
  %v2020 = vpack.c.b16 %v1847, %v1846
  %v2021 = vpack.c.b16 %v1849, %v1848
  %v2022 = vpack.c.b16 %v1851, %v1850
  %v2023 = vpack.c.b16 %v1853, %v1852
  %v2024 = vpack.c.b16 %v1855, %v1854
  %v2025 = vpack.c.b16 %v1857, %v1856
  %v2026 = vpack.c.b16 %v1859, %v1858
  %v2027 = vpack.c.b16 %v1861, %v1860
  %v2028 = vpack.c.b16 %v1863, %v1862
  %v2029 = vpack.c.b16 %v1865, %v1864
  %v2030 = vpack.c.b16 %v1867, %v1866
  %v2031 = vpack.c.b16 %v1869, %v1868
  %v2032 = vpack.c.b16 %v1871, %v1870
  %v2033 = vpack.c.b16 %v1873, %v1872
  %v2034 = vpack.c.b16 %v1875, %v1874
  %v2035 = vpack.c.b16 %v1877, %v1876
  %v2036 = vpack.c.b16 %v1879, %v1878
  %v2037 = vpack.c.b16 %v1881, %v1880
  %v2038 = vpack.c.b16 %v1883, %v1882
  %v2039 = vpack.c.b16 %v1885, %v1884
  %v2040 = vpack.c.b16 %v1887, %v1886
  %v2041 = vpack.c.b16 %v1889, %v1888
  %v2042 = vpack.c.b16 %v1891, %v1890
  %v2043 = vpack.c.b16 %v1893, %v1892
  %v2044 = vpack.c.b16 %v1895, %v1894
  %v2045 = vpack.c.b16 %v1897, %v1896
  %v2046 = vpack.c.b16 %v1899, %v1898
  %v2047 = vpack.c.b16 %v1901, %v1900
  %v2048 = vpack.c.b16 %v1903, %v1902
  %v2049 = vpack.c.b16 %v1905, %v1904
  %v2050 = vpack.c.b16 %v1907, %v1906
  %v2051 = vpack.c.b16 %v1909, %v1908
  %v2052 = vpack.c.b16 %v1911, %v1910
  %v2053 = vpack.c.b16 %v1913, %v1912
  %v2054 = vpack.c.b16 %v1915, %v1914
  %v2055 = vpack.c.b16 %v1917, %v1916
  %v2056 = vpack.c.b16 %v1919, %v1918
  %v2057 = vpack.c.b16 %v1921, %v1920
  %v2058 = vpack.c.b16 %v1923, %v1922
  %v2059 = vpack.c.b16 %v1925, %v1924
  %v2060 = vpack.c.b16 %v1927, %v1926
  %v2061 = vpack.c.b16 %v1929, %v1928
  %v2062 = vpack.c.b16 %v1931, %v1930
  %v2063 = vpack.c.b16 %v1933, %v1932
  %v2064 = vpack.c.b16 %v1935, %v1934
  %v2065 = vpack.c.b16 %v1937, %v1936
  %2194 = vmatpush.bf16.msra.mxu0 %v1945
  %2195 = vmatpush.bf16.msra.mxu0 %v1944
  %2196 = vmatpush.bf16.msra.mxu0 %v1943
  %2197 = vmatpush.bf16.msra.mxu0 %v1942
  %2198 = vmatpush.bf16.msra.mxu0 %v1941
  %2199 = vmatpush.bf16.msra.mxu0 %v1940
  %2200 = vmatpush.bf16.msra.mxu0 %v1939
  %2201 = vmatpush.bf16.msra.mxu0 %v1938
  %2202 = vmatmul.bf16.gmra.mxu0 %v1150
  %v2203 = vpop.f32.mrf.mxu0
  %v2204 = vadd.f32 %v1424, %v2203
  %v2205 = vpop.f32.mrf.mxu0
  %v2206 = vadd.f32 %v1424, %v2205
  %2207 = vdwg.mxu0
  %2208 = vmatpush.bf16.msra.mxu0 %v1953
  %2209 = vmatpush.bf16.msra.mxu0 %v1952
  %2210 = vmatpush.bf16.msra.mxu0 %v1951
  %2211 = vmatpush.bf16.msra.mxu0 %v1950
  %2212 = vmatpush.bf16.msra.mxu0 %v1949
  %2213 = vmatpush.bf16.msra.mxu0 %v1948
  %2214 = vmatpush.bf16.msra.mxu0 %v1947
  %2215 = vmatpush.bf16.msra.mxu0 %v1946
  %2216 = vmatmul.bf16.gmra.mxu0 %v1151
  %v2217 = vpop.f32.mrf.mxu0
  %v2218 = vadd.f32 %v2204, %v2217
  %v2219 = vpop.f32.mrf.mxu0
  %v2220 = vadd.f32 %v2206, %v2219
  %2221 = vdwg.mxu0
  %2222 = vmatpush.bf16.msra.mxu0 %v1961
  %2223 = vmatpush.bf16.msra.mxu0 %v1960
  %2224 = vmatpush.bf16.msra.mxu0 %v1959
  %2225 = vmatpush.bf16.msra.mxu0 %v1958
  %2226 = vmatpush.bf16.msra.mxu0 %v1957
  %2227 = vmatpush.bf16.msra.mxu0 %v1956
  %2228 = vmatpush.bf16.msra.mxu0 %v1955
  %2229 = vmatpush.bf16.msra.mxu0 %v1954
  %2230 = vmatmul.bf16.gmra.mxu0 %v1152
  %v2231 = vpop.f32.mrf.mxu0
  %v2232 = vadd.f32 %v2218, %v2231
  %v2233 = vpop.f32.mrf.mxu0
  %v2234 = vadd.f32 %v2220, %v2233
  %2235 = vdwg.mxu0
  %2236 = vmatpush.bf16.msra.mxu0 %v1969
  %2237 = vmatpush.bf16.msra.mxu0 %v1968
  %2238 = vmatpush.bf16.msra.mxu0 %v1967
  %2239 = vmatpush.bf16.msra.mxu0 %v1966
  %2240 = vmatpush.bf16.msra.mxu0 %v1965
  %2241 = vmatpush.bf16.msra.mxu0 %v1964
  %2242 = vmatpush.bf16.msra.mxu0 %v1963
  %2243 = vmatpush.bf16.msra.mxu0 %v1962
  %2244 = vmatmul.bf16.gmra.mxu0 %v1153
  %v2245 = vpop.f32.mrf.mxu0
  %v2246 = vadd.f32 %v2232, %v2245
  %v2247 = vpop.f32.mrf.mxu0
  %v2248 = vadd.f32 %v2234, %v2247
  %2249 = vdwg.mxu0
  %2250 = vmatpush.bf16.msra.mxu0 %v1977
  %2251 = vmatpush.bf16.msra.mxu0 %v1976
  %2252 = vmatpush.bf16.msra.mxu0 %v1975
  %2253 = vmatpush.bf16.msra.mxu0 %v1974
  %2254 = vmatpush.bf16.msra.mxu0 %v1973
  %2255 = vmatpush.bf16.msra.mxu0 %v1972
  %2256 = vmatpush.bf16.msra.mxu0 %v1971
  %2257 = vmatpush.bf16.msra.mxu0 %v1970
  %2258 = vmatmul.bf16.gmra.mxu0 %v1154
  %v2259 = vpop.f32.mrf.mxu0
  %v2260 = vadd.f32 %v2246, %v2259
  %v2261 = vpop.f32.mrf.mxu0
  %v2262 = vadd.f32 %v2248, %v2261
  %2263 = vdwg.mxu0
  %2264 = vmatpush.bf16.msra.mxu0 %v1985
  %2265 = vmatpush.bf16.msra.mxu0 %v1984
  %2266 = vmatpush.bf16.msra.mxu0 %v1983
  %2267 = vmatpush.bf16.msra.mxu0 %v1982
  %2268 = vmatpush.bf16.msra.mxu0 %v1981
  %2269 = vmatpush.bf16.msra.mxu0 %v1980
  %2270 = vmatpush.bf16.msra.mxu0 %v1979
  %2271 = vmatpush.bf16.msra.mxu0 %v1978
  %2272 = vmatmul.bf16.gmra.mxu0 %v1155
  %v2273 = vpop.f32.mrf.mxu0
  %v2274 = vadd.f32 %v2260, %v2273
  %v2275 = vpop.f32.mrf.mxu0
  %v2276 = vadd.f32 %v2262, %v2275
  %2277 = vdwg.mxu0
  %2278 = vmatpush.bf16.msra.mxu0 %v1993
  %2279 = vmatpush.bf16.msra.mxu0 %v1992
  %2280 = vmatpush.bf16.msra.mxu0 %v1991
  %2281 = vmatpush.bf16.msra.mxu0 %v1990
  %2282 = vmatpush.bf16.msra.mxu0 %v1989
  %2283 = vmatpush.bf16.msra.mxu0 %v1988
  %2284 = vmatpush.bf16.msra.mxu0 %v1987
  %2285 = vmatpush.bf16.msra.mxu0 %v1986
  %2286 = vmatmul.bf16.gmra.mxu0 %v1156
  %v2287 = vpop.f32.mrf.mxu0
  %v2288 = vadd.f32 %v2274, %v2287
  %v2289 = vpop.f32.mrf.mxu0
  %v2290 = vadd.f32 %v2276, %v2289
  %2291 = vdwg.mxu0
  %2292 = vmatpush.bf16.msra.mxu0 %v2001
  %2293 = vmatpush.bf16.msra.mxu0 %v2000
  %2294 = vmatpush.bf16.msra.mxu0 %v1999
  %2295 = vmatpush.bf16.msra.mxu0 %v1998
  %2296 = vmatpush.bf16.msra.mxu0 %v1997
  %2297 = vmatpush.bf16.msra.mxu0 %v1996
  %2298 = vmatpush.bf16.msra.mxu0 %v1995
  %2299 = vmatpush.bf16.msra.mxu0 %v1994
  %2300 = vmatmul.bf16.gmra.mxu0 %v1157
  %v2301 = vpop.f32.mrf.mxu0
  %v2302 = vadd.f32 %v2288, %v2301
  %v2303 = vpop.f32.mrf.mxu0
  %v2304 = vadd.f32 %v2290, %v2303
  %2305 = vdwg.mxu0
  %2306 = vmatpush.bf16.msra.mxu0 %v2009
  %2307 = vmatpush.bf16.msra.mxu0 %v2008
  %2308 = vmatpush.bf16.msra.mxu0 %v2007
  %2309 = vmatpush.bf16.msra.mxu0 %v2006
  %2310 = vmatpush.bf16.msra.mxu0 %v2005
  %2311 = vmatpush.bf16.msra.mxu0 %v2004
  %2312 = vmatpush.bf16.msra.mxu0 %v2003
  %2313 = vmatpush.bf16.msra.mxu0 %v2002
  %2314 = vmatmul.bf16.gmra.mxu0 %v1158
  %v2315 = vpop.f32.mrf.mxu0
  %v2316 = vadd.f32 %v2302, %v2315
  %v2317 = vpop.f32.mrf.mxu0
  %v2318 = vadd.f32 %v2304, %v2317
  %2319 = vdwg.mxu0
  %2320 = vmatpush.bf16.msra.mxu0 %v2017
  %2321 = vmatpush.bf16.msra.mxu0 %v2016
  %2322 = vmatpush.bf16.msra.mxu0 %v2015
  %2323 = vmatpush.bf16.msra.mxu0 %v2014
  %2324 = vmatpush.bf16.msra.mxu0 %v2013
  %2325 = vmatpush.bf16.msra.mxu0 %v2012
  %2326 = vmatpush.bf16.msra.mxu0 %v2011
  %2327 = vmatpush.bf16.msra.mxu0 %v2010
  %2328 = vmatmul.bf16.gmra.mxu0 %v1159
  %v2329 = vpop.f32.mrf.mxu0
  %v2330 = vadd.f32 %v2316, %v2329
  %v2331 = vpop.f32.mrf.mxu0
  %v2332 = vadd.f32 %v2318, %v2331
  %2333 = vdwg.mxu0
  %2334 = vmatpush.bf16.msra.mxu0 %v2025
  %2335 = vmatpush.bf16.msra.mxu0 %v2024
  %2336 = vmatpush.bf16.msra.mxu0 %v2023
  %2337 = vmatpush.bf16.msra.mxu0 %v2022
  %2338 = vmatpush.bf16.msra.mxu0 %v2021
  %2339 = vmatpush.bf16.msra.mxu0 %v2020
  %2340 = vmatpush.bf16.msra.mxu0 %v2019
  %2341 = vmatpush.bf16.msra.mxu0 %v2018
  %2342 = vmatmul.bf16.gmra.mxu0 %v1160
  %v2343 = vpop.f32.mrf.mxu0
  %v2344 = vadd.f32 %v2330, %v2343
  %v2345 = vpop.f32.mrf.mxu0
  %v2346 = vadd.f32 %v2332, %v2345
  %2347 = vdwg.mxu0
  %2348 = vmatpush.bf16.msra.mxu0 %v2033
  %2349 = vmatpush.bf16.msra.mxu0 %v2032
  %2350 = vmatpush.bf16.msra.mxu0 %v2031
  %2351 = vmatpush.bf16.msra.mxu0 %v2030
  %2352 = vmatpush.bf16.msra.mxu0 %v2029
  %2353 = vmatpush.bf16.msra.mxu0 %v2028
  %2354 = vmatpush.bf16.msra.mxu0 %v2027
  %2355 = vmatpush.bf16.msra.mxu0 %v2026
  %2356 = vmatmul.bf16.gmra.mxu0 %v1161
  %v2357 = vpop.f32.mrf.mxu0
  %v2358 = vadd.f32 %v2344, %v2357
  %v2359 = vpop.f32.mrf.mxu0
  %v2360 = vadd.f32 %v2346, %v2359
  %2361 = vdwg.mxu0
  %2362 = vmatpush.bf16.msra.mxu0 %v2041
  %2363 = vmatpush.bf16.msra.mxu0 %v2040
  %2364 = vmatpush.bf16.msra.mxu0 %v2039
  %2365 = vmatpush.bf16.msra.mxu0 %v2038
  %2366 = vmatpush.bf16.msra.mxu0 %v2037
  %2367 = vmatpush.bf16.msra.mxu0 %v2036
  %2368 = vmatpush.bf16.msra.mxu0 %v2035
  %2369 = vmatpush.bf16.msra.mxu0 %v2034
  %2370 = vmatmul.bf16.gmra.mxu0 %v1162
  %v2371 = vpop.f32.mrf.mxu0
  %v2372 = vadd.f32 %v2358, %v2371
  %v2373 = vpop.f32.mrf.mxu0
  %v2374 = vadd.f32 %v2360, %v2373
  %2375 = vdwg.mxu0
  %2376 = vmatpush.bf16.msra.mxu0 %v2049
  %2377 = vmatpush.bf16.msra.mxu0 %v2048
  %2378 = vmatpush.bf16.msra.mxu0 %v2047
  %2379 = vmatpush.bf16.msra.mxu0 %v2046
  %2380 = vmatpush.bf16.msra.mxu0 %v2045
  %2381 = vmatpush.bf16.msra.mxu0 %v2044
  %2382 = vmatpush.bf16.msra.mxu0 %v2043
  %2383 = vmatpush.bf16.msra.mxu0 %v2042
  %2384 = vmatmul.bf16.gmra.mxu0 %v1163
  %v2385 = vpop.f32.mrf.mxu0
  %v2386 = vadd.f32 %v2372, %v2385
  %v2387 = vpop.f32.mrf.mxu0
  %v2388 = vadd.f32 %v2374, %v2387
  %2389 = vdwg.mxu0
  %2390 = vmatpush.bf16.msra.mxu0 %v2057
  %2391 = vmatpush.bf16.msra.mxu0 %v2056
  %2392 = vmatpush.bf16.msra.mxu0 %v2055
  %2393 = vmatpush.bf16.msra.mxu0 %v2054
  %2394 = vmatpush.bf16.msra.mxu0 %v2053
  %2395 = vmatpush.bf16.msra.mxu0 %v2052
  %2396 = vmatpush.bf16.msra.mxu0 %v2051
  %2397 = vmatpush.bf16.msra.mxu0 %v2050
  %2398 = vmatmul.bf16.gmra.mxu0 %v1164
  %v2399 = vpop.f32.mrf.mxu0
  %v2400 = vadd.f32 %v2386, %v2399
  %v2401 = vpop.f32.mrf.mxu0
  %v2402 = vadd.f32 %v2388, %v2401
  %2403 = vdwg.mxu0
  %2404 = vmatpush.bf16.msra.mxu0 %v2065
  %2405 = vmatpush.bf16.msra.mxu0 %v2064
  %2406 = vmatpush.bf16.msra.mxu0 %v2063
  %2407 = vmatpush.bf16.msra.mxu0 %v2062
  %2408 = vmatpush.bf16.msra.mxu0 %v2061
  %2409 = vmatpush.bf16.msra.mxu0 %v2060
  %2410 = vmatpush.bf16.msra.mxu0 %v2059
  %2411 = vmatpush.bf16.msra.mxu0 %v2058
  %2412 = vmatmul.bf16.gmra.mxu0 %v1165
  %v2413 = vpop.f32.mrf.mxu0
  %v2414 = vadd.f32 %v2400, %v2413
  %v2415 = vpop.f32.mrf.mxu0
  %v2416 = vadd.f32 %v2402, %v2415
  %2417 = vdwg.mxu0
  %v2418 = vadd.f32 %v660, %v2414
  %v2419 = vadd.f32 %v661, %v2416
  %v2420 = vld [vmem:[%s11] sm:$0x1]
  %v2421 = vld [vmem:[%s12] sm:$0x1]
  %v2422 = vsel %vm72, %v2418, 0.0
  %2423 = vadd.xlane.f32.xlu0 %v2422
  %v2424 = vpop.xlane.xlu0 %2423
  %v2425 = vsel %vm72, %v2419, 0.0
  %2426 = vadd.xlane.f32.xlu0 %v2425
  %v2427 = vpop.xlane.xlu0 %2426
  %v2428 = vmul.f32 %v2424, %v613
  %v2429 = vmul.f32 %v2427, %v613
  %v2430 = vsub.f32 %v2418, %v2428
  %v2431 = vsub.f32 %v2419, %v2429
  %v2432 = vmul.f32 %v2430, %v2430
  %v2433 = vmul.f32 %v2431, %v2431
  %v2434 = vsel %vm72, %v2432, 0.0
  %2435 = vadd.xlane.f32.xlu0 %v2434
  %v2436 = vpop.xlane.xlu0 %2435
  %v2437 = vsel %vm72, %v2433, 0.0
  %2438 = vadd.xlane.f32.xlu0 %v2437
  %v2439 = vpop.xlane.xlu0 %2438
  %v2440 = vmul.f32 %v2436, %v613
  %v2441 = vmul.f32 %v2439, %v613
  %v2442 = vadd.f32 %v2440, 1e-05
  %v2443 = vadd.f32 %v2441, 1e-05
  %v2444 = vrsqrt.pop %v2442
  %v2445 = vmul.f32 %v2444, %v2442
  %v2446 = vmul.f32 %v2445, %v2444
  %v2447 = vmul.f32 0.5, %v2446
  %v2448 = vsub.f32 1.5, %v2447
  %v2449 = vmul.f32 %v2444, %v2448
  %vm2450 = vweird.f32 %v2442
  %vm2451 = vweird.f32 %v2444
  %vm2452 = vmor %vm2450, %vm2451
  %v2453 = vsel %vm2452, %v2444, %v2449
  %v2454 = vrsqrt.pop %v2443
  %v2455 = vmul.f32 %v2454, %v2443
  %v2456 = vmul.f32 %v2455, %v2454
  %v2457 = vmul.f32 0.5, %v2456
  %v2458 = vsub.f32 1.5, %v2457
  %v2459 = vmul.f32 %v2454, %v2458
  %vm2460 = vweird.f32 %v2443
  %vm2461 = vweird.f32 %v2454
  %vm2462 = vmor %vm2460, %vm2461
  %v2463 = vsel %vm2462, %v2454, %v2459
  %v2464 = vmul.f32 %v2430, %v2453
  %v2465 = vmul.f32 %v2431, %v2463
  %v2467 = vperm.slane %v2420, 0
  %v2469 = vmul.f32 %v2464, %v2467
  %v2470 = vmul.f32 %v2465, %v2467
  %v2472 = vperm.slane %v2421, 0
  %v2474 = vadd.f32 %v2469, %v2472
  %v2475 = vadd.f32 %v2470, %v2472
  %s2476 = scalar_lea.vmem %s5, 32
  %v2477 = vld [vmem:[%s2476] sm:$0xff]
  %v2478 = vld [vmem:[%s2476 + $0x8] sm:$0xff]
  %v2479 = vld [vmem:[%s2476 + $0x10] sm:$0xff]
  %v2480 = vld [vmem:[%s2476 + $0x18] sm:$0xff]
  %s2481 = scalar_lea.vmem %s6, 1
  %v2482 = vld [vmem:[%s2481] sm:$0x1]
  %v2484 = vperm.slane %v2482, 0
  %v2487 = vsel %vm72, %v2474, 0
  %v2490 = vsel %vm72, %v2475, 0
  %2492 = vmatpush.msra.mxu0 0.0
  %2493 = vmatpush.msra.mxu0 0.0
  %2494 = vmatpush.msra.mxu0 0.0
  %2495 = vmatpush.msra.mxu0 0.0
  %2496 = vmatpush.msra.mxu0 0.0
  %2497 = vmatpush.msra.mxu0 0.0
  %2498 = vmatpush.msra.mxu0 0.0
  %2499 = vmatpush.msra.mxu0 0.0
  %2500 = vmatpush.msra.mxu0 0.0
  %2501 = vmatpush.msra.mxu0 0.0
  %2502 = vmatpush.msra.mxu0 0.0
  %2503 = vmatpush.msra.mxu0 0.0
  %2504 = vmatpush.msra.mxu0 %v2480
  %2505 = vmatpush.msra.mxu0 %v2479
  %2506 = vmatpush.msra.mxu0 %v2478
  %2507 = vmatpush.msra.mxu0 %v2477
  %2508 = vmatmul.f32.gmra.mxu0 %v2487
  %v2509 = vpop.f32.mrf.mxu0
  %v2510 = vadd.f32 %v2484, %v2509
  %2511 = vmatmul.f32.gmra.mxu0 %v2490
  %v2512 = vpop.f32.mrf.mxu0
  %v2513 = vadd.f32 %v2484, %v2512
  %2514 = vdwg.mxu0
  %2517 = vrot.lane.b32.xlu0 %v2510, 96
  %v2518 = vpop.permute.xlu0 %2517
  %2519 = vrot.lane.b32.xlu0 %v2513, 96
  %v2520 = vpop.permute.xlu0 %2519
  %v2521 = vsel %vm145, %v2510, 0
  %v2523 = vsel %vm145, %v2513, 0
  %v2525 = vsel %vm145, %v2518, 0
  %v2527 = vsel %vm145, %v2520, 0
  %2529 = vmatpush.xpose.msra.mxu0 0.0
  %2530 = vmatpush.xpose.msra.mxu0 0.0
  %2531 = vmatpush.xpose.msra.mxu0 0.0
  %2532 = vmatpush.xpose.msra.mxu0 0.0
  %2533 = vmatpush.xpose.msra.mxu0 0.0
  %2534 = vmatpush.xpose.msra.mxu0 0.0
  %2535 = vmatpush.xpose.msra.mxu0 0.0
  %2536 = vmatpush.xpose.msra.mxu0 0.0
  %2537 = vmatpush.xpose.msra.mxu0 0.0
  %2538 = vmatpush.xpose.msra.mxu0 0.0
  %2539 = vmatpush.xpose.msra.mxu0 0.0
  %2540 = vmatpush.xpose.msra.mxu0 0.0
  %2541 = vmatpush.xpose.msra.mxu0 0.0
  %2542 = vmatpush.xpose.msra.mxu0 0.0
  %2543 = vmatpush.xpose.msra.mxu0 %v2527
  %2544 = vmatpush.xpose.msra.mxu0 %v2525
  %2545 = vmatmul.f32.gmra.mxu0 %v2521
  %v2546 = vpop.f32.mrf.mxu0
  %v2547 = vadd.f32 %v60, %v2546
  %2548 = vmatmul.f32.gmra.mxu0 %v2523
  %v2549 = vpop.f32.mrf.mxu0
  %v2550 = vadd.f32 %v61, %v2549
  %2551 = vdwg.mxu0
  %v2552 = vsel %vm177, %v2547, -inf
  %2553 = vmax.xlane.f32.xlu0 %v2552
  %v2554 = vpop.xlane.xlu0 %2553
  %v2555 = vsel %vm177, %v2550, -inf
  %2556 = vmax.xlane.f32.xlu0 %v2555
  %v2557 = vpop.xlane.xlu0 %2556
  %v2558 = vsub.f32 %v2547, %v2554
  %v2559 = vsub.f32 %v2550, %v2557
  %v2560 = vmul.f32 %v2558, 1.442695
  %v2561 = vpow.pop %v2560
  %v2562 = vmul.f32 %v2559, 1.442695
  %v2563 = vpow.pop %v2562
  %v2564 = vsel %vm177, %v2561, 0.0
  %2565 = vadd.xlane.f32.xlu0 %v2564
  %v2566 = vpop.xlane.xlu0 %2565
  %v2567 = vsel %vm177, %v2563, 0.0
  %2568 = vadd.xlane.f32.xlu0 %v2567
  %v2569 = vpop.xlane.xlu0 %2568
  %v2570 = vrcp.pop %v2566
  %v2571 = vrcp.pop %v2569
  %v2572 = vmul.f32 %v2561, %v2570
  %v2573 = vmul.f32 %v2563, %v2571
  %2574 = vrot.lane.b32.xlu0 %v2510, 64
  %v2575 = vpop.permute.xlu0 %2574
  %2576 = vrot.lane.b32.xlu0 %v2513, 64
  %v2577 = vpop.permute.xlu0 %2576
  %v2581 = vsel %vm177, %v2572, 0
  %v2584 = vsel %vm177, %v2573, 0
  %2586 = vmatpush.msra.mxu0 0.0
  %2587 = vmatpush.msra.mxu0 0.0
  %2588 = vmatpush.msra.mxu0 0.0
  %2589 = vmatpush.msra.mxu0 0.0
  %2590 = vmatpush.msra.mxu0 0.0
  %2591 = vmatpush.msra.mxu0 0.0
  %2592 = vmatpush.msra.mxu0 0.0
  %2593 = vmatpush.msra.mxu0 0.0
  %2594 = vmatpush.msra.mxu0 0.0
  %2595 = vmatpush.msra.mxu0 0.0
  %2596 = vmatpush.msra.mxu0 0.0
  %2597 = vmatpush.msra.mxu0 0.0
  %2598 = vmatpush.msra.mxu0 0.0
  %2599 = vmatpush.msra.mxu0 0.0
  %2600 = vmatpush.msra.mxu0 %v2577
  %2601 = vmatpush.msra.mxu0 %v2575
  %2602 = vmatmul.f32.gmra.mxu0 %v2581
  %v2603 = vpop.f32.mrf.mxu0
  %v2604 = vadd.f32 0.0, %v2603
  %2605 = vmatmul.f32.gmra.mxu0 %v2584
  %v2606 = vpop.f32.mrf.mxu0
  %v2607 = vadd.f32 0.0, %v2606
  %2608 = vdwg.mxu0
  %2609 = vst.msk [vmem:[#allocation2] sm:$0xff] %vm145, %v2604
  %2610 = vst.msk [vmem:[#allocation2 + $0x8] sm:$0xff] %vm145, %v2607
  %2611 = vrot.lane.b32.xlu0 %v2510, 120
  %v2612 = vpop.permute.xlu0 %2611
  %2613 = vrot.lane.b32.xlu0 %v2513, 120
  %v2614 = vpop.permute.xlu0 %2613
  %2615 = vrot.lane.b32.xlu0 %v2510, 88
  %v2616 = vpop.permute.xlu0 %2615
  %2617 = vrot.lane.b32.xlu0 %v2513, 88
  %v2618 = vpop.permute.xlu0 %2617
  %v2619 = vsel %vm145, %v2612, 0
  %v2621 = vsel %vm145, %v2614, 0
  %v2623 = vsel %vm145, %v2616, 0
  %v2625 = vsel %vm145, %v2618, 0
  %2627 = vmatpush.xpose.msra.mxu0 0.0
  %2628 = vmatpush.xpose.msra.mxu0 0.0
  %2629 = vmatpush.xpose.msra.mxu0 0.0
  %2630 = vmatpush.xpose.msra.mxu0 0.0
  %2631 = vmatpush.xpose.msra.mxu0 0.0
  %2632 = vmatpush.xpose.msra.mxu0 0.0
  %2633 = vmatpush.xpose.msra.mxu0 0.0
  %2634 = vmatpush.xpose.msra.mxu0 0.0
  %2635 = vmatpush.xpose.msra.mxu0 0.0
  %2636 = vmatpush.xpose.msra.mxu0 0.0
  %2637 = vmatpush.xpose.msra.mxu0 0.0
  %2638 = vmatpush.xpose.msra.mxu0 0.0
  %2639 = vmatpush.xpose.msra.mxu0 0.0
  %2640 = vmatpush.xpose.msra.mxu0 0.0
  %2641 = vmatpush.xpose.msra.mxu0 %v2625
  %2642 = vmatpush.xpose.msra.mxu0 %v2623
  %2643 = vmatmul.f32.gmra.mxu0 %v2619
  %v2644 = vpop.f32.mrf.mxu0
  %v2645 = vadd.f32 %v60, %v2644
  %2646 = vmatmul.f32.gmra.mxu0 %v2621
  %v2647 = vpop.f32.mrf.mxu0
  %v2648 = vadd.f32 %v61, %v2647
  %2649 = vdwg.mxu0
  %v2650 = vsel %vm177, %v2645, -inf
  %2651 = vmax.xlane.f32.xlu0 %v2650
  %v2652 = vpop.xlane.xlu0 %2651
  %v2653 = vsel %vm177, %v2648, -inf
  %2654 = vmax.xlane.f32.xlu0 %v2653
  %v2655 = vpop.xlane.xlu0 %2654
  %v2656 = vsub.f32 %v2645, %v2652
  %v2657 = vsub.f32 %v2648, %v2655
  %v2658 = vmul.f32 %v2656, 1.442695
  %v2659 = vpow.pop %v2658
  %v2660 = vmul.f32 %v2657, 1.442695
  %v2661 = vpow.pop %v2660
  %v2662 = vsel %vm177, %v2659, 0.0
  %2663 = vadd.xlane.f32.xlu0 %v2662
  %v2664 = vpop.xlane.xlu0 %2663
  %v2665 = vsel %vm177, %v2661, 0.0
  %2666 = vadd.xlane.f32.xlu0 %v2665
  %v2667 = vpop.xlane.xlu0 %2666
  %v2668 = vrcp.pop %v2664
  %v2669 = vrcp.pop %v2667
  %v2670 = vmul.f32 %v2659, %v2668
  %v2671 = vmul.f32 %v2661, %v2669
  %2672 = vrot.lane.b32.xlu0 %v2510, 56
  %v2673 = vpop.permute.xlu0 %2672
  %2674 = vrot.lane.b32.xlu0 %v2513, 56
  %v2675 = vpop.permute.xlu0 %2674
  %v2679 = vsel %vm177, %v2670, 0
  %v2682 = vsel %vm177, %v2671, 0
  %2684 = vmatpush.msra.mxu0 0.0
  %2685 = vmatpush.msra.mxu0 0.0
  %2686 = vmatpush.msra.mxu0 0.0
  %2687 = vmatpush.msra.mxu0 0.0
  %2688 = vmatpush.msra.mxu0 0.0
  %2689 = vmatpush.msra.mxu0 0.0
  %2690 = vmatpush.msra.mxu0 0.0
  %2691 = vmatpush.msra.mxu0 0.0
  %2692 = vmatpush.msra.mxu0 0.0
  %2693 = vmatpush.msra.mxu0 0.0
  %2694 = vmatpush.msra.mxu0 0.0
  %2695 = vmatpush.msra.mxu0 0.0
  %2696 = vmatpush.msra.mxu0 0.0
  %2697 = vmatpush.msra.mxu0 0.0
  %2698 = vmatpush.msra.mxu0 %v2675
  %2699 = vmatpush.msra.mxu0 %v2673
  %2700 = vmatmul.f32.gmra.mxu0 %v2679
  %v2701 = vpop.f32.mrf.mxu0
  %v2702 = vadd.f32 0.0, %v2701
  %2703 = vmatmul.f32.gmra.mxu0 %v2682
  %v2704 = vpop.f32.mrf.mxu0
  %v2705 = vadd.f32 0.0, %v2704
  %2706 = vdwg.mxu0
  %2709 = vrot.lane.b32.xlu0 %v2702, 8
  %v2710 = vpop.permute.xlu0 %2709
  %2711 = vrot.lane.b32.xlu0 %v2705, 8
  %v2712 = vpop.permute.xlu0 %2711
  %2715 = vst.msk [vmem:[#allocation2] sm:$0xff] %vm341, %v2710
  %2716 = vst.msk [vmem:[#allocation2 + $0x8] sm:$0xff] %vm341, %v2712
  %2717 = vrot.lane.b32.xlu0 %v2510, 112
  %v2718 = vpop.permute.xlu0 %2717
  %2719 = vrot.lane.b32.xlu0 %v2513, 112
  %v2720 = vpop.permute.xlu0 %2719
  %2721 = vrot.lane.b32.xlu0 %v2510, 80
  %v2722 = vpop.permute.xlu0 %2721
  %2723 = vrot.lane.b32.xlu0 %v2513, 80
  %v2724 = vpop.permute.xlu0 %2723
  %v2725 = vsel %vm145, %v2718, 0
  %v2727 = vsel %vm145, %v2720, 0
  %v2729 = vsel %vm145, %v2722, 0
  %v2731 = vsel %vm145, %v2724, 0
  %2733 = vmatpush.xpose.msra.mxu0 0.0
  %2734 = vmatpush.xpose.msra.mxu0 0.0
  %2735 = vmatpush.xpose.msra.mxu0 0.0
  %2736 = vmatpush.xpose.msra.mxu0 0.0
  %2737 = vmatpush.xpose.msra.mxu0 0.0
  %2738 = vmatpush.xpose.msra.mxu0 0.0
  %2739 = vmatpush.xpose.msra.mxu0 0.0
  %2740 = vmatpush.xpose.msra.mxu0 0.0
  %2741 = vmatpush.xpose.msra.mxu0 0.0
  %2742 = vmatpush.xpose.msra.mxu0 0.0
  %2743 = vmatpush.xpose.msra.mxu0 0.0
  %2744 = vmatpush.xpose.msra.mxu0 0.0
  %2745 = vmatpush.xpose.msra.mxu0 0.0
  %2746 = vmatpush.xpose.msra.mxu0 0.0
  %2747 = vmatpush.xpose.msra.mxu0 %v2731
  %2748 = vmatpush.xpose.msra.mxu0 %v2729
  %2749 = vmatmul.f32.gmra.mxu0 %v2725
  %v2750 = vpop.f32.mrf.mxu0
  %v2751 = vadd.f32 %v60, %v2750
  %2752 = vmatmul.f32.gmra.mxu0 %v2727
  %v2753 = vpop.f32.mrf.mxu0
  %v2754 = vadd.f32 %v61, %v2753
  %2755 = vdwg.mxu0
  %v2756 = vsel %vm177, %v2751, -inf
  %2757 = vmax.xlane.f32.xlu0 %v2756
  %v2758 = vpop.xlane.xlu0 %2757
  %v2759 = vsel %vm177, %v2754, -inf
  %2760 = vmax.xlane.f32.xlu0 %v2759
  %v2761 = vpop.xlane.xlu0 %2760
  %v2762 = vsub.f32 %v2751, %v2758
  %v2763 = vsub.f32 %v2754, %v2761
  %v2764 = vmul.f32 %v2762, 1.442695
  %v2765 = vpow.pop %v2764
  %v2766 = vmul.f32 %v2763, 1.442695
  %v2767 = vpow.pop %v2766
  %v2768 = vsel %vm177, %v2765, 0.0
  %2769 = vadd.xlane.f32.xlu0 %v2768
  %v2770 = vpop.xlane.xlu0 %2769
  %v2771 = vsel %vm177, %v2767, 0.0
  %2772 = vadd.xlane.f32.xlu0 %v2771
  %v2773 = vpop.xlane.xlu0 %2772
  %v2774 = vrcp.pop %v2770
  %v2775 = vrcp.pop %v2773
  %v2776 = vmul.f32 %v2765, %v2774
  %v2777 = vmul.f32 %v2767, %v2775
  %2778 = vrot.lane.b32.xlu0 %v2510, 48
  %v2779 = vpop.permute.xlu0 %2778
  %2780 = vrot.lane.b32.xlu0 %v2513, 48
  %v2781 = vpop.permute.xlu0 %2780
  %v2785 = vsel %vm177, %v2776, 0
  %v2788 = vsel %vm177, %v2777, 0
  %2790 = vmatpush.msra.mxu0 0.0
  %2791 = vmatpush.msra.mxu0 0.0
  %2792 = vmatpush.msra.mxu0 0.0
  %2793 = vmatpush.msra.mxu0 0.0
  %2794 = vmatpush.msra.mxu0 0.0
  %2795 = vmatpush.msra.mxu0 0.0
  %2796 = vmatpush.msra.mxu0 0.0
  %2797 = vmatpush.msra.mxu0 0.0
  %2798 = vmatpush.msra.mxu0 0.0
  %2799 = vmatpush.msra.mxu0 0.0
  %2800 = vmatpush.msra.mxu0 0.0
  %2801 = vmatpush.msra.mxu0 0.0
  %2802 = vmatpush.msra.mxu0 0.0
  %2803 = vmatpush.msra.mxu0 0.0
  %2804 = vmatpush.msra.mxu0 %v2781
  %2805 = vmatpush.msra.mxu0 %v2779
  %2806 = vmatmul.f32.gmra.mxu0 %v2785
  %v2807 = vpop.f32.mrf.mxu0
  %v2808 = vadd.f32 0.0, %v2807
  %2809 = vmatmul.f32.gmra.mxu0 %v2788
  %v2810 = vpop.f32.mrf.mxu0
  %v2811 = vadd.f32 0.0, %v2810
  %2812 = vdwg.mxu0
  %2815 = vrot.lane.b32.xlu0 %v2808, 16
  %v2816 = vpop.permute.xlu0 %2815
  %2817 = vrot.lane.b32.xlu0 %v2811, 16
  %v2818 = vpop.permute.xlu0 %2817
  %2821 = vst.msk [vmem:[#allocation2] sm:$0xff] %vm448, %v2816
  %2822 = vst.msk [vmem:[#allocation2 + $0x8] sm:$0xff] %vm448, %v2818
  %2823 = vrot.lane.b32.xlu0 %v2510, 104
  %v2824 = vpop.permute.xlu0 %2823
  %2825 = vrot.lane.b32.xlu0 %v2513, 104
  %v2826 = vpop.permute.xlu0 %2825
  %2827 = vrot.lane.b32.xlu0 %v2510, 72
  %v2828 = vpop.permute.xlu0 %2827
  %2829 = vrot.lane.b32.xlu0 %v2513, 72
  %v2830 = vpop.permute.xlu0 %2829
  %v2831 = vsel %vm145, %v2824, 0
  %v2833 = vsel %vm145, %v2826, 0
  %v2835 = vsel %vm145, %v2828, 0
  %v2837 = vsel %vm145, %v2830, 0
  %2839 = vmatpush.xpose.msra.mxu0 0.0
  %2840 = vmatpush.xpose.msra.mxu0 0.0
  %2841 = vmatpush.xpose.msra.mxu0 0.0
  %2842 = vmatpush.xpose.msra.mxu0 0.0
  %2843 = vmatpush.xpose.msra.mxu0 0.0
  %2844 = vmatpush.xpose.msra.mxu0 0.0
  %2845 = vmatpush.xpose.msra.mxu0 0.0
  %2846 = vmatpush.xpose.msra.mxu0 0.0
  %2847 = vmatpush.xpose.msra.mxu0 0.0
  %2848 = vmatpush.xpose.msra.mxu0 0.0
  %2849 = vmatpush.xpose.msra.mxu0 0.0
  %2850 = vmatpush.xpose.msra.mxu0 0.0
  %2851 = vmatpush.xpose.msra.mxu0 0.0
  %2852 = vmatpush.xpose.msra.mxu0 0.0
  %2853 = vmatpush.xpose.msra.mxu0 %v2837
  %2854 = vmatpush.xpose.msra.mxu0 %v2835
  %2855 = vmatmul.f32.gmra.mxu0 %v2831
  %v2856 = vpop.f32.mrf.mxu0
  %v2857 = vadd.f32 %v60, %v2856
  %2858 = vmatmul.f32.gmra.mxu0 %v2833
  %v2859 = vpop.f32.mrf.mxu0
  %v2860 = vadd.f32 %v61, %v2859
  %2861 = vdwg.mxu0
  %v2862 = vsel %vm177, %v2857, -inf
  %2863 = vmax.xlane.f32.xlu0 %v2862
  %v2864 = vpop.xlane.xlu0 %2863
  %v2865 = vsel %vm177, %v2860, -inf
  %2866 = vmax.xlane.f32.xlu0 %v2865
  %v2867 = vpop.xlane.xlu0 %2866
  %v2868 = vsub.f32 %v2857, %v2864
  %v2869 = vsub.f32 %v2860, %v2867
  %v2870 = vmul.f32 %v2868, 1.442695
  %v2871 = vpow.pop %v2870
  %v2872 = vmul.f32 %v2869, 1.442695
  %v2873 = vpow.pop %v2872
  %v2874 = vsel %vm177, %v2871, 0.0
  %2875 = vadd.xlane.f32.xlu0 %v2874
  %v2876 = vpop.xlane.xlu0 %2875
  %v2877 = vsel %vm177, %v2873, 0.0
  %2878 = vadd.xlane.f32.xlu0 %v2877
  %v2879 = vpop.xlane.xlu0 %2878
  %v2880 = vrcp.pop %v2876
  %v2881 = vrcp.pop %v2879
  %v2882 = vmul.f32 %v2871, %v2880
  %v2883 = vmul.f32 %v2873, %v2881
  %2884 = vrot.lane.b32.xlu0 %v2510, 40
  %v2885 = vpop.permute.xlu0 %2884
  %2886 = vrot.lane.b32.xlu0 %v2513, 40
  %v2887 = vpop.permute.xlu0 %2886
  %v2891 = vsel %vm177, %v2882, 0
  %v2894 = vsel %vm177, %v2883, 0
  %2896 = vmatpush.msra.mxu0 0.0
  %2897 = vmatpush.msra.mxu0 0.0
  %2898 = vmatpush.msra.mxu0 0.0
  %2899 = vmatpush.msra.mxu0 0.0
  %2900 = vmatpush.msra.mxu0 0.0
  %2901 = vmatpush.msra.mxu0 0.0
  %2902 = vmatpush.msra.mxu0 0.0
  %2903 = vmatpush.msra.mxu0 0.0
  %2904 = vmatpush.msra.mxu0 0.0
  %2905 = vmatpush.msra.mxu0 0.0
  %2906 = vmatpush.msra.mxu0 0.0
  %2907 = vmatpush.msra.mxu0 0.0
  %2908 = vmatpush.msra.mxu0 0.0
  %2909 = vmatpush.msra.mxu0 0.0
  %2910 = vmatpush.msra.mxu0 %v2887
  %2911 = vmatpush.msra.mxu0 %v2885
  %2912 = vmatmul.f32.gmra.mxu0 %v2891
  %v2913 = vpop.f32.mrf.mxu0
  %v2914 = vadd.f32 0.0, %v2913
  %2915 = vmatmul.f32.gmra.mxu0 %v2894
  %v2916 = vpop.f32.mrf.mxu0
  %v2917 = vadd.f32 0.0, %v2916
  %2918 = vdwg.mxu0
  %2921 = vrot.lane.b32.xlu0 %v2914, 24
  %v2922 = vpop.permute.xlu0 %2921
  %2923 = vrot.lane.b32.xlu0 %v2917, 24
  %v2924 = vpop.permute.xlu0 %2923
  %2927 = vst.msk [vmem:[#allocation2] sm:$0xff] %vm555, %v2922
  %2928 = vst.msk [vmem:[#allocation2 + $0x8] sm:$0xff] %vm555, %v2924
  %v2929 = vld [vmem:[#allocation2] sm:$0xff]
  %v2930 = vld [vmem:[#allocation2 + $0x8] sm:$0xff]
  %s2931 = scalar_lea.vmem %s7, 32
  %v2932 = vld [vmem:[%s2931] sm:$0xff]
  %v2933 = vld [vmem:[%s2931 + $0x8] sm:$0xff]
  %v2934 = vld [vmem:[%s2931 + $0x10] sm:$0xff]
  %v2935 = vld [vmem:[%s2931 + $0x18] sm:$0xff]
  %s2936 = scalar_lea.vmem %s8, 1
  %v2937 = vld [vmem:[%s2936] sm:$0x1]
  %v2939 = vperm.slane %v2937, 0
  %v2942 = vsel %vm72, %v2929, 0
  %v2945 = vsel %vm72, %v2930, 0
  %2947 = vmatpush.msra.mxu0 0.0
  %2948 = vmatpush.msra.mxu0 0.0
  %2949 = vmatpush.msra.mxu0 0.0
  %2950 = vmatpush.msra.mxu0 0.0
  %2951 = vmatpush.msra.mxu0 0.0
  %2952 = vmatpush.msra.mxu0 0.0
  %2953 = vmatpush.msra.mxu0 0.0
  %2954 = vmatpush.msra.mxu0 0.0
  %2955 = vmatpush.msra.mxu0 0.0
  %2956 = vmatpush.msra.mxu0 0.0
  %2957 = vmatpush.msra.mxu0 0.0
  %2958 = vmatpush.msra.mxu0 0.0
  %2959 = vmatpush.msra.mxu0 %v2935
  %2960 = vmatpush.msra.mxu0 %v2934
  %2961 = vmatpush.msra.mxu0 %v2933
  %2962 = vmatpush.msra.mxu0 %v2932
  %2963 = vmatmul.f32.gmra.mxu0 %v2942
  %v2964 = vpop.f32.mrf.mxu0
  %v2965 = vadd.f32 %v2939, %v2964
  %2966 = vmatmul.f32.gmra.mxu0 %v2945
  %v2967 = vpop.f32.mrf.mxu0
  %v2968 = vadd.f32 %v2939, %v2967
  %2969 = vdwg.mxu0
  %v2970 = vadd.f32 %v2474, %v2965
  %v2971 = vadd.f32 %v2475, %v2968
  %s2972 = scalar_lea.vmem %s9, 1
  %v2973 = vld [vmem:[%s2972] sm:$0x1]
  %s2974 = scalar_lea.vmem %s10, 1
  %v2975 = vld [vmem:[%s2974] sm:$0x1]
  %v2976 = vsel %vm72, %v2970, 0.0
  %2977 = vadd.xlane.f32.xlu0 %v2976
  %v2978 = vpop.xlane.xlu0 %2977
  %v2979 = vsel %vm72, %v2971, 0.0
  %2980 = vadd.xlane.f32.xlu0 %v2979
  %v2981 = vpop.xlane.xlu0 %2980
  %v2982 = vmul.f32 %v2978, %v613
  %v2983 = vmul.f32 %v2981, %v613
  %v2984 = vsub.f32 %v2970, %v2982
  %v2985 = vsub.f32 %v2971, %v2983
  %v2986 = vmul.f32 %v2984, %v2984
  %v2987 = vmul.f32 %v2985, %v2985
  %v2988 = vsel %vm72, %v2986, 0.0
  %2989 = vadd.xlane.f32.xlu0 %v2988
  %v2990 = vpop.xlane.xlu0 %2989
  %v2991 = vsel %vm72, %v2987, 0.0
  %2992 = vadd.xlane.f32.xlu0 %v2991
  %v2993 = vpop.xlane.xlu0 %2992
  %v2994 = vmul.f32 %v2990, %v613
  %v2995 = vmul.f32 %v2993, %v613
  %v2996 = vadd.f32 %v2994, 1e-05
  %v2997 = vadd.f32 %v2995, 1e-05
  %v2998 = vrsqrt.pop %v2996
  %v2999 = vmul.f32 %v2998, %v2996
  %v3000 = vmul.f32 %v2999, %v2998
  %v3001 = vmul.f32 0.5, %v3000
  %v3002 = vsub.f32 1.5, %v3001
  %v3003 = vmul.f32 %v2998, %v3002
  %vm3004 = vweird.f32 %v2996
  %vm3005 = vweird.f32 %v2998
  %vm3006 = vmor %vm3004, %vm3005
  %v3007 = vsel %vm3006, %v2998, %v3003
  %v3008 = vrsqrt.pop %v2997
  %v3009 = vmul.f32 %v3008, %v2997
  %v3010 = vmul.f32 %v3009, %v3008
  %v3011 = vmul.f32 0.5, %v3010
  %v3012 = vsub.f32 1.5, %v3011
  %v3013 = vmul.f32 %v3008, %v3012
  %vm3014 = vweird.f32 %v2997
  %vm3015 = vweird.f32 %v3008
  %vm3016 = vmor %vm3014, %vm3015
  %v3017 = vsel %vm3016, %v3008, %v3013
  %v3018 = vmul.f32 %v2984, %v3007
  %v3019 = vmul.f32 %v2985, %v3017
  %v3021 = vperm.slane %v2973, 0
  %v3023 = vmul.f32 %v3018, %v3021
  %v3024 = vmul.f32 %v3019, %v3021
  %v3026 = vperm.slane %v2975, 0
  %v3028 = vadd.f32 %v3023, %v3026
  %v3029 = vadd.f32 %v3024, %v3026
  %v3030 = vpack.c.bf16 %v3029, %v3028
  %s3031 = scalar_lea.vmem %s13, 256
  %v3032 = vld [vmem:[%s3031] sm:$0xff]
  %v3033 = vld [vmem:[%s3031 + $0x8] sm:$0xff]
  %v3034 = vld [vmem:[%s3031 + $0x10] sm:$0xff]
  %v3035 = vld [vmem:[%s3031 + $0x18] sm:$0xff]
  %v3036 = vld [vmem:[%s3031 + $0x20] sm:$0xff]
  %v3037 = vld [vmem:[%s3031 + $0x28] sm:$0xff]
  %v3038 = vld [vmem:[%s3031 + $0x30] sm:$0xff]
  %v3039 = vld [vmem:[%s3031 + $0x38] sm:$0xff]
  %v3040 = vld [vmem:[%s3031 + $0x40] sm:$0xff]
  %v3041 = vld [vmem:[%s3031 + $0x48] sm:$0xff]
  %v3042 = vld [vmem:[%s3031 + $0x50] sm:$0xff]
  %v3043 = vld [vmem:[%s3031 + $0x58] sm:$0xff]
  %v3044 = vld [vmem:[%s3031 + $0x60] sm:$0xff]
  %v3045 = vld [vmem:[%s3031 + $0x68] sm:$0xff]
  %v3046 = vld [vmem:[%s3031 + $0x70] sm:$0xff]
  %v3047 = vld [vmem:[%s3031 + $0x78] sm:$0xff]
  %v3048 = vld [vmem:[%s3031 + $0x80] sm:$0xff]
  %v3049 = vld [vmem:[%s3031 + $0x88] sm:$0xff]
  %v3050 = vld [vmem:[%s3031 + $0x90] sm:$0xff]
  %v3051 = vld [vmem:[%s3031 + $0x98] sm:$0xff]
  %v3052 = vld [vmem:[%s3031 + $0xa0] sm:$0xff]
  %v3053 = vld [vmem:[%s3031 + $0xa8] sm:$0xff]
  %v3054 = vld [vmem:[%s3031 + $0xb0] sm:$0xff]
  %v3055 = vld [vmem:[%s3031 + $0xb8] sm:$0xff]
  %v3056 = vld [vmem:[%s3031 + $0xc0] sm:$0xff]
  %v3057 = vld [vmem:[%s3031 + $0xc8] sm:$0xff]
  %v3058 = vld [vmem:[%s3031 + $0xd0] sm:$0xff]
  %v3059 = vld [vmem:[%s3031 + $0xd8] sm:$0xff]
  %v3060 = vld [vmem:[%s3031 + $0xe0] sm:$0xff]
  %v3061 = vld [vmem:[%s3031 + $0xe8] sm:$0xff]
  %v3062 = vld [vmem:[%s3031 + $0xf0] sm:$0xff]
  %v3063 = vld [vmem:[%s3031 + $0xf8] sm:$0xff]
  %s3064 = scalar_lea.vmem %s14, 16
  %v3065 = vld [vmem:[%s3064] sm:$0xff]
  %v3066 = vld [vmem:[%s3064 + $0x8] sm:$0xff]
  %v3069 = vperm.slane %v3065, 0
  %v3070 = vperm.slane %v3065, 1
  %v3071 = vperm.slane %v3065, 2
  %v3072 = vperm.slane %v3065, 3
  %v3073 = vperm.slane %v3065, 4
  %v3074 = vperm.slane %v3065, 5
  %v3075 = vperm.slane %v3065, 6
  %v3076 = vperm.slane %v3065, 7
  %v3077 = vperm.slane %v3066, 0
  %v3078 = vperm.slane %v3066, 1
  %v3079 = vperm.slane %v3066, 2
  %v3080 = vperm.slane %v3066, 3
  %v3081 = vperm.slane %v3066, 4
  %v3082 = vperm.slane %v3066, 5
  %v3083 = vperm.slane %v3066, 6
  %v3084 = vperm.slane %v3066, 7
  %v3133 = vunpack.c.l.b16 %v3032
  %v3134 = vunpack.c.h.b16 %v3032
  %v3135 = vunpack.c.l.b16 %v3033
  %v3136 = vunpack.c.h.b16 %v3033
  %v3137 = vunpack.c.l.b16 %v3034
  %v3138 = vunpack.c.h.b16 %v3034
  %v3139 = vunpack.c.l.b16 %v3035
  %v3140 = vunpack.c.h.b16 %v3035
  %v3141 = vunpack.c.l.b16 %v3036
  %v3142 = vunpack.c.h.b16 %v3036
  %v3143 = vunpack.c.l.b16 %v3037
  %v3144 = vunpack.c.h.b16 %v3037
  %v3145 = vunpack.c.l.b16 %v3038
  %v3146 = vunpack.c.h.b16 %v3038
  %v3147 = vunpack.c.l.b16 %v3039
  %v3148 = vunpack.c.h.b16 %v3039
  %v3149 = vunpack.c.l.b16 %v3040
  %v3150 = vunpack.c.h.b16 %v3040
  %v3151 = vunpack.c.l.b16 %v3041
  %v3152 = vunpack.c.h.b16 %v3041
  %v3153 = vunpack.c.l.b16 %v3042
  %v3154 = vunpack.c.h.b16 %v3042
  %v3155 = vunpack.c.l.b16 %v3043
  %v3156 = vunpack.c.h.b16 %v3043
  %v3157 = vunpack.c.l.b16 %v3044
  %v3158 = vunpack.c.h.b16 %v3044
  %v3159 = vunpack.c.l.b16 %v3045
  %v3160 = vunpack.c.h.b16 %v3045
  %v3161 = vunpack.c.l.b16 %v3046
  %v3162 = vunpack.c.h.b16 %v3046
  %v3163 = vunpack.c.l.b16 %v3047
  %v3164 = vunpack.c.h.b16 %v3047
  %v3165 = vunpack.c.l.b16 %v3048
  %v3166 = vunpack.c.h.b16 %v3048
  %v3167 = vunpack.c.l.b16 %v3049
  %v3168 = vunpack.c.h.b16 %v3049
  %v3169 = vunpack.c.l.b16 %v3050
  %v3170 = vunpack.c.h.b16 %v3050
  %v3171 = vunpack.c.l.b16 %v3051
  %v3172 = vunpack.c.h.b16 %v3051
  %v3173 = vunpack.c.l.b16 %v3052
  %v3174 = vunpack.c.h.b16 %v3052
  %v3175 = vunpack.c.l.b16 %v3053
  %v3176 = vunpack.c.h.b16 %v3053
  %v3177 = vunpack.c.l.b16 %v3054
  %v3178 = vunpack.c.h.b16 %v3054
  %v3179 = vunpack.c.l.b16 %v3055
  %v3180 = vunpack.c.h.b16 %v3055
  %v3181 = vunpack.c.l.b16 %v3056
  %v3182 = vunpack.c.h.b16 %v3056
  %v3183 = vunpack.c.l.b16 %v3057
  %v3184 = vunpack.c.h.b16 %v3057
  %v3185 = vunpack.c.l.b16 %v3058
  %v3186 = vunpack.c.h.b16 %v3058
  %v3187 = vunpack.c.l.b16 %v3059
  %v3188 = vunpack.c.h.b16 %v3059
  %v3189 = vunpack.c.l.b16 %v3060
  %v3190 = vunpack.c.h.b16 %v3060
  %v3191 = vunpack.c.l.b16 %v3061
  %v3192 = vunpack.c.h.b16 %v3061
  %v3193 = vunpack.c.l.b16 %v3062
  %v3194 = vunpack.c.h.b16 %v3062
  %v3195 = vunpack.c.l.b16 %v3063
  %v3196 = vunpack.c.h.b16 %v3063
  %v3197 = vpack.c.b16 %v3149, %v3133
  %v3198 = vpack.c.b16 %v3150, %v3134
  %v3199 = vpack.c.b16 %v3151, %v3135
  %v3200 = vpack.c.b16 %v3152, %v3136
  %v3201 = vpack.c.b16 %v3153, %v3137
  %v3202 = vpack.c.b16 %v3154, %v3138
  %v3203 = vpack.c.b16 %v3155, %v3139
  %v3204 = vpack.c.b16 %v3156, %v3140
  %v3205 = vpack.c.b16 %v3157, %v3141
  %v3206 = vpack.c.b16 %v3158, %v3142
  %v3207 = vpack.c.b16 %v3159, %v3143
  %v3208 = vpack.c.b16 %v3160, %v3144
  %v3209 = vpack.c.b16 %v3161, %v3145
  %v3210 = vpack.c.b16 %v3162, %v3146
  %v3211 = vpack.c.b16 %v3163, %v3147
  %v3212 = vpack.c.b16 %v3164, %v3148
  %v3213 = vpack.c.b16 %v3181, %v3165
  %v3214 = vpack.c.b16 %v3182, %v3166
  %v3215 = vpack.c.b16 %v3183, %v3167
  %v3216 = vpack.c.b16 %v3184, %v3168
  %v3217 = vpack.c.b16 %v3185, %v3169
  %v3218 = vpack.c.b16 %v3186, %v3170
  %v3219 = vpack.c.b16 %v3187, %v3171
  %v3220 = vpack.c.b16 %v3188, %v3172
  %v3221 = vpack.c.b16 %v3189, %v3173
  %v3222 = vpack.c.b16 %v3190, %v3174
  %v3223 = vpack.c.b16 %v3191, %v3175
  %v3224 = vpack.c.b16 %v3192, %v3176
  %v3225 = vpack.c.b16 %v3193, %v3177
  %v3226 = vpack.c.b16 %v3194, %v3178
  %v3227 = vpack.c.b16 %v3195, %v3179
  %v3228 = vpack.c.b16 %v3196, %v3180
  %v3262 = vsel %vm72, %v3030, 0
  %3264 = vmatpush.bf16.msra.mxu0 0
  %3265 = vmatpush.bf16.msra.mxu0 0
  %3266 = vmatpush.bf16.msra.mxu0 0
  %3267 = vmatpush.bf16.msra.mxu0 0
  %3268 = vmatpush.bf16.msra.mxu0 0
  %3269 = vmatpush.bf16.msra.mxu0 0
  %3270 = vmatpush.bf16.msra.mxu0 %v3213
  %3271 = vmatpush.bf16.msra.mxu0 %v3197
  %3272 = vmatmul.bf16.gmra.mxu0 %v3262
  %v3273 = vpop.f32.mrf.mxu0
  %v3274 = vadd.f32 %v3069, %v3273
  %v3275 = vpop.f32.mrf.mxu0
  %v3276 = vadd.f32 %v3069, %v3275
  %3277 = vdwg.mxu0
  %3278 = vmatpush.bf16.msra.mxu0 0
  %3279 = vmatpush.bf16.msra.mxu0 0
  %3280 = vmatpush.bf16.msra.mxu0 0
  %3281 = vmatpush.bf16.msra.mxu0 0
  %3282 = vmatpush.bf16.msra.mxu0 0
  %3283 = vmatpush.bf16.msra.mxu0 0
  %3284 = vmatpush.bf16.msra.mxu0 %v3214
  %3285 = vmatpush.bf16.msra.mxu0 %v3198
  %3286 = vmatmul.bf16.gmra.mxu0 %v3262
  %v3287 = vpop.f32.mrf.mxu0
  %v3288 = vadd.f32 %v3070, %v3287
  %v3289 = vpop.f32.mrf.mxu0
  %v3290 = vadd.f32 %v3070, %v3289
  %3291 = vdwg.mxu0
  %3292 = vmatpush.bf16.msra.mxu0 0
  %3293 = vmatpush.bf16.msra.mxu0 0
  %3294 = vmatpush.bf16.msra.mxu0 0
  %3295 = vmatpush.bf16.msra.mxu0 0
  %3296 = vmatpush.bf16.msra.mxu0 0
  %3297 = vmatpush.bf16.msra.mxu0 0
  %3298 = vmatpush.bf16.msra.mxu0 %v3215
  %3299 = vmatpush.bf16.msra.mxu0 %v3199
  %3300 = vmatmul.bf16.gmra.mxu0 %v3262
  %v3301 = vpop.f32.mrf.mxu0
  %v3302 = vadd.f32 %v3071, %v3301
  %v3303 = vpop.f32.mrf.mxu0
  %v3304 = vadd.f32 %v3071, %v3303
  %3305 = vdwg.mxu0
  %3306 = vmatpush.bf16.msra.mxu0 0
  %3307 = vmatpush.bf16.msra.mxu0 0
  %3308 = vmatpush.bf16.msra.mxu0 0
  %3309 = vmatpush.bf16.msra.mxu0 0
  %3310 = vmatpush.bf16.msra.mxu0 0
  %3311 = vmatpush.bf16.msra.mxu0 0
  %3312 = vmatpush.bf16.msra.mxu0 %v3216
  %3313 = vmatpush.bf16.msra.mxu0 %v3200
  %3314 = vmatmul.bf16.gmra.mxu0 %v3262
  %v3315 = vpop.f32.mrf.mxu0
  %v3316 = vadd.f32 %v3072, %v3315
  %v3317 = vpop.f32.mrf.mxu0
  %v3318 = vadd.f32 %v3072, %v3317
  %3319 = vdwg.mxu0
  %3320 = vmatpush.bf16.msra.mxu0 0
  %3321 = vmatpush.bf16.msra.mxu0 0
  %3322 = vmatpush.bf16.msra.mxu0 0
  %3323 = vmatpush.bf16.msra.mxu0 0
  %3324 = vmatpush.bf16.msra.mxu0 0
  %3325 = vmatpush.bf16.msra.mxu0 0
  %3326 = vmatpush.bf16.msra.mxu0 %v3217
  %3327 = vmatpush.bf16.msra.mxu0 %v3201
  %3328 = vmatmul.bf16.gmra.mxu0 %v3262
  %v3329 = vpop.f32.mrf.mxu0
  %v3330 = vadd.f32 %v3073, %v3329
  %v3331 = vpop.f32.mrf.mxu0
  %v3332 = vadd.f32 %v3073, %v3331
  %3333 = vdwg.mxu0
  %3334 = vmatpush.bf16.msra.mxu0 0
  %3335 = vmatpush.bf16.msra.mxu0 0
  %3336 = vmatpush.bf16.msra.mxu0 0
  %3337 = vmatpush.bf16.msra.mxu0 0
  %3338 = vmatpush.bf16.msra.mxu0 0
  %3339 = vmatpush.bf16.msra.mxu0 0
  %3340 = vmatpush.bf16.msra.mxu0 %v3218
  %3341 = vmatpush.bf16.msra.mxu0 %v3202
  %3342 = vmatmul.bf16.gmra.mxu0 %v3262
  %v3343 = vpop.f32.mrf.mxu0
  %v3344 = vadd.f32 %v3074, %v3343
  %v3345 = vpop.f32.mrf.mxu0
  %v3346 = vadd.f32 %v3074, %v3345
  %3347 = vdwg.mxu0
  %3348 = vmatpush.bf16.msra.mxu0 0
  %3349 = vmatpush.bf16.msra.mxu0 0
  %3350 = vmatpush.bf16.msra.mxu0 0
  %3351 = vmatpush.bf16.msra.mxu0 0
  %3352 = vmatpush.bf16.msra.mxu0 0
  %3353 = vmatpush.bf16.msra.mxu0 0
  %3354 = vmatpush.bf16.msra.mxu0 %v3219
  %3355 = vmatpush.bf16.msra.mxu0 %v3203
  %3356 = vmatmul.bf16.gmra.mxu0 %v3262
  %v3357 = vpop.f32.mrf.mxu0
  %v3358 = vadd.f32 %v3075, %v3357
  %v3359 = vpop.f32.mrf.mxu0
  %v3360 = vadd.f32 %v3075, %v3359
  %3361 = vdwg.mxu0
  %3362 = vmatpush.bf16.msra.mxu0 0
  %3363 = vmatpush.bf16.msra.mxu0 0
  %3364 = vmatpush.bf16.msra.mxu0 0
  %3365 = vmatpush.bf16.msra.mxu0 0
  %3366 = vmatpush.bf16.msra.mxu0 0
  %3367 = vmatpush.bf16.msra.mxu0 0
  %3368 = vmatpush.bf16.msra.mxu0 %v3220
  %3369 = vmatpush.bf16.msra.mxu0 %v3204
  %3370 = vmatmul.bf16.gmra.mxu0 %v3262
  %v3371 = vpop.f32.mrf.mxu0
  %v3372 = vadd.f32 %v3076, %v3371
  %v3373 = vpop.f32.mrf.mxu0
  %v3374 = vadd.f32 %v3076, %v3373
  %3375 = vdwg.mxu0
  %3376 = vmatpush.bf16.msra.mxu0 0
  %3377 = vmatpush.bf16.msra.mxu0 0
  %3378 = vmatpush.bf16.msra.mxu0 0
  %3379 = vmatpush.bf16.msra.mxu0 0
  %3380 = vmatpush.bf16.msra.mxu0 0
  %3381 = vmatpush.bf16.msra.mxu0 0
  %3382 = vmatpush.bf16.msra.mxu0 %v3221
  %3383 = vmatpush.bf16.msra.mxu0 %v3205
  %3384 = vmatmul.bf16.gmra.mxu0 %v3262
  %v3385 = vpop.f32.mrf.mxu0
  %v3386 = vadd.f32 %v3077, %v3385
  %v3387 = vpop.f32.mrf.mxu0
  %v3388 = vadd.f32 %v3077, %v3387
  %3389 = vdwg.mxu0
  %3390 = vmatpush.bf16.msra.mxu0 0
  %3391 = vmatpush.bf16.msra.mxu0 0
  %3392 = vmatpush.bf16.msra.mxu0 0
  %3393 = vmatpush.bf16.msra.mxu0 0
  %3394 = vmatpush.bf16.msra.mxu0 0
  %3395 = vmatpush.bf16.msra.mxu0 0
  %3396 = vmatpush.bf16.msra.mxu0 %v3222
  %3397 = vmatpush.bf16.msra.mxu0 %v3206
  %3398 = vmatmul.bf16.gmra.mxu0 %v3262
  %v3399 = vpop.f32.mrf.mxu0
  %v3400 = vadd.f32 %v3078, %v3399
  %v3401 = vpop.f32.mrf.mxu0
  %v3402 = vadd.f32 %v3078, %v3401
  %3403 = vdwg.mxu0
  %3404 = vmatpush.bf16.msra.mxu0 0
  %3405 = vmatpush.bf16.msra.mxu0 0
  %3406 = vmatpush.bf16.msra.mxu0 0
  %3407 = vmatpush.bf16.msra.mxu0 0
  %3408 = vmatpush.bf16.msra.mxu0 0
  %3409 = vmatpush.bf16.msra.mxu0 0
  %3410 = vmatpush.bf16.msra.mxu0 %v3223
  %3411 = vmatpush.bf16.msra.mxu0 %v3207
  %3412 = vmatmul.bf16.gmra.mxu0 %v3262
  %v3413 = vpop.f32.mrf.mxu0
  %v3414 = vadd.f32 %v3079, %v3413
  %v3415 = vpop.f32.mrf.mxu0
  %v3416 = vadd.f32 %v3079, %v3415
  %3417 = vdwg.mxu0
  %3418 = vmatpush.bf16.msra.mxu0 0
  %3419 = vmatpush.bf16.msra.mxu0 0
  %3420 = vmatpush.bf16.msra.mxu0 0
  %3421 = vmatpush.bf16.msra.mxu0 0
  %3422 = vmatpush.bf16.msra.mxu0 0
  %3423 = vmatpush.bf16.msra.mxu0 0
  %3424 = vmatpush.bf16.msra.mxu0 %v3224
  %3425 = vmatpush.bf16.msra.mxu0 %v3208
  %3426 = vmatmul.bf16.gmra.mxu0 %v3262
  %v3427 = vpop.f32.mrf.mxu0
  %v3428 = vadd.f32 %v3080, %v3427
  %v3429 = vpop.f32.mrf.mxu0
  %v3430 = vadd.f32 %v3080, %v3429
  %3431 = vdwg.mxu0
  %3432 = vmatpush.bf16.msra.mxu0 0
  %3433 = vmatpush.bf16.msra.mxu0 0
  %3434 = vmatpush.bf16.msra.mxu0 0
  %3435 = vmatpush.bf16.msra.mxu0 0
  %3436 = vmatpush.bf16.msra.mxu0 0
  %3437 = vmatpush.bf16.msra.mxu0 0
  %3438 = vmatpush.bf16.msra.mxu0 %v3225
  %3439 = vmatpush.bf16.msra.mxu0 %v3209
  %3440 = vmatmul.bf16.gmra.mxu0 %v3262
  %v3441 = vpop.f32.mrf.mxu0
  %v3442 = vadd.f32 %v3081, %v3441
  %v3443 = vpop.f32.mrf.mxu0
  %v3444 = vadd.f32 %v3081, %v3443
  %3445 = vdwg.mxu0
  %3446 = vmatpush.bf16.msra.mxu0 0
  %3447 = vmatpush.bf16.msra.mxu0 0
  %3448 = vmatpush.bf16.msra.mxu0 0
  %3449 = vmatpush.bf16.msra.mxu0 0
  %3450 = vmatpush.bf16.msra.mxu0 0
  %3451 = vmatpush.bf16.msra.mxu0 0
  %3452 = vmatpush.bf16.msra.mxu0 %v3226
  %3453 = vmatpush.bf16.msra.mxu0 %v3210
  %3454 = vmatmul.bf16.gmra.mxu0 %v3262
  %v3455 = vpop.f32.mrf.mxu0
  %v3456 = vadd.f32 %v3082, %v3455
  %v3457 = vpop.f32.mrf.mxu0
  %v3458 = vadd.f32 %v3082, %v3457
  %3459 = vdwg.mxu0
  %3460 = vmatpush.bf16.msra.mxu0 0
  %3461 = vmatpush.bf16.msra.mxu0 0
  %3462 = vmatpush.bf16.msra.mxu0 0
  %3463 = vmatpush.bf16.msra.mxu0 0
  %3464 = vmatpush.bf16.msra.mxu0 0
  %3465 = vmatpush.bf16.msra.mxu0 0
  %3466 = vmatpush.bf16.msra.mxu0 %v3227
  %3467 = vmatpush.bf16.msra.mxu0 %v3211
  %3468 = vmatmul.bf16.gmra.mxu0 %v3262
  %v3469 = vpop.f32.mrf.mxu0
  %v3470 = vadd.f32 %v3083, %v3469
  %v3471 = vpop.f32.mrf.mxu0
  %v3472 = vadd.f32 %v3083, %v3471
  %3473 = vdwg.mxu0
  %3474 = vmatpush.bf16.msra.mxu0 0
  %3475 = vmatpush.bf16.msra.mxu0 0
  %3476 = vmatpush.bf16.msra.mxu0 0
  %3477 = vmatpush.bf16.msra.mxu0 0
  %3478 = vmatpush.bf16.msra.mxu0 0
  %3479 = vmatpush.bf16.msra.mxu0 0
  %3480 = vmatpush.bf16.msra.mxu0 %v3228
  %3481 = vmatpush.bf16.msra.mxu0 %v3212
  %3482 = vmatmul.bf16.gmra.mxu0 %v3262
  %v3483 = vpop.f32.mrf.mxu0
  %v3484 = vadd.f32 %v3084, %v3483
  %v3485 = vpop.f32.mrf.mxu0
  %v3486 = vadd.f32 %v3084, %v3485
  %3487 = vdwg.mxu0
  %v3488 = vmax.f32 %v3274, 0.0
  %v3489 = vmax.f32 %v3288, 0.0
  %v3490 = vmax.f32 %v3302, 0.0
  %v3491 = vmax.f32 %v3316, 0.0
  %v3492 = vmax.f32 %v3330, 0.0
  %v3493 = vmax.f32 %v3344, 0.0
  %v3494 = vmax.f32 %v3358, 0.0
  %v3495 = vmax.f32 %v3372, 0.0
  %v3496 = vmax.f32 %v3386, 0.0
  %v3497 = vmax.f32 %v3400, 0.0
  %v3498 = vmax.f32 %v3414, 0.0
  %v3499 = vmax.f32 %v3428, 0.0
  %v3500 = vmax.f32 %v3442, 0.0
  %v3501 = vmax.f32 %v3456, 0.0
  %v3502 = vmax.f32 %v3470, 0.0
  %v3503 = vmax.f32 %v3484, 0.0
  %v3504 = vmax.f32 %v3276, 0.0
  %v3505 = vmax.f32 %v3290, 0.0
  %v3506 = vmax.f32 %v3304, 0.0
  %v3507 = vmax.f32 %v3318, 0.0
  %v3508 = vmax.f32 %v3332, 0.0
  %v3509 = vmax.f32 %v3346, 0.0
  %v3510 = vmax.f32 %v3360, 0.0
  %v3511 = vmax.f32 %v3374, 0.0
  %v3512 = vmax.f32 %v3388, 0.0
  %v3513 = vmax.f32 %v3402, 0.0
  %v3514 = vmax.f32 %v3416, 0.0
  %v3515 = vmax.f32 %v3430, 0.0
  %v3516 = vmax.f32 %v3444, 0.0
  %v3517 = vmax.f32 %v3458, 0.0
  %v3518 = vmax.f32 %v3472, 0.0
  %v3519 = vmax.f32 %v3486, 0.0
  %v3520 = vpack.c.bf16 %v3504, %v3488
  %v3521 = vpack.c.bf16 %v3505, %v3489
  %v3522 = vpack.c.bf16 %v3506, %v3490
  %v3523 = vpack.c.bf16 %v3507, %v3491
  %v3524 = vpack.c.bf16 %v3508, %v3492
  %v3525 = vpack.c.bf16 %v3509, %v3493
  %v3526 = vpack.c.bf16 %v3510, %v3494
  %v3527 = vpack.c.bf16 %v3511, %v3495
  %v3528 = vpack.c.bf16 %v3512, %v3496
  %v3529 = vpack.c.bf16 %v3513, %v3497
  %v3530 = vpack.c.bf16 %v3514, %v3498
  %v3531 = vpack.c.bf16 %v3515, %v3499
  %v3532 = vpack.c.bf16 %v3516, %v3500
  %v3533 = vpack.c.bf16 %v3517, %v3501
  %v3534 = vpack.c.bf16 %v3518, %v3502
  %v3535 = vpack.c.bf16 %v3519, %v3503
  %s3536 = scalar_lea.vmem %s15, 1024
  %v3537 = vld [vmem:[%s3536] sm:$0xf]
  %v3538 = vld [vmem:[%s3536 + $0x4] sm:$0xf]
  %v3539 = vld [vmem:[%s3536 + $0x8] sm:$0xf]
  %v3540 = vld [vmem:[%s3536 + $0xc] sm:$0xf]
  %v3541 = vld [vmem:[%s3536 + $0x10] sm:$0xf]
  %v3542 = vld [vmem:[%s3536 + $0x14] sm:$0xf]
  %v3543 = vld [vmem:[%s3536 + $0x18] sm:$0xf]
  %v3544 = vld [vmem:[%s3536 + $0x1c] sm:$0xf]
  %v3545 = vld [vmem:[%s3536 + $0x20] sm:$0xf]
  %v3546 = vld [vmem:[%s3536 + $0x24] sm:$0xf]
  %v3547 = vld [vmem:[%s3536 + $0x28] sm:$0xf]
  %v3548 = vld [vmem:[%s3536 + $0x2c] sm:$0xf]
  %v3549 = vld [vmem:[%s3536 + $0x30] sm:$0xf]
  %v3550 = vld [vmem:[%s3536 + $0x34] sm:$0xf]
  %v3551 = vld [vmem:[%s3536 + $0x38] sm:$0xf]
  %v3552 = vld [vmem:[%s3536 + $0x3c] sm:$0xf]
  %v3553 = vld [vmem:[%s3536 + $0x40] sm:$0xf]
  %v3554 = vld [vmem:[%s3536 + $0x44] sm:$0xf]
  %v3555 = vld [vmem:[%s3536 + $0x48] sm:$0xf]
  %v3556 = vld [vmem:[%s3536 + $0x4c] sm:$0xf]
  %v3557 = vld [vmem:[%s3536 + $0x50] sm:$0xf]
  %v3558 = vld [vmem:[%s3536 + $0x54] sm:$0xf]
  %v3559 = vld [vmem:[%s3536 + $0x58] sm:$0xf]
  %v3560 = vld [vmem:[%s3536 + $0x5c] sm:$0xf]
  %v3561 = vld [vmem:[%s3536 + $0x60] sm:$0xf]
  %v3562 = vld [vmem:[%s3536 + $0x64] sm:$0xf]
  %v3563 = vld [vmem:[%s3536 + $0x68] sm:$0xf]
  %v3564 = vld [vmem:[%s3536 + $0x6c] sm:$0xf]
  %v3565 = vld [vmem:[%s3536 + $0x70] sm:$0xf]
  %v3566 = vld [vmem:[%s3536 + $0x74] sm:$0xf]
  %v3567 = vld [vmem:[%s3536 + $0x78] sm:$0xf]
  %v3568 = vld [vmem:[%s3536 + $0x7c] sm:$0xf]
  %v3569 = vld [vmem:[%s3536 + $0x80] sm:$0xf]
  %v3570 = vld [vmem:[%s3536 + $0x84] sm:$0xf]
  %v3571 = vld [vmem:[%s3536 + $0x88] sm:$0xf]
  %v3572 = vld [vmem:[%s3536 + $0x8c] sm:$0xf]
  %v3573 = vld [vmem:[%s3536 + $0x90] sm:$0xf]
  %v3574 = vld [vmem:[%s3536 + $0x94] sm:$0xf]
  %v3575 = vld [vmem:[%s3536 + $0x98] sm:$0xf]
  %v3576 = vld [vmem:[%s3536 + $0x9c] sm:$0xf]
  %v3577 = vld [vmem:[%s3536 + $0xa0] sm:$0xf]
  %v3578 = vld [vmem:[%s3536 + $0xa4] sm:$0xf]
  %v3579 = vld [vmem:[%s3536 + $0xa8] sm:$0xf]
  %v3580 = vld [vmem:[%s3536 + $0xac] sm:$0xf]
  %v3581 = vld [vmem:[%s3536 + $0xb0] sm:$0xf]
  %v3582 = vld [vmem:[%s3536 + $0xb4] sm:$0xf]
  %v3583 = vld [vmem:[%s3536 + $0xb8] sm:$0xf]
  %v3584 = vld [vmem:[%s3536 + $0xbc] sm:$0xf]
  %v3585 = vld [vmem:[%s3536 + $0xc0] sm:$0xf]
  %v3586 = vld [vmem:[%s3536 + $0xc4] sm:$0xf]
  %v3587 = vld [vmem:[%s3536 + $0xc8] sm:$0xf]
  %v3588 = vld [vmem:[%s3536 + $0xcc] sm:$0xf]
  %v3589 = vld [vmem:[%s3536 + $0xd0] sm:$0xf]
  %v3590 = vld [vmem:[%s3536 + $0xd4] sm:$0xf]
  %v3591 = vld [vmem:[%s3536 + $0xd8] sm:$0xf]
  %v3592 = vld [vmem:[%s3536 + $0xdc] sm:$0xf]
  %v3593 = vld [vmem:[%s3536 + $0xe0] sm:$0xf]
  %v3594 = vld [vmem:[%s3536 + $0xe4] sm:$0xf]
  %v3595 = vld [vmem:[%s3536 + $0xe8] sm:$0xf]
  %v3596 = vld [vmem:[%s3536 + $0xec] sm:$0xf]
  %v3597 = vld [vmem:[%s3536 + $0xf0] sm:$0xf]
  %v3598 = vld [vmem:[%s3536 + $0xf4] sm:$0xf]
  %v3599 = vld [vmem:[%s3536 + $0xf8] sm:$0xf]
  %v3600 = vld [vmem:[%s3536 + $0xfc] sm:$0xf]
  %v3601 = vld [vmem:[%s3536 + $0x100] sm:$0xf]
  %v3602 = vld [vmem:[%s3536 + $0x104] sm:$0xf]
  %v3603 = vld [vmem:[%s3536 + $0x108] sm:$0xf]
  %v3604 = vld [vmem:[%s3536 + $0x10c] sm:$0xf]
  %v3605 = vld [vmem:[%s3536 + $0x110] sm:$0xf]
  %v3606 = vld [vmem:[%s3536 + $0x114] sm:$0xf]
  %v3607 = vld [vmem:[%s3536 + $0x118] sm:$0xf]
  %v3608 = vld [vmem:[%s3536 + $0x11c] sm:$0xf]
  %v3609 = vld [vmem:[%s3536 + $0x120] sm:$0xf]
  %v3610 = vld [vmem:[%s3536 + $0x124] sm:$0xf]
  %v3611 = vld [vmem:[%s3536 + $0x128] sm:$0xf]
  %v3612 = vld [vmem:[%s3536 + $0x12c] sm:$0xf]
  %v3613 = vld [vmem:[%s3536 + $0x130] sm:$0xf]
  %v3614 = vld [vmem:[%s3536 + $0x134] sm:$0xf]
  %v3615 = vld [vmem:[%s3536 + $0x138] sm:$0xf]
  %v3616 = vld [vmem:[%s3536 + $0x13c] sm:$0xf]
  %v3617 = vld [vmem:[%s3536 + $0x140] sm:$0xf]
  %v3618 = vld [vmem:[%s3536 + $0x144] sm:$0xf]
  %v3619 = vld [vmem:[%s3536 + $0x148] sm:$0xf]
  %v3620 = vld [vmem:[%s3536 + $0x14c] sm:$0xf]
  %v3621 = vld [vmem:[%s3536 + $0x150] sm:$0xf]
  %v3622 = vld [vmem:[%s3536 + $0x154] sm:$0xf]
  %v3623 = vld [vmem:[%s3536 + $0x158] sm:$0xf]
  %v3624 = vld [vmem:[%s3536 + $0x15c] sm:$0xf]
  %v3625 = vld [vmem:[%s3536 + $0x160] sm:$0xf]
  %v3626 = vld [vmem:[%s3536 + $0x164] sm:$0xf]
  %v3627 = vld [vmem:[%s3536 + $0x168] sm:$0xf]
  %v3628 = vld [vmem:[%s3536 + $0x16c] sm:$0xf]
  %v3629 = vld [vmem:[%s3536 + $0x170] sm:$0xf]
  %v3630 = vld [vmem:[%s3536 + $0x174] sm:$0xf]
  %v3631 = vld [vmem:[%s3536 + $0x178] sm:$0xf]
  %v3632 = vld [vmem:[%s3536 + $0x17c] sm:$0xf]
  %v3633 = vld [vmem:[%s3536 + $0x180] sm:$0xf]
  %v3634 = vld [vmem:[%s3536 + $0x184] sm:$0xf]
  %v3635 = vld [vmem:[%s3536 + $0x188] sm:$0xf]
  %v3636 = vld [vmem:[%s3536 + $0x18c] sm:$0xf]
  %v3637 = vld [vmem:[%s3536 + $0x190] sm:$0xf]
  %v3638 = vld [vmem:[%s3536 + $0x194] sm:$0xf]
  %v3639 = vld [vmem:[%s3536 + $0x198] sm:$0xf]
  %v3640 = vld [vmem:[%s3536 + $0x19c] sm:$0xf]
  %v3641 = vld [vmem:[%s3536 + $0x1a0] sm:$0xf]
  %v3642 = vld [vmem:[%s3536 + $0x1a4] sm:$0xf]
  %v3643 = vld [vmem:[%s3536 + $0x1a8] sm:$0xf]
  %v3644 = vld [vmem:[%s3536 + $0x1ac] sm:$0xf]
  %v3645 = vld [vmem:[%s3536 + $0x1b0] sm:$0xf]
  %v3646 = vld [vmem:[%s3536 + $0x1b4] sm:$0xf]
  %v3647 = vld [vmem:[%s3536 + $0x1b8] sm:$0xf]
  %v3648 = vld [vmem:[%s3536 + $0x1bc] sm:$0xf]
  %v3649 = vld [vmem:[%s3536 + $0x1c0] sm:$0xf]
  %v3650 = vld [vmem:[%s3536 + $0x1c4] sm:$0xf]
  %v3651 = vld [vmem:[%s3536 + $0x1c8] sm:$0xf]
  %v3652 = vld [vmem:[%s3536 + $0x1cc] sm:$0xf]
  %v3653 = vld [vmem:[%s3536 + $0x1d0] sm:$0xf]
  %v3654 = vld [vmem:[%s3536 + $0x1d4] sm:$0xf]
  %v3655 = vld [vmem:[%s3536 + $0x1d8] sm:$0xf]
  %v3656 = vld [vmem:[%s3536 + $0x1dc] sm:$0xf]
  %v3657 = vld [vmem:[%s3536 + $0x1e0] sm:$0xf]
  %v3658 = vld [vmem:[%s3536 + $0x1e4] sm:$0xf]
  %v3659 = vld [vmem:[%s3536 + $0x1e8] sm:$0xf]
  %v3660 = vld [vmem:[%s3536 + $0x1ec] sm:$0xf]
  %v3661 = vld [vmem:[%s3536 + $0x1f0] sm:$0xf]
  %v3662 = vld [vmem:[%s3536 + $0x1f4] sm:$0xf]
  %v3663 = vld [vmem:[%s3536 + $0x1f8] sm:$0xf]
  %v3664 = vld [vmem:[%s3536 + $0x1fc] sm:$0xf]
  %v3665 = vld [vmem:[%s3536 + $0x200] sm:$0xf]
  %v3666 = vld [vmem:[%s3536 + $0x204] sm:$0xf]
  %v3667 = vld [vmem:[%s3536 + $0x208] sm:$0xf]
  %v3668 = vld [vmem:[%s3536 + $0x20c] sm:$0xf]
  %v3669 = vld [vmem:[%s3536 + $0x210] sm:$0xf]
  %v3670 = vld [vmem:[%s3536 + $0x214] sm:$0xf]
  %v3671 = vld [vmem:[%s3536 + $0x218] sm:$0xf]
  %v3672 = vld [vmem:[%s3536 + $0x21c] sm:$0xf]
  %v3673 = vld [vmem:[%s3536 + $0x220] sm:$0xf]
  %v3674 = vld [vmem:[%s3536 + $0x224] sm:$0xf]
  %v3675 = vld [vmem:[%s3536 + $0x228] sm:$0xf]
  %v3676 = vld [vmem:[%s3536 + $0x22c] sm:$0xf]
  %v3677 = vld [vmem:[%s3536 + $0x230] sm:$0xf]
  %v3678 = vld [vmem:[%s3536 + $0x234] sm:$0xf]
  %v3679 = vld [vmem:[%s3536 + $0x238] sm:$0xf]
  %v3680 = vld [vmem:[%s3536 + $0x23c] sm:$0xf]
  %v3681 = vld [vmem:[%s3536 + $0x240] sm:$0xf]
  %v3682 = vld [vmem:[%s3536 + $0x244] sm:$0xf]
  %v3683 = vld [vmem:[%s3536 + $0x248] sm:$0xf]
  %v3684 = vld [vmem:[%s3536 + $0x24c] sm:$0xf]
  %v3685 = vld [vmem:[%s3536 + $0x250] sm:$0xf]
  %v3686 = vld [vmem:[%s3536 + $0x254] sm:$0xf]
  %v3687 = vld [vmem:[%s3536 + $0x258] sm:$0xf]
  %v3688 = vld [vmem:[%s3536 + $0x25c] sm:$0xf]
  %v3689 = vld [vmem:[%s3536 + $0x260] sm:$0xf]
  %v3690 = vld [vmem:[%s3536 + $0x264] sm:$0xf]
  %v3691 = vld [vmem:[%s3536 + $0x268] sm:$0xf]
  %v3692 = vld [vmem:[%s3536 + $0x26c] sm:$0xf]
  %v3693 = vld [vmem:[%s3536 + $0x270] sm:$0xf]
  %v3694 = vld [vmem:[%s3536 + $0x274] sm:$0xf]
  %v3695 = vld [vmem:[%s3536 + $0x278] sm:$0xf]
  %v3696 = vld [vmem:[%s3536 + $0x27c] sm:$0xf]
  %v3697 = vld [vmem:[%s3536 + $0x280] sm:$0xf]
  %v3698 = vld [vmem:[%s3536 + $0x284] sm:$0xf]
  %v3699 = vld [vmem:[%s3536 + $0x288] sm:$0xf]
  %v3700 = vld [vmem:[%s3536 + $0x28c] sm:$0xf]
  %v3701 = vld [vmem:[%s3536 + $0x290] sm:$0xf]
  %v3702 = vld [vmem:[%s3536 + $0x294] sm:$0xf]
  %v3703 = vld [vmem:[%s3536 + $0x298] sm:$0xf]
  %v3704 = vld [vmem:[%s3536 + $0x29c] sm:$0xf]
  %v3705 = vld [vmem:[%s3536 + $0x2a0] sm:$0xf]
  %v3706 = vld [vmem:[%s3536 + $0x2a4] sm:$0xf]
  %v3707 = vld [vmem:[%s3536 + $0x2a8] sm:$0xf]
  %v3708 = vld [vmem:[%s3536 + $0x2ac] sm:$0xf]
  %v3709 = vld [vmem:[%s3536 + $0x2b0] sm:$0xf]
  %v3710 = vld [vmem:[%s3536 + $0x2b4] sm:$0xf]
  %v3711 = vld [vmem:[%s3536 + $0x2b8] sm:$0xf]
  %v3712 = vld [vmem:[%s3536 + $0x2bc] sm:$0xf]
  %v3713 = vld [vmem:[%s3536 + $0x2c0] sm:$0xf]
  %v3714 = vld [vmem:[%s3536 + $0x2c4] sm:$0xf]
  %v3715 = vld [vmem:[%s3536 + $0x2c8] sm:$0xf]
  %v3716 = vld [vmem:[%s3536 + $0x2cc] sm:$0xf]
  %v3717 = vld [vmem:[%s3536 + $0x2d0] sm:$0xf]
  %v3718 = vld [vmem:[%s3536 + $0x2d4] sm:$0xf]
  %v3719 = vld [vmem:[%s3536 + $0x2d8] sm:$0xf]
  %v3720 = vld [vmem:[%s3536 + $0x2dc] sm:$0xf]
  %v3721 = vld [vmem:[%s3536 + $0x2e0] sm:$0xf]
  %v3722 = vld [vmem:[%s3536 + $0x2e4] sm:$0xf]
  %v3723 = vld [vmem:[%s3536 + $0x2e8] sm:$0xf]
  %v3724 = vld [vmem:[%s3536 + $0x2ec] sm:$0xf]
  %v3725 = vld [vmem:[%s3536 + $0x2f0] sm:$0xf]
  %v3726 = vld [vmem:[%s3536 + $0x2f4] sm:$0xf]
  %v3727 = vld [vmem:[%s3536 + $0x2f8] sm:$0xf]
  %v3728 = vld [vmem:[%s3536 + $0x2fc] sm:$0xf]
  %v3729 = vld [vmem:[%s3536 + $0x300] sm:$0xf]
  %v3730 = vld [vmem:[%s3536 + $0x304] sm:$0xf]
  %v3731 = vld [vmem:[%s3536 + $0x308] sm:$0xf]
  %v3732 = vld [vmem:[%s3536 + $0x30c] sm:$0xf]
  %v3733 = vld [vmem:[%s3536 + $0x310] sm:$0xf]
  %v3734 = vld [vmem:[%s3536 + $0x314] sm:$0xf]
  %v3735 = vld [vmem:[%s3536 + $0x318] sm:$0xf]
  %v3736 = vld [vmem:[%s3536 + $0x31c] sm:$0xf]
  %v3737 = vld [vmem:[%s3536 + $0x320] sm:$0xf]
  %v3738 = vld [vmem:[%s3536 + $0x324] sm:$0xf]
  %v3739 = vld [vmem:[%s3536 + $0x328] sm:$0xf]
  %v3740 = vld [vmem:[%s3536 + $0x32c] sm:$0xf]
  %v3741 = vld [vmem:[%s3536 + $0x330] sm:$0xf]
  %v3742 = vld [vmem:[%s3536 + $0x334] sm:$0xf]
  %v3743 = vld [vmem:[%s3536 + $0x338] sm:$0xf]
  %v3744 = vld [vmem:[%s3536 + $0x33c] sm:$0xf]
  %v3745 = vld [vmem:[%s3536 + $0x340] sm:$0xf]
  %v3746 = vld [vmem:[%s3536 + $0x344] sm:$0xf]
  %v3747 = vld [vmem:[%s3536 + $0x348] sm:$0xf]
  %v3748 = vld [vmem:[%s3536 + $0x34c] sm:$0xf]
  %v3749 = vld [vmem:[%s3536 + $0x350] sm:$0xf]
  %v3750 = vld [vmem:[%s3536 + $0x354] sm:$0xf]
  %v3751 = vld [vmem:[%s3536 + $0x358] sm:$0xf]
  %v3752 = vld [vmem:[%s3536 + $0x35c] sm:$0xf]
  %v3753 = vld [vmem:[%s3536 + $0x360] sm:$0xf]
  %v3754 = vld [vmem:[%s3536 + $0x364] sm:$0xf]
  %v3755 = vld [vmem:[%s3536 + $0x368] sm:$0xf]
  %v3756 = vld [vmem:[%s3536 + $0x36c] sm:$0xf]
  %v3757 = vld [vmem:[%s3536 + $0x370] sm:$0xf]
  %v3758 = vld [vmem:[%s3536 + $0x374] sm:$0xf]
  %v3759 = vld [vmem:[%s3536 + $0x378] sm:$0xf]
  %v3760 = vld [vmem:[%s3536 + $0x37c] sm:$0xf]
  %v3761 = vld [vmem:[%s3536 + $0x380] sm:$0xf]
  %v3762 = vld [vmem:[%s3536 + $0x384] sm:$0xf]
  %v3763 = vld [vmem:[%s3536 + $0x388] sm:$0xf]
  %v3764 = vld [vmem:[%s3536 + $0x38c] sm:$0xf]
  %v3765 = vld [vmem:[%s3536 + $0x390] sm:$0xf]
  %v3766 = vld [vmem:[%s3536 + $0x394] sm:$0xf]
  %v3767 = vld [vmem:[%s3536 + $0x398] sm:$0xf]
  %v3768 = vld [vmem:[%s3536 + $0x39c] sm:$0xf]
  %v3769 = vld [vmem:[%s3536 + $0x3a0] sm:$0xf]
  %v3770 = vld [vmem:[%s3536 + $0x3a4] sm:$0xf]
  %v3771 = vld [vmem:[%s3536 + $0x3a8] sm:$0xf]
  %v3772 = vld [vmem:[%s3536 + $0x3ac] sm:$0xf]
  %v3773 = vld [vmem:[%s3536 + $0x3b0] sm:$0xf]
  %v3774 = vld [vmem:[%s3536 + $0x3b4] sm:$0xf]
  %v3775 = vld [vmem:[%s3536 + $0x3b8] sm:$0xf]
  %v3776 = vld [vmem:[%s3536 + $0x3bc] sm:$0xf]
  %v3777 = vld [vmem:[%s3536 + $0x3c0] sm:$0xf]
  %v3778 = vld [vmem:[%s3536 + $0x3c4] sm:$0xf]
  %v3779 = vld [vmem:[%s3536 + $0x3c8] sm:$0xf]
  %v3780 = vld [vmem:[%s3536 + $0x3cc] sm:$0xf]
  %v3781 = vld [vmem:[%s3536 + $0x3d0] sm:$0xf]
  %v3782 = vld [vmem:[%s3536 + $0x3d4] sm:$0xf]
  %v3783 = vld [vmem:[%s3536 + $0x3d8] sm:$0xf]
  %v3784 = vld [vmem:[%s3536 + $0x3dc] sm:$0xf]
  %v3785 = vld [vmem:[%s3536 + $0x3e0] sm:$0xf]
  %v3786 = vld [vmem:[%s3536 + $0x3e4] sm:$0xf]
  %v3787 = vld [vmem:[%s3536 + $0x3e8] sm:$0xf]
  %v3788 = vld [vmem:[%s3536 + $0x3ec] sm:$0xf]
  %v3789 = vld [vmem:[%s3536 + $0x3f0] sm:$0xf]
  %v3790 = vld [vmem:[%s3536 + $0x3f4] sm:$0xf]
  %v3791 = vld [vmem:[%s3536 + $0x3f8] sm:$0xf]
  %v3792 = vld [vmem:[%s3536 + $0x3fc] sm:$0xf]
  %s3793 = scalar_lea.vmem %s16, 1
  %v3794 = vld [vmem:[%s3793] sm:$0x1]
  %v3796 = vperm.slane %v3794, 0
  %v4054 = vunpack.c.l.b16 %v3537
  %v4055 = vunpack.c.l.b16 %v3538
  %v4056 = vunpack.c.l.b16 %v3539
  %v4057 = vunpack.c.l.b16 %v3540
  %v4058 = vunpack.c.l.b16 %v3541
  %v4059 = vunpack.c.l.b16 %v3542
  %v4060 = vunpack.c.l.b16 %v3543
  %v4061 = vunpack.c.l.b16 %v3544
  %v4062 = vunpack.c.l.b16 %v3545
  %v4063 = vunpack.c.l.b16 %v3546
  %v4064 = vunpack.c.l.b16 %v3547
  %v4065 = vunpack.c.l.b16 %v3548
  %v4066 = vunpack.c.l.b16 %v3549
  %v4067 = vunpack.c.l.b16 %v3550
  %v4068 = vunpack.c.l.b16 %v3551
  %v4069 = vunpack.c.l.b16 %v3552
  %v4070 = vunpack.c.l.b16 %v3553
  %v4071 = vunpack.c.l.b16 %v3554
  %v4072 = vunpack.c.l.b16 %v3555
  %v4073 = vunpack.c.l.b16 %v3556
  %v4074 = vunpack.c.l.b16 %v3557
  %v4075 = vunpack.c.l.b16 %v3558
  %v4076 = vunpack.c.l.b16 %v3559
  %v4077 = vunpack.c.l.b16 %v3560
  %v4078 = vunpack.c.l.b16 %v3561
  %v4079 = vunpack.c.l.b16 %v3562
  %v4080 = vunpack.c.l.b16 %v3563
  %v4081 = vunpack.c.l.b16 %v3564
  %v4082 = vunpack.c.l.b16 %v3565
  %v4083 = vunpack.c.l.b16 %v3566
  %v4084 = vunpack.c.l.b16 %v3567
  %v4085 = vunpack.c.l.b16 %v3568
  %v4086 = vunpack.c.l.b16 %v3569
  %v4087 = vunpack.c.l.b16 %v3570
  %v4088 = vunpack.c.l.b16 %v3571
  %v4089 = vunpack.c.l.b16 %v3572
  %v4090 = vunpack.c.l.b16 %v3573
  %v4091 = vunpack.c.l.b16 %v3574
  %v4092 = vunpack.c.l.b16 %v3575
  %v4093 = vunpack.c.l.b16 %v3576
  %v4094 = vunpack.c.l.b16 %v3577
  %v4095 = vunpack.c.l.b16 %v3578
  %v4096 = vunpack.c.l.b16 %v3579
  %v4097 = vunpack.c.l.b16 %v3580
  %v4098 = vunpack.c.l.b16 %v3581
  %v4099 = vunpack.c.l.b16 %v3582
  %v4100 = vunpack.c.l.b16 %v3583
  %v4101 = vunpack.c.l.b16 %v3584
  %v4102 = vunpack.c.l.b16 %v3585
  %v4103 = vunpack.c.l.b16 %v3586
  %v4104 = vunpack.c.l.b16 %v3587
  %v4105 = vunpack.c.l.b16 %v3588
  %v4106 = vunpack.c.l.b16 %v3589
  %v4107 = vunpack.c.l.b16 %v3590
  %v4108 = vunpack.c.l.b16 %v3591
  %v4109 = vunpack.c.l.b16 %v3592
  %v4110 = vunpack.c.l.b16 %v3593
  %v4111 = vunpack.c.l.b16 %v3594
  %v4112 = vunpack.c.l.b16 %v3595
  %v4113 = vunpack.c.l.b16 %v3596
  %v4114 = vunpack.c.l.b16 %v3597
  %v4115 = vunpack.c.l.b16 %v3598
  %v4116 = vunpack.c.l.b16 %v3599
  %v4117 = vunpack.c.l.b16 %v3600
  %v4118 = vunpack.c.l.b16 %v3601
  %v4119 = vunpack.c.l.b16 %v3602
  %v4120 = vunpack.c.l.b16 %v3603
  %v4121 = vunpack.c.l.b16 %v3604
  %v4122 = vunpack.c.l.b16 %v3605
  %v4123 = vunpack.c.l.b16 %v3606
  %v4124 = vunpack.c.l.b16 %v3607
  %v4125 = vunpack.c.l.b16 %v3608
  %v4126 = vunpack.c.l.b16 %v3609
  %v4127 = vunpack.c.l.b16 %v3610
  %v4128 = vunpack.c.l.b16 %v3611
  %v4129 = vunpack.c.l.b16 %v3612
  %v4130 = vunpack.c.l.b16 %v3613
  %v4131 = vunpack.c.l.b16 %v3614
  %v4132 = vunpack.c.l.b16 %v3615
  %v4133 = vunpack.c.l.b16 %v3616
  %v4134 = vunpack.c.l.b16 %v3617
  %v4135 = vunpack.c.l.b16 %v3618
  %v4136 = vunpack.c.l.b16 %v3619
  %v4137 = vunpack.c.l.b16 %v3620
  %v4138 = vunpack.c.l.b16 %v3621
  %v4139 = vunpack.c.l.b16 %v3622
  %v4140 = vunpack.c.l.b16 %v3623
  %v4141 = vunpack.c.l.b16 %v3624
  %v4142 = vunpack.c.l.b16 %v3625
  %v4143 = vunpack.c.l.b16 %v3626
  %v4144 = vunpack.c.l.b16 %v3627
  %v4145 = vunpack.c.l.b16 %v3628
  %v4146 = vunpack.c.l.b16 %v3629
  %v4147 = vunpack.c.l.b16 %v3630
  %v4148 = vunpack.c.l.b16 %v3631
  %v4149 = vunpack.c.l.b16 %v3632
  %v4150 = vunpack.c.l.b16 %v3633
  %v4151 = vunpack.c.l.b16 %v3634
  %v4152 = vunpack.c.l.b16 %v3635
  %v4153 = vunpack.c.l.b16 %v3636
  %v4154 = vunpack.c.l.b16 %v3637
  %v4155 = vunpack.c.l.b16 %v3638
  %v4156 = vunpack.c.l.b16 %v3639
  %v4157 = vunpack.c.l.b16 %v3640
  %v4158 = vunpack.c.l.b16 %v3641
  %v4159 = vunpack.c.l.b16 %v3642
  %v4160 = vunpack.c.l.b16 %v3643
  %v4161 = vunpack.c.l.b16 %v3644
  %v4162 = vunpack.c.l.b16 %v3645
  %v4163 = vunpack.c.l.b16 %v3646
  %v4164 = vunpack.c.l.b16 %v3647
  %v4165 = vunpack.c.l.b16 %v3648
  %v4166 = vunpack.c.l.b16 %v3649
  %v4167 = vunpack.c.l.b16 %v3650
  %v4168 = vunpack.c.l.b16 %v3651
  %v4169 = vunpack.c.l.b16 %v3652
  %v4170 = vunpack.c.l.b16 %v3653
  %v4171 = vunpack.c.l.b16 %v3654
  %v4172 = vunpack.c.l.b16 %v3655
  %v4173 = vunpack.c.l.b16 %v3656
  %v4174 = vunpack.c.l.b16 %v3657
  %v4175 = vunpack.c.l.b16 %v3658
  %v4176 = vunpack.c.l.b16 %v3659
  %v4177 = vunpack.c.l.b16 %v3660
  %v4178 = vunpack.c.l.b16 %v3661
  %v4179 = vunpack.c.l.b16 %v3662
  %v4180 = vunpack.c.l.b16 %v3663
  %v4181 = vunpack.c.l.b16 %v3664
  %v4182 = vunpack.c.l.b16 %v3665
  %v4183 = vunpack.c.l.b16 %v3666
  %v4184 = vunpack.c.l.b16 %v3667
  %v4185 = vunpack.c.l.b16 %v3668
  %v4186 = vunpack.c.l.b16 %v3669
  %v4187 = vunpack.c.l.b16 %v3670
  %v4188 = vunpack.c.l.b16 %v3671
  %v4189 = vunpack.c.l.b16 %v3672
  %v4190 = vunpack.c.l.b16 %v3673
  %v4191 = vunpack.c.l.b16 %v3674
  %v4192 = vunpack.c.l.b16 %v3675
  %v4193 = vunpack.c.l.b16 %v3676
  %v4194 = vunpack.c.l.b16 %v3677
  %v4195 = vunpack.c.l.b16 %v3678
  %v4196 = vunpack.c.l.b16 %v3679
  %v4197 = vunpack.c.l.b16 %v3680
  %v4198 = vunpack.c.l.b16 %v3681
  %v4199 = vunpack.c.l.b16 %v3682
  %v4200 = vunpack.c.l.b16 %v3683
  %v4201 = vunpack.c.l.b16 %v3684
  %v4202 = vunpack.c.l.b16 %v3685
  %v4203 = vunpack.c.l.b16 %v3686
  %v4204 = vunpack.c.l.b16 %v3687
  %v4205 = vunpack.c.l.b16 %v3688
  %v4206 = vunpack.c.l.b16 %v3689
  %v4207 = vunpack.c.l.b16 %v3690
  %v4208 = vunpack.c.l.b16 %v3691
  %v4209 = vunpack.c.l.b16 %v3692
  %v4210 = vunpack.c.l.b16 %v3693
  %v4211 = vunpack.c.l.b16 %v3694
  %v4212 = vunpack.c.l.b16 %v3695
  %v4213 = vunpack.c.l.b16 %v3696
  %v4214 = vunpack.c.l.b16 %v3697
  %v4215 = vunpack.c.l.b16 %v3698
  %v4216 = vunpack.c.l.b16 %v3699
  %v4217 = vunpack.c.l.b16 %v3700
  %v4218 = vunpack.c.l.b16 %v3701
  %v4219 = vunpack.c.l.b16 %v3702
  %v4220 = vunpack.c.l.b16 %v3703
  %v4221 = vunpack.c.l.b16 %v3704
  %v4222 = vunpack.c.l.b16 %v3705
  %v4223 = vunpack.c.l.b16 %v3706
  %v4224 = vunpack.c.l.b16 %v3707
  %v4225 = vunpack.c.l.b16 %v3708
  %v4226 = vunpack.c.l.b16 %v3709
  %v4227 = vunpack.c.l.b16 %v3710
  %v4228 = vunpack.c.l.b16 %v3711
  %v4229 = vunpack.c.l.b16 %v3712
  %v4230 = vunpack.c.l.b16 %v3713
  %v4231 = vunpack.c.l.b16 %v3714
  %v4232 = vunpack.c.l.b16 %v3715
  %v4233 = vunpack.c.l.b16 %v3716
  %v4234 = vunpack.c.l.b16 %v3717
  %v4235 = vunpack.c.l.b16 %v3718
  %v4236 = vunpack.c.l.b16 %v3719
  %v4237 = vunpack.c.l.b16 %v3720
  %v4238 = vunpack.c.l.b16 %v3721
  %v4239 = vunpack.c.l.b16 %v3722
  %v4240 = vunpack.c.l.b16 %v3723
  %v4241 = vunpack.c.l.b16 %v3724
  %v4242 = vunpack.c.l.b16 %v3725
  %v4243 = vunpack.c.l.b16 %v3726
  %v4244 = vunpack.c.l.b16 %v3727
  %v4245 = vunpack.c.l.b16 %v3728
  %v4246 = vunpack.c.l.b16 %v3729
  %v4247 = vunpack.c.l.b16 %v3730
  %v4248 = vunpack.c.l.b16 %v3731
  %v4249 = vunpack.c.l.b16 %v3732
  %v4250 = vunpack.c.l.b16 %v3733
  %v4251 = vunpack.c.l.b16 %v3734
  %v4252 = vunpack.c.l.b16 %v3735
  %v4253 = vunpack.c.l.b16 %v3736
  %v4254 = vunpack.c.l.b16 %v3737
  %v4255 = vunpack.c.l.b16 %v3738
  %v4256 = vunpack.c.l.b16 %v3739
  %v4257 = vunpack.c.l.b16 %v3740
  %v4258 = vunpack.c.l.b16 %v3741
  %v4259 = vunpack.c.l.b16 %v3742
  %v4260 = vunpack.c.l.b16 %v3743
  %v4261 = vunpack.c.l.b16 %v3744
  %v4262 = vunpack.c.l.b16 %v3745
  %v4263 = vunpack.c.l.b16 %v3746
  %v4264 = vunpack.c.l.b16 %v3747
  %v4265 = vunpack.c.l.b16 %v3748
  %v4266 = vunpack.c.l.b16 %v3749
  %v4267 = vunpack.c.l.b16 %v3750
  %v4268 = vunpack.c.l.b16 %v3751
  %v4269 = vunpack.c.l.b16 %v3752
  %v4270 = vunpack.c.l.b16 %v3753
  %v4271 = vunpack.c.l.b16 %v3754
  %v4272 = vunpack.c.l.b16 %v3755
  %v4273 = vunpack.c.l.b16 %v3756
  %v4274 = vunpack.c.l.b16 %v3757
  %v4275 = vunpack.c.l.b16 %v3758
  %v4276 = vunpack.c.l.b16 %v3759
  %v4277 = vunpack.c.l.b16 %v3760
  %v4278 = vunpack.c.l.b16 %v3761
  %v4279 = vunpack.c.l.b16 %v3762
  %v4280 = vunpack.c.l.b16 %v3763
  %v4281 = vunpack.c.l.b16 %v3764
  %v4282 = vunpack.c.l.b16 %v3765
  %v4283 = vunpack.c.l.b16 %v3766
  %v4284 = vunpack.c.l.b16 %v3767
  %v4285 = vunpack.c.l.b16 %v3768
  %v4286 = vunpack.c.l.b16 %v3769
  %v4287 = vunpack.c.l.b16 %v3770
  %v4288 = vunpack.c.l.b16 %v3771
  %v4289 = vunpack.c.l.b16 %v3772
  %v4290 = vunpack.c.l.b16 %v3773
  %v4291 = vunpack.c.l.b16 %v3774
  %v4292 = vunpack.c.l.b16 %v3775
  %v4293 = vunpack.c.l.b16 %v3776
  %v4294 = vunpack.c.l.b16 %v3777
  %v4295 = vunpack.c.l.b16 %v3778
  %v4296 = vunpack.c.l.b16 %v3779
  %v4297 = vunpack.c.l.b16 %v3780
  %v4298 = vunpack.c.l.b16 %v3781
  %v4299 = vunpack.c.l.b16 %v3782
  %v4300 = vunpack.c.l.b16 %v3783
  %v4301 = vunpack.c.l.b16 %v3784
  %v4302 = vunpack.c.l.b16 %v3785
  %v4303 = vunpack.c.l.b16 %v3786
  %v4304 = vunpack.c.l.b16 %v3787
  %v4305 = vunpack.c.l.b16 %v3788
  %v4306 = vunpack.c.l.b16 %v3789
  %v4307 = vunpack.c.l.b16 %v3790
  %v4308 = vunpack.c.l.b16 %v3791
  %v4309 = vunpack.c.l.b16 %v3792
  %v4310 = vpack.c.b16 %v4055, %v4054
  %v4311 = vpack.c.b16 %v4057, %v4056
  %v4312 = vpack.c.b16 %v4059, %v4058
  %v4313 = vpack.c.b16 %v4061, %v4060
  %v4314 = vpack.c.b16 %v4063, %v4062
  %v4315 = vpack.c.b16 %v4065, %v4064
  %v4316 = vpack.c.b16 %v4067, %v4066
  %v4317 = vpack.c.b16 %v4069, %v4068
  %v4318 = vpack.c.b16 %v4071, %v4070
  %v4319 = vpack.c.b16 %v4073, %v4072
  %v4320 = vpack.c.b16 %v4075, %v4074
  %v4321 = vpack.c.b16 %v4077, %v4076
  %v4322 = vpack.c.b16 %v4079, %v4078
  %v4323 = vpack.c.b16 %v4081, %v4080
  %v4324 = vpack.c.b16 %v4083, %v4082
  %v4325 = vpack.c.b16 %v4085, %v4084
  %v4326 = vpack.c.b16 %v4087, %v4086
  %v4327 = vpack.c.b16 %v4089, %v4088
  %v4328 = vpack.c.b16 %v4091, %v4090
  %v4329 = vpack.c.b16 %v4093, %v4092
  %v4330 = vpack.c.b16 %v4095, %v4094
  %v4331 = vpack.c.b16 %v4097, %v4096
  %v4332 = vpack.c.b16 %v4099, %v4098
  %v4333 = vpack.c.b16 %v4101, %v4100
  %v4334 = vpack.c.b16 %v4103, %v4102
  %v4335 = vpack.c.b16 %v4105, %v4104
  %v4336 = vpack.c.b16 %v4107, %v4106
  %v4337 = vpack.c.b16 %v4109, %v4108
  %v4338 = vpack.c.b16 %v4111, %v4110
  %v4339 = vpack.c.b16 %v4113, %v4112
  %v4340 = vpack.c.b16 %v4115, %v4114
  %v4341 = vpack.c.b16 %v4117, %v4116
  %v4342 = vpack.c.b16 %v4119, %v4118
  %v4343 = vpack.c.b16 %v4121, %v4120
  %v4344 = vpack.c.b16 %v4123, %v4122
  %v4345 = vpack.c.b16 %v4125, %v4124
  %v4346 = vpack.c.b16 %v4127, %v4126
  %v4347 = vpack.c.b16 %v4129, %v4128
  %v4348 = vpack.c.b16 %v4131, %v4130
  %v4349 = vpack.c.b16 %v4133, %v4132
  %v4350 = vpack.c.b16 %v4135, %v4134
  %v4351 = vpack.c.b16 %v4137, %v4136
  %v4352 = vpack.c.b16 %v4139, %v4138
  %v4353 = vpack.c.b16 %v4141, %v4140
  %v4354 = vpack.c.b16 %v4143, %v4142
  %v4355 = vpack.c.b16 %v4145, %v4144
  %v4356 = vpack.c.b16 %v4147, %v4146
  %v4357 = vpack.c.b16 %v4149, %v4148
  %v4358 = vpack.c.b16 %v4151, %v4150
  %v4359 = vpack.c.b16 %v4153, %v4152
  %v4360 = vpack.c.b16 %v4155, %v4154
  %v4361 = vpack.c.b16 %v4157, %v4156
  %v4362 = vpack.c.b16 %v4159, %v4158
  %v4363 = vpack.c.b16 %v4161, %v4160
  %v4364 = vpack.c.b16 %v4163, %v4162
  %v4365 = vpack.c.b16 %v4165, %v4164
  %v4366 = vpack.c.b16 %v4167, %v4166
  %v4367 = vpack.c.b16 %v4169, %v4168
  %v4368 = vpack.c.b16 %v4171, %v4170
  %v4369 = vpack.c.b16 %v4173, %v4172
  %v4370 = vpack.c.b16 %v4175, %v4174
  %v4371 = vpack.c.b16 %v4177, %v4176
  %v4372 = vpack.c.b16 %v4179, %v4178
  %v4373 = vpack.c.b16 %v4181, %v4180
  %v4374 = vpack.c.b16 %v4183, %v4182
  %v4375 = vpack.c.b16 %v4185, %v4184
  %v4376 = vpack.c.b16 %v4187, %v4186
  %v4377 = vpack.c.b16 %v4189, %v4188
  %v4378 = vpack.c.b16 %v4191, %v4190
  %v4379 = vpack.c.b16 %v4193, %v4192
  %v4380 = vpack.c.b16 %v4195, %v4194
  %v4381 = vpack.c.b16 %v4197, %v4196
  %v4382 = vpack.c.b16 %v4199, %v4198
  %v4383 = vpack.c.b16 %v4201, %v4200
  %v4384 = vpack.c.b16 %v4203, %v4202
  %v4385 = vpack.c.b16 %v4205, %v4204
  %v4386 = vpack.c.b16 %v4207, %v4206
  %v4387 = vpack.c.b16 %v4209, %v4208
  %v4388 = vpack.c.b16 %v4211, %v4210
  %v4389 = vpack.c.b16 %v4213, %v4212
  %v4390 = vpack.c.b16 %v4215, %v4214
  %v4391 = vpack.c.b16 %v4217, %v4216
  %v4392 = vpack.c.b16 %v4219, %v4218
  %v4393 = vpack.c.b16 %v4221, %v4220
  %v4394 = vpack.c.b16 %v4223, %v4222
  %v4395 = vpack.c.b16 %v4225, %v4224
  %v4396 = vpack.c.b16 %v4227, %v4226
  %v4397 = vpack.c.b16 %v4229, %v4228
  %v4398 = vpack.c.b16 %v4231, %v4230
  %v4399 = vpack.c.b16 %v4233, %v4232
  %v4400 = vpack.c.b16 %v4235, %v4234
  %v4401 = vpack.c.b16 %v4237, %v4236
  %v4402 = vpack.c.b16 %v4239, %v4238
  %v4403 = vpack.c.b16 %v4241, %v4240
  %v4404 = vpack.c.b16 %v4243, %v4242
  %v4405 = vpack.c.b16 %v4245, %v4244
  %v4406 = vpack.c.b16 %v4247, %v4246
  %v4407 = vpack.c.b16 %v4249, %v4248
  %v4408 = vpack.c.b16 %v4251, %v4250
  %v4409 = vpack.c.b16 %v4253, %v4252
  %v4410 = vpack.c.b16 %v4255, %v4254
  %v4411 = vpack.c.b16 %v4257, %v4256
  %v4412 = vpack.c.b16 %v4259, %v4258
  %v4413 = vpack.c.b16 %v4261, %v4260
  %v4414 = vpack.c.b16 %v4263, %v4262
  %v4415 = vpack.c.b16 %v4265, %v4264
  %v4416 = vpack.c.b16 %v4267, %v4266
  %v4417 = vpack.c.b16 %v4269, %v4268
  %v4418 = vpack.c.b16 %v4271, %v4270
  %v4419 = vpack.c.b16 %v4273, %v4272
  %v4420 = vpack.c.b16 %v4275, %v4274
  %v4421 = vpack.c.b16 %v4277, %v4276
  %v4422 = vpack.c.b16 %v4279, %v4278
  %v4423 = vpack.c.b16 %v4281, %v4280
  %v4424 = vpack.c.b16 %v4283, %v4282
  %v4425 = vpack.c.b16 %v4285, %v4284
  %v4426 = vpack.c.b16 %v4287, %v4286
  %v4427 = vpack.c.b16 %v4289, %v4288
  %v4428 = vpack.c.b16 %v4291, %v4290
  %v4429 = vpack.c.b16 %v4293, %v4292
  %v4430 = vpack.c.b16 %v4295, %v4294
  %v4431 = vpack.c.b16 %v4297, %v4296
  %v4432 = vpack.c.b16 %v4299, %v4298
  %v4433 = vpack.c.b16 %v4301, %v4300
  %v4434 = vpack.c.b16 %v4303, %v4302
  %v4435 = vpack.c.b16 %v4305, %v4304
  %v4436 = vpack.c.b16 %v4307, %v4306
  %v4437 = vpack.c.b16 %v4309, %v4308
  %4566 = vmatpush.bf16.msra.mxu0 %v4317
  %4567 = vmatpush.bf16.msra.mxu0 %v4316
  %4568 = vmatpush.bf16.msra.mxu0 %v4315
  %4569 = vmatpush.bf16.msra.mxu0 %v4314
  %4570 = vmatpush.bf16.msra.mxu0 %v4313
  %4571 = vmatpush.bf16.msra.mxu0 %v4312
  %4572 = vmatpush.bf16.msra.mxu0 %v4311
  %4573 = vmatpush.bf16.msra.mxu0 %v4310
  %4574 = vmatmul.bf16.gmra.mxu0 %v3520
  %v4575 = vpop.f32.mrf.mxu0
  %v4576 = vadd.f32 %v3796, %v4575
  %v4577 = vpop.f32.mrf.mxu0
  %v4578 = vadd.f32 %v3796, %v4577
  %4579 = vdwg.mxu0
  %4580 = vmatpush.bf16.msra.mxu0 %v4325
  %4581 = vmatpush.bf16.msra.mxu0 %v4324
  %4582 = vmatpush.bf16.msra.mxu0 %v4323
  %4583 = vmatpush.bf16.msra.mxu0 %v4322
  %4584 = vmatpush.bf16.msra.mxu0 %v4321
  %4585 = vmatpush.bf16.msra.mxu0 %v4320
  %4586 = vmatpush.bf16.msra.mxu0 %v4319
  %4587 = vmatpush.bf16.msra.mxu0 %v4318
  %4588 = vmatmul.bf16.gmra.mxu0 %v3521
  %v4589 = vpop.f32.mrf.mxu0
  %v4590 = vadd.f32 %v4576, %v4589
  %v4591 = vpop.f32.mrf.mxu0
  %v4592 = vadd.f32 %v4578, %v4591
  %4593 = vdwg.mxu0
  %4594 = vmatpush.bf16.msra.mxu0 %v4333
  %4595 = vmatpush.bf16.msra.mxu0 %v4332
  %4596 = vmatpush.bf16.msra.mxu0 %v4331
  %4597 = vmatpush.bf16.msra.mxu0 %v4330
  %4598 = vmatpush.bf16.msra.mxu0 %v4329
  %4599 = vmatpush.bf16.msra.mxu0 %v4328
  %4600 = vmatpush.bf16.msra.mxu0 %v4327
  %4601 = vmatpush.bf16.msra.mxu0 %v4326
  %4602 = vmatmul.bf16.gmra.mxu0 %v3522
  %v4603 = vpop.f32.mrf.mxu0
  %v4604 = vadd.f32 %v4590, %v4603
  %v4605 = vpop.f32.mrf.mxu0
  %v4606 = vadd.f32 %v4592, %v4605
  %4607 = vdwg.mxu0
  %4608 = vmatpush.bf16.msra.mxu0 %v4341
  %4609 = vmatpush.bf16.msra.mxu0 %v4340
  %4610 = vmatpush.bf16.msra.mxu0 %v4339
  %4611 = vmatpush.bf16.msra.mxu0 %v4338
  %4612 = vmatpush.bf16.msra.mxu0 %v4337
  %4613 = vmatpush.bf16.msra.mxu0 %v4336
  %4614 = vmatpush.bf16.msra.mxu0 %v4335
  %4615 = vmatpush.bf16.msra.mxu0 %v4334
  %4616 = vmatmul.bf16.gmra.mxu0 %v3523
  %v4617 = vpop.f32.mrf.mxu0
  %v4618 = vadd.f32 %v4604, %v4617
  %v4619 = vpop.f32.mrf.mxu0
  %v4620 = vadd.f32 %v4606, %v4619
  %4621 = vdwg.mxu0
  %4622 = vmatpush.bf16.msra.mxu0 %v4349
  %4623 = vmatpush.bf16.msra.mxu0 %v4348
  %4624 = vmatpush.bf16.msra.mxu0 %v4347
  %4625 = vmatpush.bf16.msra.mxu0 %v4346
  %4626 = vmatpush.bf16.msra.mxu0 %v4345
  %4627 = vmatpush.bf16.msra.mxu0 %v4344
  %4628 = vmatpush.bf16.msra.mxu0 %v4343
  %4629 = vmatpush.bf16.msra.mxu0 %v4342
  %4630 = vmatmul.bf16.gmra.mxu0 %v3524
  %v4631 = vpop.f32.mrf.mxu0
  %v4632 = vadd.f32 %v4618, %v4631
  %v4633 = vpop.f32.mrf.mxu0
  %v4634 = vadd.f32 %v4620, %v4633
  %4635 = vdwg.mxu0
  %4636 = vmatpush.bf16.msra.mxu0 %v4357
  %4637 = vmatpush.bf16.msra.mxu0 %v4356
  %4638 = vmatpush.bf16.msra.mxu0 %v4355
  %4639 = vmatpush.bf16.msra.mxu0 %v4354
  %4640 = vmatpush.bf16.msra.mxu0 %v4353
  %4641 = vmatpush.bf16.msra.mxu0 %v4352
  %4642 = vmatpush.bf16.msra.mxu0 %v4351
  %4643 = vmatpush.bf16.msra.mxu0 %v4350
  %4644 = vmatmul.bf16.gmra.mxu0 %v3525
  %v4645 = vpop.f32.mrf.mxu0
  %v4646 = vadd.f32 %v4632, %v4645
  %v4647 = vpop.f32.mrf.mxu0
  %v4648 = vadd.f32 %v4634, %v4647
  %4649 = vdwg.mxu0
  %4650 = vmatpush.bf16.msra.mxu0 %v4365
  %4651 = vmatpush.bf16.msra.mxu0 %v4364
  %4652 = vmatpush.bf16.msra.mxu0 %v4363
  %4653 = vmatpush.bf16.msra.mxu0 %v4362
  %4654 = vmatpush.bf16.msra.mxu0 %v4361
  %4655 = vmatpush.bf16.msra.mxu0 %v4360
  %4656 = vmatpush.bf16.msra.mxu0 %v4359
  %4657 = vmatpush.bf16.msra.mxu0 %v4358
  %4658 = vmatmul.bf16.gmra.mxu0 %v3526
  %v4659 = vpop.f32.mrf.mxu0
  %v4660 = vadd.f32 %v4646, %v4659
  %v4661 = vpop.f32.mrf.mxu0
  %v4662 = vadd.f32 %v4648, %v4661
  %4663 = vdwg.mxu0
  %4664 = vmatpush.bf16.msra.mxu0 %v4373
  %4665 = vmatpush.bf16.msra.mxu0 %v4372
  %4666 = vmatpush.bf16.msra.mxu0 %v4371
  %4667 = vmatpush.bf16.msra.mxu0 %v4370
  %4668 = vmatpush.bf16.msra.mxu0 %v4369
  %4669 = vmatpush.bf16.msra.mxu0 %v4368
  %4670 = vmatpush.bf16.msra.mxu0 %v4367
  %4671 = vmatpush.bf16.msra.mxu0 %v4366
  %4672 = vmatmul.bf16.gmra.mxu0 %v3527
  %v4673 = vpop.f32.mrf.mxu0
  %v4674 = vadd.f32 %v4660, %v4673
  %v4675 = vpop.f32.mrf.mxu0
  %v4676 = vadd.f32 %v4662, %v4675
  %4677 = vdwg.mxu0
  %4678 = vmatpush.bf16.msra.mxu0 %v4381
  %4679 = vmatpush.bf16.msra.mxu0 %v4380
  %4680 = vmatpush.bf16.msra.mxu0 %v4379
  %4681 = vmatpush.bf16.msra.mxu0 %v4378
  %4682 = vmatpush.bf16.msra.mxu0 %v4377
  %4683 = vmatpush.bf16.msra.mxu0 %v4376
  %4684 = vmatpush.bf16.msra.mxu0 %v4375
  %4685 = vmatpush.bf16.msra.mxu0 %v4374
  %4686 = vmatmul.bf16.gmra.mxu0 %v3528
  %v4687 = vpop.f32.mrf.mxu0
  %v4688 = vadd.f32 %v4674, %v4687
  %v4689 = vpop.f32.mrf.mxu0
  %v4690 = vadd.f32 %v4676, %v4689
  %4691 = vdwg.mxu0
  %4692 = vmatpush.bf16.msra.mxu0 %v4389
  %4693 = vmatpush.bf16.msra.mxu0 %v4388
  %4694 = vmatpush.bf16.msra.mxu0 %v4387
  %4695 = vmatpush.bf16.msra.mxu0 %v4386
  %4696 = vmatpush.bf16.msra.mxu0 %v4385
  %4697 = vmatpush.bf16.msra.mxu0 %v4384
  %4698 = vmatpush.bf16.msra.mxu0 %v4383
  %4699 = vmatpush.bf16.msra.mxu0 %v4382
  %4700 = vmatmul.bf16.gmra.mxu0 %v3529
  %v4701 = vpop.f32.mrf.mxu0
  %v4702 = vadd.f32 %v4688, %v4701
  %v4703 = vpop.f32.mrf.mxu0
  %v4704 = vadd.f32 %v4690, %v4703
  %4705 = vdwg.mxu0
  %4706 = vmatpush.bf16.msra.mxu0 %v4397
  %4707 = vmatpush.bf16.msra.mxu0 %v4396
  %4708 = vmatpush.bf16.msra.mxu0 %v4395
  %4709 = vmatpush.bf16.msra.mxu0 %v4394
  %4710 = vmatpush.bf16.msra.mxu0 %v4393
  %4711 = vmatpush.bf16.msra.mxu0 %v4392
  %4712 = vmatpush.bf16.msra.mxu0 %v4391
  %4713 = vmatpush.bf16.msra.mxu0 %v4390
  %4714 = vmatmul.bf16.gmra.mxu0 %v3530
  %v4715 = vpop.f32.mrf.mxu0
  %v4716 = vadd.f32 %v4702, %v4715
  %v4717 = vpop.f32.mrf.mxu0
  %v4718 = vadd.f32 %v4704, %v4717
  %4719 = vdwg.mxu0
  %4720 = vmatpush.bf16.msra.mxu0 %v4405
  %4721 = vmatpush.bf16.msra.mxu0 %v4404
  %4722 = vmatpush.bf16.msra.mxu0 %v4403
  %4723 = vmatpush.bf16.msra.mxu0 %v4402
  %4724 = vmatpush.bf16.msra.mxu0 %v4401
  %4725 = vmatpush.bf16.msra.mxu0 %v4400
  %4726 = vmatpush.bf16.msra.mxu0 %v4399
  %4727 = vmatpush.bf16.msra.mxu0 %v4398
  %4728 = vmatmul.bf16.gmra.mxu0 %v3531
  %v4729 = vpop.f32.mrf.mxu0
  %v4730 = vadd.f32 %v4716, %v4729
  %v4731 = vpop.f32.mrf.mxu0
  %v4732 = vadd.f32 %v4718, %v4731
  %4733 = vdwg.mxu0
  %4734 = vmatpush.bf16.msra.mxu0 %v4413
  %4735 = vmatpush.bf16.msra.mxu0 %v4412
  %4736 = vmatpush.bf16.msra.mxu0 %v4411
  %4737 = vmatpush.bf16.msra.mxu0 %v4410
  %4738 = vmatpush.bf16.msra.mxu0 %v4409
  %4739 = vmatpush.bf16.msra.mxu0 %v4408
  %4740 = vmatpush.bf16.msra.mxu0 %v4407
  %4741 = vmatpush.bf16.msra.mxu0 %v4406
  %4742 = vmatmul.bf16.gmra.mxu0 %v3532
  %v4743 = vpop.f32.mrf.mxu0
  %v4744 = vadd.f32 %v4730, %v4743
  %v4745 = vpop.f32.mrf.mxu0
  %v4746 = vadd.f32 %v4732, %v4745
  %4747 = vdwg.mxu0
  %4748 = vmatpush.bf16.msra.mxu0 %v4421
  %4749 = vmatpush.bf16.msra.mxu0 %v4420
  %4750 = vmatpush.bf16.msra.mxu0 %v4419
  %4751 = vmatpush.bf16.msra.mxu0 %v4418
  %4752 = vmatpush.bf16.msra.mxu0 %v4417
  %4753 = vmatpush.bf16.msra.mxu0 %v4416
  %4754 = vmatpush.bf16.msra.mxu0 %v4415
  %4755 = vmatpush.bf16.msra.mxu0 %v4414
  %4756 = vmatmul.bf16.gmra.mxu0 %v3533
  %v4757 = vpop.f32.mrf.mxu0
  %v4758 = vadd.f32 %v4744, %v4757
  %v4759 = vpop.f32.mrf.mxu0
  %v4760 = vadd.f32 %v4746, %v4759
  %4761 = vdwg.mxu0
  %4762 = vmatpush.bf16.msra.mxu0 %v4429
  %4763 = vmatpush.bf16.msra.mxu0 %v4428
  %4764 = vmatpush.bf16.msra.mxu0 %v4427
  %4765 = vmatpush.bf16.msra.mxu0 %v4426
  %4766 = vmatpush.bf16.msra.mxu0 %v4425
  %4767 = vmatpush.bf16.msra.mxu0 %v4424
  %4768 = vmatpush.bf16.msra.mxu0 %v4423
  %4769 = vmatpush.bf16.msra.mxu0 %v4422
  %4770 = vmatmul.bf16.gmra.mxu0 %v3534
  %v4771 = vpop.f32.mrf.mxu0
  %v4772 = vadd.f32 %v4758, %v4771
  %v4773 = vpop.f32.mrf.mxu0
  %v4774 = vadd.f32 %v4760, %v4773
  %4775 = vdwg.mxu0
  %4776 = vmatpush.bf16.msra.mxu0 %v4437
  %4777 = vmatpush.bf16.msra.mxu0 %v4436
  %4778 = vmatpush.bf16.msra.mxu0 %v4435
  %4779 = vmatpush.bf16.msra.mxu0 %v4434
  %4780 = vmatpush.bf16.msra.mxu0 %v4433
  %4781 = vmatpush.bf16.msra.mxu0 %v4432
  %4782 = vmatpush.bf16.msra.mxu0 %v4431
  %4783 = vmatpush.bf16.msra.mxu0 %v4430
  %4784 = vmatmul.bf16.gmra.mxu0 %v3535
  %v4785 = vpop.f32.mrf.mxu0
  %v4786 = vadd.f32 %v4772, %v4785
  %v4787 = vpop.f32.mrf.mxu0
  %v4788 = vadd.f32 %v4774, %v4787
  %4789 = vdwg.mxu0
  %v4790 = vadd.f32 %v3028, %v4786
  %v4791 = vadd.f32 %v3029, %v4788
  %s4792 = scalar_lea.vmem %s11, 1
  %v4793 = vld [vmem:[%s4792] sm:$0x1]
  %s4794 = scalar_lea.vmem %s12, 1
  %v4795 = vld [vmem:[%s4794] sm:$0x1]
  %v4796 = vsel %vm72, %v4790, 0.0
  %4797 = vadd.xlane.f32.xlu0 %v4796
  %v4798 = vpop.xlane.xlu0 %4797
  %v4799 = vsel %vm72, %v4791, 0.0
  %4800 = vadd.xlane.f32.xlu0 %v4799
  %v4801 = vpop.xlane.xlu0 %4800
  %v4802 = vmul.f32 %v4798, %v613
  %v4803 = vmul.f32 %v4801, %v613
  %v4804 = vsub.f32 %v4790, %v4802
  %v4805 = vsub.f32 %v4791, %v4803
  %v4806 = vmul.f32 %v4804, %v4804
  %v4807 = vmul.f32 %v4805, %v4805
  %v4808 = vsel %vm72, %v4806, 0.0
  %4809 = vadd.xlane.f32.xlu0 %v4808
  %v4810 = vpop.xlane.xlu0 %4809
  %v4811 = vsel %vm72, %v4807, 0.0
  %4812 = vadd.xlane.f32.xlu0 %v4811
  %v4813 = vpop.xlane.xlu0 %4812
  %v4814 = vmul.f32 %v4810, %v613
  %v4815 = vmul.f32 %v4813, %v613
  %v4816 = vadd.f32 %v4814, 1e-05
  %v4817 = vadd.f32 %v4815, 1e-05
  %v4818 = vrsqrt.pop %v4816
  %v4819 = vmul.f32 %v4818, %v4816
  %v4820 = vmul.f32 %v4819, %v4818
  %v4821 = vmul.f32 0.5, %v4820
  %v4822 = vsub.f32 1.5, %v4821
  %v4823 = vmul.f32 %v4818, %v4822
  %vm4824 = vweird.f32 %v4816
  %vm4825 = vweird.f32 %v4818
  %vm4826 = vmor %vm4824, %vm4825
  %v4827 = vsel %vm4826, %v4818, %v4823
  %v4828 = vrsqrt.pop %v4817
  %v4829 = vmul.f32 %v4828, %v4817
  %v4830 = vmul.f32 %v4829, %v4828
  %v4831 = vmul.f32 0.5, %v4830
  %v4832 = vsub.f32 1.5, %v4831
  %v4833 = vmul.f32 %v4828, %v4832
  %vm4834 = vweird.f32 %v4817
  %vm4835 = vweird.f32 %v4828
  %vm4836 = vmor %vm4834, %vm4835
  %v4837 = vsel %vm4836, %v4828, %v4833
  %v4838 = vmul.f32 %v4804, %v4827
  %v4839 = vmul.f32 %v4805, %v4837
  %v4841 = vperm.slane %v4793, 0
  %v4843 = vmul.f32 %v4838, %v4841
  %v4844 = vmul.f32 %v4839, %v4841
  %v4846 = vperm.slane %v4795, 0
  %v4848 = vadd.f32 %v4843, %v4846
  %v4849 = vadd.f32 %v4844, %v4846
  %v4850 = vld [vmem:[%s2] sm:$0x3]
  %v4852 = vsel %vm177, %v4850, 0
  %4854 = vmatpush.msra.mxu0 0.0
  %4855 = vmatpush.msra.mxu0 0.0
  %4856 = vmatpush.msra.mxu0 0.0
  %4857 = vmatpush.msra.mxu0 0.0
  %4858 = vmatpush.msra.mxu0 0.0
  %4859 = vmatpush.msra.mxu0 0.0
  %4860 = vmatpush.msra.mxu0 0.0
  %4861 = vmatpush.msra.mxu0 0.0
  %4862 = vmatpush.msra.mxu0 0.0
  %4863 = vmatpush.msra.mxu0 0.0
  %4864 = vmatpush.msra.mxu0 0.0
  %4865 = vmatpush.msra.mxu0 0.0
  %4866 = vmatpush.msra.mxu0 0.0
  %4867 = vmatpush.msra.mxu0 0.0
  %4868 = vmatpush.msra.mxu0 %v4849
  %4869 = vmatpush.msra.mxu0 %v4848
  %4870 = vmatmul.f32.gmra.mxu0 %v4852
  %v4871 = vpop.f32.mrf.mxu0
  %v4872 = vadd.f32 0.0, %v4871
  %4873 = vdwg.mxu0
  %v4874 = vld [vmem:[%s17] sm:$0xff]
  %v4875 = vld [vmem:[%s17 + $0x8] sm:$0xff]
  %v4876 = vld [vmem:[%s17 + $0x10] sm:$0xff]
  %v4877 = vld [vmem:[%s17 + $0x18] sm:$0xff]
  %v4879 = vsel %vm72, %v4872, 0
  %4881 = vmatpush.msra.mxu0 0.0
  %4882 = vmatpush.msra.mxu0 0.0
  %4883 = vmatpush.msra.mxu0 0.0
  %4884 = vmatpush.msra.mxu0 0.0
  %4885 = vmatpush.msra.mxu0 0.0
  %4886 = vmatpush.msra.mxu0 0.0
  %4887 = vmatpush.msra.mxu0 0.0
  %4888 = vmatpush.msra.mxu0 0.0
  %4889 = vmatpush.msra.mxu0 0.0
  %4890 = vmatpush.msra.mxu0 0.0
  %4891 = vmatpush.msra.mxu0 0.0
  %4892 = vmatpush.msra.mxu0 0.0
  %4893 = vmatpush.msra.mxu0 %v4877
  %4894 = vmatpush.msra.mxu0 %v4876
  %4895 = vmatpush.msra.mxu0 %v4875
  %4896 = vmatpush.msra.mxu0 %v4874
  %4897 = vmatmul.f32.gmra.mxu0 %v4879
  %v4898 = vpop.f32.mrf.mxu0
  %v4899 = vadd.f32 0.0, %v4898
  %4900 = vdwg.mxu0
  %4901 = vst [vmem:[%s18] sm:$0x3] %v4899
  // Predicated region
  $region74: #{transformer_classifier_forward.1} parent=0 // pred_check
    _
  $region75: #{transformer_classifier_forward.1} parent=0 // pred_check_branch
    %4903 = sbr.rel (0) target = $region77
  $region76: #{transformer_classifier_forward.1} parent=0 // pred_region
    _
  $region77: #{transformer_classifier_forward.1} parent=0 // pred_fallthru
    _
  // Predicated region
  $region78: #{transformer_classifier_forward.1} parent=0 // pred_check
    _
  $region79: #{transformer_classifier_forward.1} parent=0 // pred_check_branch
    %4905 = sbr.rel (0) target = $region81
  $region80: #{transformer_classifier_forward.1} parent=0 // pred_region
    _
  $region81: #{transformer_classifier_forward.1} parent=0 // pred_fallthru
    _

</llo_original>
